<compile_context>
chip_gen: v6e
topology: v6e:2x2x1
jax: 0.10.0
libtpu: 0.0.40
codegen_flags: <defaults>
</compile_context>

<pallas_src>
import numpy as np
import jax
import jax.numpy as jnp
from jax.experimental import pallas as pl
from jax.experimental.pallas import tpu as pltpu


# ----------------------------------------------------------------------------
# Static network configuration (mirrors the PyTorch CNN builder config)
# ----------------------------------------------------------------------------
N_BATCH = 2
C_IN, H_IN, W_IN = 4, 16, 16
C1, C2 = 8, 16                  # conv out-channels
K = 3                           # 3x3 convs, stride 1, padding 1
H2 = H_IN // 2                  # 8  spatial side after pool1
H3 = H2 // 2                    # 4  spatial side after pool2
FC_IN = C2 * H3 * H3            # 256
FC_HID = 32
NUM_CLASSES = 10

# Flattened slab addressing: each sample's zero-padded 18x18 input plane is
# flattened row-major and the samples are laid side by side on the lane axis,
# with a zero margin of MARGIN columns on the left and >=MARGIN on the right.
HP = H_IN + 2                   # 18  padded plane side (conv1 input)
S1 = HP * HP                    # 324 per-sample flattened plane size
MARGIN = 2 * HP + 2             # 38  max conv1 tap offset == left margin
W_X1 = 768                      # conv1 input slab width (>= 2*MARGIN + N*S1)
W_Y1 = W_X1 - MARGIN            # 730 conv1 output slab width
W_M1 = W_Y1 - (HP + 1)          # 711 pool1 (max of 4 shifts) slab width
W_Y2 = W_M1 - 2 * MARGIN        # 635 conv2 output slab width
W_M2 = W_Y2 - MARGIN            # 597 pool2 (max of 4 shifts) slab width

assert W_X1 >= 2 * MARGIN + N_BATCH * S1


# ----------------------------------------------------------------------------
# The single fused Pallas kernel
# ----------------------------------------------------------------------------
def _cnn_fused_kernel(x1_ref, w1_ref, b1_ref, mask1_ref, w2_ref, b2_ref,
                      ssel_ref, hfc1_ref, bfc1_ref, wfc2_ref, bfc2_ref, out_ref):
    f32 = jnp.float32
    x1 = x1_ref[...]                                          # (C_IN, W_X1) bf16

    # ---- conv1 (3x3, pad 1) + bias + ReLU: 9 shifted-tap MXU matmuls --------
    acc1 = jnp.zeros((C1, W_Y1), f32)
    for kh in range(K):
        for kw in range(K):
            d = kh * HP + kw
            acc1 += jnp.dot(w1_ref[kh * K + kw], x1[:, d:d + W_Y1],
                            preferred_element_type=f32)
    y1 = jnp.maximum(acc1 + b1_ref[...], 0.0)                 # (C1, W_Y1) f32

    # ---- maxpool1 (2x2, stride 2): max of 4 shifted views; the 0/1 mask
    #      folds the stride-2 subsample + zero re-padding needed by conv2 -----
    m1 = jnp.maximum(jnp.maximum(y1[:, 0:W_M1], y1[:, 1:1 + W_M1]),
                     jnp.maximum(y1[:, HP:HP + W_M1],
                                 y1[:, HP + 1:HP + 1 + W_M1]))
    z1 = (m1 * mask1_ref[...]).astype(jnp.bfloat16)           # (C1, W_M1)

    # ---- conv2 (3x3, pad 1) + bias + ReLU (tap offsets scaled by the pool) ---
    acc2 = jnp.zeros((C2, W_Y2), f32)
    for kh in range(K):
        for kw in range(K):
            d = 2 * (kh * HP + kw)
            acc2 += jnp.dot(w2_ref[kh * K + kw], z1[:, d:d + W_Y2],
                            preferred_element_type=f32)
    y2 = jnp.maximum(acc2 + b2_ref[...], 0.0)                 # (C2, W_Y2) f32

    # ---- maxpool2 (2x2, stride 2): max of 4 shifted views --------------------
    m2 = jnp.maximum(jnp.maximum(y2[:, 0:W_M2], y2[:, 2:2 + W_M2]),
                     jnp.maximum(y2[:, 2 * HP:2 * HP + W_M2],
                                 y2[:, 2 * HP + 2:2 * HP + 2 + W_M2]))

    # ---- gather the valid pooled features with one selection matmul ----------
    # feat[c, n*16 + s] = pooled2(sample n, channel c, spatial s=pi*4+pj)
    feat = jnp.dot(m2, ssel_ref[...], preferred_element_type=f32)   # (C2, N*16)

    # ---- FC1 (256 -> 32) + ReLU: contract channels against per-channel,
    #      batch-block-diagonal weight tiles (NCHW flatten folded into weights) -
    h = jnp.zeros((1, N_BATCH * FC_HID), f32)
    for c in range(C2):
        h += jnp.dot(feat[c:c + 1, :], hfc1_ref[c], preferred_element_type=f32)
    h = jnp.maximum(h + bfc1_ref[...], 0.0)                   # (1, N*32)

    # ---- FC2 (32 -> num_classes), per sample ---------------------------------
    rows = []
    for n in range(N_BATCH):
        rows.append(jnp.dot(h[:, n * FC_HID:(n + 1) * FC_HID], wfc2_ref[...],
                            preferred_element_type=f32) + bfc2_ref[...])
    out_ref[...] = jnp.concatenate(rows, axis=0)              # (N, NUM_CLASSES)


# ----------------------------------------------------------------------------
# Trace-time constant tables (pool subsampling / padding / flatten ordering)
# ----------------------------------------------------------------------------
def _static_tables():
    mask1 = np.zeros((1, W_M1), np.float32)
    ssel = np.zeros((W_M2, N_BATCH * H3 * H3), np.float32)
    for n in range(N_BATCH):
        for a in range(H2):
            for b in range(H2):
                # valid pool1 output, addressed at padded position (a+1, b+1)
                mask1[0, MARGIN + n * S1 + 2 * a * HP + 2 * b] = 1.0
        for pi in range(H3):
            for pj in range(H3):
                q = n * S1 + 4 * pi * HP + 4 * pj      # valid pool2 output column
                ssel[q, n * (H3 * H3) + pi * H3 + pj] = 1.0
    return mask1, ssel


# ----------------------------------------------------------------------------
# Parameters (deterministic synthetic init, PyTorch-like uniform fan-in bounds)
# ----------------------------------------------------------------------------
def init_params(key):
    def uniform(k, shape, fan_in):
        bound = 1.0 / jnp.sqrt(jnp.float32(fan_in))
        return jax.random.uniform(k, shape, jnp.float32, -bound, bound)

    ks = jax.random.split(key, 8)
    return {
        "c1_w": uniform(ks[0], (C1, C_IN, K, K), C_IN * K * K),
        "c1_b": uniform(ks[1], (C1,), C_IN * K * K),
        "c2_w": uniform(ks[2], (C2, C1, K, K), C1 * K * K),
        "c2_b": uniform(ks[3], (C2,), C1 * K * K),
        "f1_w": uniform(ks[4], (FC_IN, FC_HID), FC_IN),      # (in, out): x @ W
        "f1_b": uniform(ks[5], (FC_HID,), FC_IN),
        "f2_w": uniform(ks[6], (FC_HID, NUM_CLASSES), FC_HID),
        "f2_b": uniform(ks[7], (NUM_CLASSES,), FC_HID),
    }


# ----------------------------------------------------------------------------
# Forward pass: one fused pallas_call
# ----------------------------------------------------------------------------
@jax.jit
def cnn_forward(params, x_nchw):
    assert x_nchw.shape == (N_BATCH, C_IN, H_IN, W_IN)
    mask1, ssel = _static_tables()                            # numpy -> constants

    # conv1 input slab: pad each sample spatially, flatten row-major, lay the
    # samples side by side on the lane axis with zero margins, cast to bf16.
    xp = jnp.pad(x_nchw.astype(jnp.float32), ((0, 0), (0, 0), (1, 1), (1, 1)))
    x1 = xp.transpose(1, 0, 2, 3).reshape(C_IN, N_BATCH * S1)
    x1 = jnp.pad(x1, ((0, 0), (MARGIN, W_X1 - MARGIN - N_BATCH * S1)))
    x1 = x1.astype(jnp.bfloat16)

    # conv weights as 9 (Cout, Cin) taps, bf16 MXU operands; f32 biases.
    w1 = params["c1_w"].transpose(2, 3, 0, 1).reshape(K * K, C1, C_IN).astype(jnp.bfloat16)
    w2 = params["c2_w"].transpose(2, 3, 0, 1).reshape(K * K, C2, C1).astype(jnp.bfloat16)
    b1 = params["c1_b"].astype(jnp.float32)[:, None]          # (C1, 1)
    b2 = params["c2_b"].astype(jnp.float32)[:, None]          # (C2, 1)

    # FC1 weight rearranged so one matmul per conv2-channel handles all samples:
    # hfc1[c, n*16 + s, n*32 + o] = f1_w[c*16 + s, o]   (NCHW flatten = c*16+s).
    v = params["f1_w"].reshape(C2, H3 * H3, FC_HID)
    hfc1 = jnp.zeros((C2, N_BATCH * H3 * H3, N_BATCH * FC_HID), jnp.float32)
    for i in range(N_BATCH):
        hfc1 = hfc1.at[:, i * (H3 * H3):(i + 1) * (H3 * H3),
                       i * FC_HID:(i + 1) * FC_HID].set(v)
    bfc1 = jnp.tile(params["f1_b"].astype(jnp.float32), (N_BATCH,))[None, :]
    wfc2 = params["f2_w"].astype(jnp.float32)                 # (32, 10)
    bfc2 = params["f2_b"].astype(jnp.float32)[None, :]        # (1, 10)

    vmem = pl.BlockSpec(memory_space=pltpu.MemorySpace.VMEM)
    return pl.pallas_call(
        _cnn_fused_kernel,
        out_shape=jax.ShapeDtypeStruct((N_BATCH, NUM_CLASSES), jnp.float32),
        in_specs=[vmem] * 11,
        out_specs=vmem,
    )(x1, w1, b1, mask1, w2, b2, ssel, hfc1, bfc1, wfc2, bfc2)


# ----------------------------------------------------------------------------
# Pure-JAX reference (exact PyTorch forward semantics) for a numeric check
# ----------------------------------------------------------------------------
def cnn_reference(params, x_nchw):
    x = x_nchw.astype(jnp.float32)

    def block(x, w, b):
        y = jax.lax.conv_general_dilated(
            x, w, window_strides=(1, 1), padding=((1, 1), (1, 1)),
            dimension_numbers=("NCHW", "OIHW", "NCHW"))
        y = jax.nn.relu(y + b[None, :, None, None])
        return jnp.maximum(jnp.maximum(y[:, :, 0::2, 0::2], y[:, :, 0::2, 1::2]),
                           jnp.maximum(y[:, :, 1::2, 0::2], y[:, :, 1::2, 1::2]))

    x = block(x, params["c1_w"], params["c1_b"])
    x = block(x, params["c2_w"], params["c2_b"])
    feats = x.reshape(x.shape[0], -1)                         # NCHW flatten
    h = jax.nn.relu(feats @ params["f1_w"] + params["f1_b"])
    return h @ params["f2_w"] + params["f2_b"]                # dropout p=0.0 -> no-op


if __name__ == "__main__":
    key = jax.random.PRNGKey(0)
    pkey, xkey = jax.random.split(key)
    params = init_params(pkey)
    x = jax.random.normal(xkey, (N_BATCH, C_IN, H_IN, W_IN), dtype=jnp.float32)

    logits = cnn_forward(params, x)
    jax.block_until_ready(logits)
    assert logits.shape == (N_BATCH, NUM_CLASSES) and logits.dtype == jnp.float32

    ref = cnn_reference(params, x)
    np.testing.assert_allclose(np.asarray(logits), np.asarray(ref),
                               rtol=5e-2, atol=5e-2)
    print("KERNEL_OK")
</pallas_src>

<mosaic_0001>
module attributes {stable_mosaic.version = 11 : i64} {
  func.func @_cnn_fused_kernel(%arg0: memref<4x768xbf16, #tpu.memory_space<vmem>>, %arg1: memref<9x8x4xbf16, #tpu.memory_space<vmem>>, %arg2: memref<8x1xf32, #tpu.memory_space<vmem>>, %arg3: memref<1x711xf32, #tpu.memory_space<vmem>>, %arg4: memref<9x16x8xbf16, #tpu.memory_space<vmem>>, %arg5: memref<16x1xf32, #tpu.memory_space<vmem>>, %arg6: memref<597x32xf32, #tpu.memory_space<vmem>>, %arg7: memref<16x32x64xf32, #tpu.memory_space<vmem>>, %arg8: memref<1x64xf32, #tpu.memory_space<vmem>>, %arg9: memref<32x10xf32, #tpu.memory_space<vmem>>, %arg10: memref<1x10xf32, #tpu.memory_space<vmem>>, %arg11: memref<2x10xf32, #tpu.memory_space<vmem>>) attributes {dimension_semantics = [], scalar_prefetch = 0 : i64, scratch_operands = 0 : i64, tpu.core_type = #tpu.core_type<tc>} {
    %c0 = arith.constant 0 : index
    %c0_0 = arith.constant 0 : index
    %0 = vector.load %arg0[%c0, %c0_0] : memref<4x768xbf16, #tpu.memory_space<vmem>>, vector<4x768xbf16>
    %cst = arith.constant 0.000000e+00 : f32
    %1 = vector.broadcast %cst : f32 to vector<8x730xf32>
    %c0_1 = arith.constant 0 : index
    %c0_2 = arith.constant 0 : index
    %c0_3 = arith.constant 0 : index
    %2 = vector.load %arg1[%c0_1, %c0_2, %c0_3] : memref<9x8x4xbf16, #tpu.memory_space<vmem>>, vector<1x8x4xbf16>
    %3 = vector.shape_cast %2 : vector<1x8x4xbf16> to vector<8x4xbf16>
    %4 = vector.extract_strided_slice %0 {offsets = [0, 0], sizes = [4, 730], strides = [1, 1]} : vector<4x768xbf16> to vector<4x730xbf16>
    %cst_4 = arith.constant dense<0.000000e+00> : vector<8x730xf32>
    %5 = tpu.matmul %3, %4, %cst_4 {dimension_numbers = #tpu.dot_dimension_numbers<[1], [0], [0], [1], [0, 0, 1, 1], [], []>} : vector<8x4xbf16>, vector<4x730xbf16>, vector<8x730xf32> -> vector<8x730xf32>
    %6 = arith.addf %1, %5 : vector<8x730xf32>
    %c1 = arith.constant 1 : index
    %c0_5 = arith.constant 0 : index
    %c0_6 = arith.constant 0 : index
    %7 = vector.load %arg1[%c1, %c0_5, %c0_6] : memref<9x8x4xbf16, #tpu.memory_space<vmem>>, vector<1x8x4xbf16>
    %8 = vector.shape_cast %7 : vector<1x8x4xbf16> to vector<8x4xbf16>
    %9 = vector.extract_strided_slice %0 {offsets = [0, 1], sizes = [4, 730], strides = [1, 1]} : vector<4x768xbf16> to vector<4x730xbf16>
    %cst_7 = arith.constant dense<0.000000e+00> : vector<8x730xf32>
    %10 = tpu.matmul %8, %9, %cst_7 {dimension_numbers = #tpu.dot_dimension_numbers<[1], [0], [0], [1], [0, 0, 1, 1], [], []>} : vector<8x4xbf16>, vector<4x730xbf16>, vector<8x730xf32> -> vector<8x730xf32>
    %11 = arith.addf %6, %10 : vector<8x730xf32>
    %c2 = arith.constant 2 : index
    %c0_8 = arith.constant 0 : index
    %c0_9 = arith.constant 0 : index
    %12 = vector.load %arg1[%c2, %c0_8, %c0_9] : memref<9x8x4xbf16, #tpu.memory_space<vmem>>, vector<1x8x4xbf16>
    %13 = vector.shape_cast %12 : vector<1x8x4xbf16> to vector<8x4xbf16>
    %14 = vector.extract_strided_slice %0 {offsets = [0, 2], sizes = [4, 730], strides = [1, 1]} : vector<4x768xbf16> to vector<4x730xbf16>
    %cst_10 = arith.constant dense<0.000000e+00> : vector<8x730xf32>
    %15 = tpu.matmul %13, %14, %cst_10 {dimension_numbers = #tpu.dot_dimension_numbers<[1], [0], [0], [1], [0, 0, 1, 1], [], []>} : vector<8x4xbf16>, vector<4x730xbf16>, vector<8x730xf32> -> vector<8x730xf32>
    %16 = arith.addf %11, %15 : vector<8x730xf32>
    %c3 = arith.constant 3 : index
    %c0_11 = arith.constant 0 : index
    %c0_12 = arith.constant 0 : index
    %17 = vector.load %arg1[%c3, %c0_11, %c0_12] : memref<9x8x4xbf16, #tpu.memory_space<vmem>>, vector<1x8x4xbf16>
    %18 = vector.shape_cast %17 : vector<1x8x4xbf16> to vector<8x4xbf16>
    %19 = vector.extract_strided_slice %0 {offsets = [0, 18], sizes = [4, 730], strides = [1, 1]} : vector<4x768xbf16> to vector<4x730xbf16>
    %cst_13 = arith.constant dense<0.000000e+00> : vector<8x730xf32>
    %20 = tpu.matmul %18, %19, %cst_13 {dimension_numbers = #tpu.dot_dimension_numbers<[1], [0], [0], [1], [0, 0, 1, 1], [], []>} : vector<8x4xbf16>, vector<4x730xbf16>, vector<8x730xf32> -> vector<8x730xf32>
    %21 = arith.addf %16, %20 : vector<8x730xf32>
    %c4 = arith.constant 4 : index
    %c0_14 = arith.constant 0 : index
    %c0_15 = arith.constant 0 : index
    %22 = vector.load %arg1[%c4, %c0_14, %c0_15] : memref<9x8x4xbf16, #tpu.memory_space<vmem>>, vector<1x8x4xbf16>
    %23 = vector.shape_cast %22 : vector<1x8x4xbf16> to vector<8x4xbf16>
    %24 = vector.extract_strided_slice %0 {offsets = [0, 19], sizes = [4, 730], strides = [1, 1]} : vector<4x768xbf16> to vector<4x730xbf16>
    %cst_16 = arith.constant dense<0.000000e+00> : vector<8x730xf32>
    %25 = tpu.matmul %23, %24, %cst_16 {dimension_numbers = #tpu.dot_dimension_numbers<[1], [0], [0], [1], [0, 0, 1, 1], [], []>} : vector<8x4xbf16>, vector<4x730xbf16>, vector<8x730xf32> -> vector<8x730xf32>
    %26 = arith.addf %21, %25 : vector<8x730xf32>
    %c5 = arith.constant 5 : index
    %c0_17 = arith.constant 0 : index
    %c0_18 = arith.constant 0 : index
    %27 = vector.load %arg1[%c5, %c0_17, %c0_18] : memref<9x8x4xbf16, #tpu.memory_space<vmem>>, vector<1x8x4xbf16>
    %28 = vector.shape_cast %27 : vector<1x8x4xbf16> to vector<8x4xbf16>
    %29 = vector.extract_strided_slice %0 {offsets = [0, 20], sizes = [4, 730], strides = [1, 1]} : vector<4x768xbf16> to vector<4x730xbf16>
    %cst_19 = arith.constant dense<0.000000e+00> : vector<8x730xf32>
    %30 = tpu.matmul %28, %29, %cst_19 {dimension_numbers = #tpu.dot_dimension_numbers<[1], [0], [0], [1], [0, 0, 1, 1], [], []>} : vector<8x4xbf16>, vector<4x730xbf16>, vector<8x730xf32> -> vector<8x730xf32>
    %31 = arith.addf %26, %30 : vector<8x730xf32>
    %c6 = arith.constant 6 : index
    %c0_20 = arith.constant 0 : index
    %c0_21 = arith.constant 0 : index
    %32 = vector.load %arg1[%c6, %c0_20, %c0_21] : memref<9x8x4xbf16, #tpu.memory_space<vmem>>, vector<1x8x4xbf16>
    %33 = vector.shape_cast %32 : vector<1x8x4xbf16> to vector<8x4xbf16>
    %34 = vector.extract_strided_slice %0 {offsets = [0, 36], sizes = [4, 730], strides = [1, 1]} : vector<4x768xbf16> to vector<4x730xbf16>
    %cst_22 = arith.constant dense<0.000000e+00> : vector<8x730xf32>
    %35 = tpu.matmul %33, %34, %cst_22 {dimension_numbers = #tpu.dot_dimension_numbers<[1], [0], [0], [1], [0, 0, 1, 1], [], []>} : vector<8x4xbf16>, vector<4x730xbf16>, vector<8x730xf32> -> vector<8x730xf32>
    %36 = arith.addf %31, %35 : vector<8x730xf32>
    %c7 = arith.constant 7 : index
    %c0_23 = arith.constant 0 : index
    %c0_24 = arith.constant 0 : index
    %37 = vector.load %arg1[%c7, %c0_23, %c0_24] : memref<9x8x4xbf16, #tpu.memory_space<vmem>>, vector<1x8x4xbf16>
    %38 = vector.shape_cast %37 : vector<1x8x4xbf16> to vector<8x4xbf16>
    %39 = vector.extract_strided_slice %0 {offsets = [0, 37], sizes = [4, 730], strides = [1, 1]} : vector<4x768xbf16> to vector<4x730xbf16>
    %cst_25 = arith.constant dense<0.000000e+00> : vector<8x730xf32>
    %40 = tpu.matmul %38, %39, %cst_25 {dimension_numbers = #tpu.dot_dimension_numbers<[1], [0], [0], [1], [0, 0, 1, 1], [], []>} : vector<8x4xbf16>, vector<4x730xbf16>, vector<8x730xf32> -> vector<8x730xf32>
    %41 = arith.addf %36, %40 : vector<8x730xf32>
    %c8 = arith.constant 8 : index
    %c0_26 = arith.constant 0 : index
    %c0_27 = arith.constant 0 : index
    %42 = vector.load %arg1[%c8, %c0_26, %c0_27] : memref<9x8x4xbf16, #tpu.memory_space<vmem>>, vector<1x8x4xbf16>
    %43 = vector.shape_cast %42 : vector<1x8x4xbf16> to vector<8x4xbf16>
    %44 = vector.extract_strided_slice %0 {offsets = [0, 38], sizes = [4, 730], strides = [1, 1]} : vector<4x768xbf16> to vector<4x730xbf16>
    %cst_28 = arith.constant dense<0.000000e+00> : vector<8x730xf32>
    %45 = tpu.matmul %43, %44, %cst_28 {dimension_numbers = #tpu.dot_dimension_numbers<[1], [0], [0], [1], [0, 0, 1, 1], [], []>} : vector<8x4xbf16>, vector<4x730xbf16>, vector<8x730xf32> -> vector<8x730xf32>
    %46 = arith.addf %41, %45 : vector<8x730xf32>
    %c0_29 = arith.constant 0 : index
    %c0_30 = arith.constant 0 : index
    %47 = vector.load %arg2[%c0_29, %c0_30] : memref<8x1xf32, #tpu.memory_space<vmem>>, vector<8x1xf32>
    %48 = vector.broadcast %47 : vector<8x1xf32> to vector<8x730xf32>
    %49 = arith.addf %46, %48 : vector<8x730xf32>
    %cst_31 = arith.constant 0.000000e+00 : f32
    %50 = vector.broadcast %cst_31 : f32 to vector<8x730xf32>
    %51 = arith.maximumf %49, %50 : vector<8x730xf32>
    %52 = vector.extract_strided_slice %51 {offsets = [0, 0], sizes = [8, 711], strides = [1, 1]} : vector<8x730xf32> to vector<8x711xf32>
    %53 = vector.extract_strided_slice %51 {offsets = [0, 1], sizes = [8, 711], strides = [1, 1]} : vector<8x730xf32> to vector<8x711xf32>
    %54 = arith.maximumf %52, %53 : vector<8x711xf32>
    %55 = vector.extract_strided_slice %51 {offsets = [0, 18], sizes = [8, 711], strides = [1, 1]} : vector<8x730xf32> to vector<8x711xf32>
    %56 = vector.extract_strided_slice %51 {offsets = [0, 19], sizes = [8, 711], strides = [1, 1]} : vector<8x730xf32> to vector<8x711xf32>
    %57 = arith.maximumf %55, %56 : vector<8x711xf32>
    %58 = arith.maximumf %54, %57 : vector<8x711xf32>
    %c0_32 = arith.constant 0 : index
    %c0_33 = arith.constant 0 : index
    %59 = vector.load %arg3[%c0_32, %c0_33] : memref<1x711xf32, #tpu.memory_space<vmem>>, vector<1x711xf32>
    %60 = vector.broadcast %59 : vector<1x711xf32> to vector<8x711xf32>
    %61 = arith.mulf %58, %60 : vector<8x711xf32>
    %62 = arith.truncf %61 : vector<8x711xf32> to vector<8x711xbf16>
    %cst_34 = arith.constant 0.000000e+00 : f32
    %63 = vector.broadcast %cst_34 : f32 to vector<16x635xf32>
    %c0_35 = arith.constant 0 : index
    %c0_36 = arith.constant 0 : index
    %c0_37 = arith.constant 0 : index
    %64 = vector.load %arg4[%c0_35, %c0_36, %c0_37] : memref<9x16x8xbf16, #tpu.memory_space<vmem>>, vector<1x16x8xbf16>
    %65 = vector.shape_cast %64 : vector<1x16x8xbf16> to vector<16x8xbf16>
    %66 = vector.extract_strided_slice %62 {offsets = [0, 0], sizes = [8, 635], strides = [1, 1]} : vector<8x711xbf16> to vector<8x635xbf16>
    %cst_38 = arith.constant dense<0.000000e+00> : vector<16x635xf32>
    %67 = tpu.matmul %65, %66, %cst_38 {dimension_numbers = #tpu.dot_dimension_numbers<[1], [0], [0], [1], [0, 0, 1, 1], [], []>} : vector<16x8xbf16>, vector<8x635xbf16>, vector<16x635xf32> -> vector<16x635xf32>
    %68 = arith.addf %63, %67 : vector<16x635xf32>
    %c1_39 = arith.constant 1 : index
    %c0_40 = arith.constant 0 : index
    %c0_41 = arith.constant 0 : index
    %69 = vector.load %arg4[%c1_39, %c0_40, %c0_41] : memref<9x16x8xbf16, #tpu.memory_space<vmem>>, vector<1x16x8xbf16>
    %70 = vector.shape_cast %69 : vector<1x16x8xbf16> to vector<16x8xbf16>
    %71 = vector.extract_strided_slice %62 {offsets = [0, 2], sizes = [8, 635], strides = [1, 1]} : vector<8x711xbf16> to vector<8x635xbf16>
    %cst_42 = arith.constant dense<0.000000e+00> : vector<16x635xf32>
    %72 = tpu.matmul %70, %71, %cst_42 {dimension_numbers = #tpu.dot_dimension_numbers<[1], [0], [0], [1], [0, 0, 1, 1], [], []>} : vector<16x8xbf16>, vector<8x635xbf16>, vector<16x635xf32> -> vector<16x635xf32>
    %73 = arith.addf %68, %72 : vector<16x635xf32>
    %c2_43 = arith.constant 2 : index
    %c0_44 = arith.constant 0 : index
    %c0_45 = arith.constant 0 : index
    %74 = vector.load %arg4[%c2_43, %c0_44, %c0_45] : memref<9x16x8xbf16, #tpu.memory_space<vmem>>, vector<1x16x8xbf16>
    %75 = vector.shape_cast %74 : vector<1x16x8xbf16> to vector<16x8xbf16>
    %76 = vector.extract_strided_slice %62 {offsets = [0, 4], sizes = [8, 635], strides = [1, 1]} : vector<8x711xbf16> to vector<8x635xbf16>
    %cst_46 = arith.constant dense<0.000000e+00> : vector<16x635xf32>
    %77 = tpu.matmul %75, %76, %cst_46 {dimension_numbers = #tpu.dot_dimension_numbers<[1], [0], [0], [1], [0, 0, 1, 1], [], []>} : vector<16x8xbf16>, vector<8x635xbf16>, vector<16x635xf32> -> vector<16x635xf32>
    %78 = arith.addf %73, %77 : vector<16x635xf32>
    %c3_47 = arith.constant 3 : index
    %c0_48 = arith.constant 0 : index
    %c0_49 = arith.constant 0 : index
    %79 = vector.load %arg4[%c3_47, %c0_48, %c0_49] : memref<9x16x8xbf16, #tpu.memory_space<vmem>>, vector<1x16x8xbf16>
    %80 = vector.shape_cast %79 : vector<1x16x8xbf16> to vector<16x8xbf16>
    %81 = vector.extract_strided_slice %62 {offsets = [0, 36], sizes = [8, 635], strides = [1, 1]} : vector<8x711xbf16> to vector<8x635xbf16>
    %cst_50 = arith.constant dense<0.000000e+00> : vector<16x635xf32>
    %82 = tpu.matmul %80, %81, %cst_50 {dimension_numbers = #tpu.dot_dimension_numbers<[1], [0], [0], [1], [0, 0, 1, 1], [], []>} : vector<16x8xbf16>, vector<8x635xbf16>, vector<16x635xf32> -> vector<16x635xf32>
    %83 = arith.addf %78, %82 : vector<16x635xf32>
    %c4_51 = arith.constant 4 : index
    %c0_52 = arith.constant 0 : index
    %c0_53 = arith.constant 0 : index
    %84 = vector.load %arg4[%c4_51, %c0_52, %c0_53] : memref<9x16x8xbf16, #tpu.memory_space<vmem>>, vector<1x16x8xbf16>
    %85 = vector.shape_cast %84 : vector<1x16x8xbf16> to vector<16x8xbf16>
    %86 = vector.extract_strided_slice %62 {offsets = [0, 38], sizes = [8, 635], strides = [1, 1]} : vector<8x711xbf16> to vector<8x635xbf16>
    %cst_54 = arith.constant dense<0.000000e+00> : vector<16x635xf32>
    %87 = tpu.matmul %85, %86, %cst_54 {dimension_numbers = #tpu.dot_dimension_numbers<[1], [0], [0], [1], [0, 0, 1, 1], [], []>} : vector<16x8xbf16>, vector<8x635xbf16>, vector<16x635xf32> -> vector<16x635xf32>
    %88 = arith.addf %83, %87 : vector<16x635xf32>
    %c5_55 = arith.constant 5 : index
    %c0_56 = arith.constant 0 : index
    %c0_57 = arith.constant 0 : index
    %89 = vector.load %arg4[%c5_55, %c0_56, %c0_57] : memref<9x16x8xbf16, #tpu.memory_space<vmem>>, vector<1x16x8xbf16>
    %90 = vector.shape_cast %89 : vector<1x16x8xbf16> to vector<16x8xbf16>
    %91 = vector.extract_strided_slice %62 {offsets = [0, 40], sizes = [8, 635], strides = [1, 1]} : vector<8x711xbf16> to vector<8x635xbf16>
    %cst_58 = arith.constant dense<0.000000e+00> : vector<16x635xf32>
    %92 = tpu.matmul %90, %91, %cst_58 {dimension_numbers = #tpu.dot_dimension_numbers<[1], [0], [0], [1], [0, 0, 1, 1], [], []>} : vector<16x8xbf16>, vector<8x635xbf16>, vector<16x635xf32> -> vector<16x635xf32>
    %93 = arith.addf %88, %92 : vector<16x635xf32>
    %c6_59 = arith.constant 6 : index
    %c0_60 = arith.constant 0 : index
    %c0_61 = arith.constant 0 : index
    %94 = vector.load %arg4[%c6_59, %c0_60, %c0_61] : memref<9x16x8xbf16, #tpu.memory_space<vmem>>, vector<1x16x8xbf16>
    %95 = vector.shape_cast %94 : vector<1x16x8xbf16> to vector<16x8xbf16>
    %96 = vector.extract_strided_slice %62 {offsets = [0, 72], sizes = [8, 635], strides = [1, 1]} : vector<8x711xbf16> to vector<8x635xbf16>
    %cst_62 = arith.constant dense<0.000000e+00> : vector<16x635xf32>
    %97 = tpu.matmul %95, %96, %cst_62 {dimension_numbers = #tpu.dot_dimension_numbers<[1], [0], [0], [1], [0, 0, 1, 1], [], []>} : vector<16x8xbf16>, vector<8x635xbf16>, vector<16x635xf32> -> vector<16x635xf32>
    %98 = arith.addf %93, %97 : vector<16x635xf32>
    %c7_63 = arith.constant 7 : index
    %c0_64 = arith.constant 0 : index
    %c0_65 = arith.constant 0 : index
    %99 = vector.load %arg4[%c7_63, %c0_64, %c0_65] : memref<9x16x8xbf16, #tpu.memory_space<vmem>>, vector<1x16x8xbf16>
    %100 = vector.shape_cast %99 : vector<1x16x8xbf16> to vector<16x8xbf16>
    %101 = vector.extract_strided_slice %62 {offsets = [0, 74], sizes = [8, 635], strides = [1, 1]} : vector<8x711xbf16> to vector<8x635xbf16>
    %cst_66 = arith.constant dense<0.000000e+00> : vector<16x635xf32>
    %102 = tpu.matmul %100, %101, %cst_66 {dimension_numbers = #tpu.dot_dimension_numbers<[1], [0], [0], [1], [0, 0, 1, 1], [], []>} : vector<16x8xbf16>, vector<8x635xbf16>, vector<16x635xf32> -> vector<16x635xf32>
    %103 = arith.addf %98, %102 : vector<16x635xf32>
    %c8_67 = arith.constant 8 : index
    %c0_68 = arith.constant 0 : index
    %c0_69 = arith.constant 0 : index
    %104 = vector.load %arg4[%c8_67, %c0_68, %c0_69] : memref<9x16x8xbf16, #tpu.memory_space<vmem>>, vector<1x16x8xbf16>
    %105 = vector.shape_cast %104 : vector<1x16x8xbf16> to vector<16x8xbf16>
    %106 = vector.extract_strided_slice %62 {offsets = [0, 76], sizes = [8, 635], strides = [1, 1]} : vector<8x711xbf16> to vector<8x635xbf16>
    %cst_70 = arith.constant dense<0.000000e+00> : vector<16x635xf32>
    %107 = tpu.matmul %105, %106, %cst_70 {dimension_numbers = #tpu.dot_dimension_numbers<[1], [0], [0], [1], [0, 0, 1, 1], [], []>} : vector<16x8xbf16>, vector<8x635xbf16>, vector<16x635xf32> -> vector<16x635xf32>
    %108 = arith.addf %103, %107 : vector<16x635xf32>
    %c0_71 = arith.constant 0 : index
    %c0_72 = arith.constant 0 : index
    %109 = vector.load %arg5[%c0_71, %c0_72] : memref<16x1xf32, #tpu.memory_space<vmem>>, vector<16x1xf32>
    %110 = vector.broadcast %109 : vector<16x1xf32> to vector<16x635xf32>
    %111 = arith.addf %108, %110 : vector<16x635xf32>
    %cst_73 = arith.constant 0.000000e+00 : f32
    %112 = vector.broadcast %cst_73 : f32 to vector<16x635xf32>
    %113 = arith.maximumf %111, %112 : vector<16x635xf32>
    %114 = vector.extract_strided_slice %113 {offsets = [0, 0], sizes = [16, 597], strides = [1, 1]} : vector<16x635xf32> to vector<16x597xf32>
    %115 = vector.extract_strided_slice %113 {offsets = [0, 2], sizes = [16, 597], strides = [1, 1]} : vector<16x635xf32> to vector<16x597xf32>
    %116 = arith.maximumf %114, %115 : vector<16x597xf32>
    %117 = vector.extract_strided_slice %113 {offsets = [0, 36], sizes = [16, 597], strides = [1, 1]} : vector<16x635xf32> to vector<16x597xf32>
    %118 = vector.extract_strided_slice %113 {offsets = [0, 38], sizes = [16, 597], strides = [1, 1]} : vector<16x635xf32> to vector<16x597xf32>
    %119 = arith.maximumf %117, %118 : vector<16x597xf32>
    %120 = arith.maximumf %116, %119 : vector<16x597xf32>
    %c0_74 = arith.constant 0 : index
    %c0_75 = arith.constant 0 : index
    %121 = vector.load %arg6[%c0_74, %c0_75] : memref<597x32xf32, #tpu.memory_space<vmem>>, vector<597x32xf32>
    %cst_76 = arith.constant dense<0.000000e+00> : vector<16x32xf32>
    %122 = tpu.matmul %120, %121, %cst_76 {dimension_numbers = #tpu.dot_dimension_numbers<[1], [0], [0], [1], [0, 0, 1, 1], [], []>} : vector<16x597xf32>, vector<597x32xf32>, vector<16x32xf32> -> vector<16x32xf32>
    %cst_77 = arith.constant 0.000000e+00 : f32
    %123 = vector.broadcast %cst_77 : f32 to vector<1x64xf32>
    %124 = vector.extract_strided_slice %122 {offsets = [0, 0], sizes = [1, 32], strides = [1, 1]} : vector<16x32xf32> to vector<1x32xf32>
    %c0_78 = arith.constant 0 : index
    %c0_79 = arith.constant 0 : index
    %c0_80 = arith.constant 0 : index
    %125 = vector.load %arg7[%c0_78, %c0_79, %c0_80] : memref<16x32x64xf32, #tpu.memory_space<vmem>>, vector<1x32x64xf32>
    %126 = vector.shape_cast %125 : vector<1x32x64xf32> to vector<32x64xf32>
    %cst_81 = arith.constant dense<0.000000e+00> : vector<1x64xf32>
    %127 = tpu.matmul %124, %126, %cst_81 {dimension_numbers = #tpu.dot_dimension_numbers<[1], [0], [0], [1], [0, 0, 1, 1], [], []>} : vector<1x32xf32>, vector<32x64xf32>, vector<1x64xf32> -> vector<1x64xf32>
    %128 = arith.addf %123, %127 : vector<1x64xf32>
    %129 = vector.extract_strided_slice %122 {offsets = [1, 0], sizes = [1, 32], strides = [1, 1]} : vector<16x32xf32> to vector<1x32xf32>
    %c1_82 = arith.constant 1 : index
    %c0_83 = arith.constant 0 : index
    %c0_84 = arith.constant 0 : index
    %130 = vector.load %arg7[%c1_82, %c0_83, %c0_84] : memref<16x32x64xf32, #tpu.memory_space<vmem>>, vector<1x32x64xf32>
    %131 = vector.shape_cast %130 : vector<1x32x64xf32> to vector<32x64xf32>
    %cst_85 = arith.constant dense<0.000000e+00> : vector<1x64xf32>
    %132 = tpu.matmul %129, %131, %cst_85 {dimension_numbers = #tpu.dot_dimension_numbers<[1], [0], [0], [1], [0, 0, 1, 1], [], []>} : vector<1x32xf32>, vector<32x64xf32>, vector<1x64xf32> -> vector<1x64xf32>
    %133 = arith.addf %128, %132 : vector<1x64xf32>
    %134 = vector.extract_strided_slice %122 {offsets = [2, 0], sizes = [1, 32], strides = [1, 1]} : vector<16x32xf32> to vector<1x32xf32>
    %c2_86 = arith.constant 2 : index
    %c0_87 = arith.constant 0 : index
    %c0_88 = arith.constant 0 : index
    %135 = vector.load %arg7[%c2_86, %c0_87, %c0_88] : memref<16x32x64xf32, #tpu.memory_space<vmem>>, vector<1x32x64xf32>
    %136 = vector.shape_cast %135 : vector<1x32x64xf32> to vector<32x64xf32>
    %cst_89 = arith.constant dense<0.000000e+00> : vector<1x64xf32>
    %137 = tpu.matmul %134, %136, %cst_89 {dimension_numbers = #tpu.dot_dimension_numbers<[1], [0], [0], [1], [0, 0, 1, 1], [], []>} : vector<1x32xf32>, vector<32x64xf32>, vector<1x64xf32> -> vector<1x64xf32>
    %138 = arith.addf %133, %137 : vector<1x64xf32>
    %139 = vector.extract_strided_slice %122 {offsets = [3, 0], sizes = [1, 32], strides = [1, 1]} : vector<16x32xf32> to vector<1x32xf32>
    %c3_90 = arith.constant 3 : index
    %c0_91 = arith.constant 0 : index
    %c0_92 = arith.constant 0 : index
    %140 = vector.load %arg7[%c3_90, %c0_91, %c0_92] : memref<16x32x64xf32, #tpu.memory_space<vmem>>, vector<1x32x64xf32>
    %141 = vector.shape_cast %140 : vector<1x32x64xf32> to vector<32x64xf32>
    %cst_93 = arith.constant dense<0.000000e+00> : vector<1x64xf32>
    %142 = tpu.matmul %139, %141, %cst_93 {dimension_numbers = #tpu.dot_dimension_numbers<[1], [0], [0], [1], [0, 0, 1, 1], [], []>} : vector<1x32xf32>, vector<32x64xf32>, vector<1x64xf32> -> vector<1x64xf32>
    %143 = arith.addf %138, %142 : vector<1x64xf32>
    %144 = vector.extract_strided_slice %122 {offsets = [4, 0], sizes = [1, 32], strides = [1, 1]} : vector<16x32xf32> to vector<1x32xf32>
    %c4_94 = arith.constant 4 : index
    %c0_95 = arith.constant 0 : index
    %c0_96 = arith.constant 0 : index
    %145 = vector.load %arg7[%c4_94, %c0_95, %c0_96] : memref<16x32x64xf32, #tpu.memory_space<vmem>>, vector<1x32x64xf32>
    %146 = vector.shape_cast %145 : vector<1x32x64xf32> to vector<32x64xf32>
    %cst_97 = arith.constant dense<0.000000e+00> : vector<1x64xf32>
    %147 = tpu.matmul %144, %146, %cst_97 {dimension_numbers = #tpu.dot_dimension_numbers<[1], [0], [0], [1], [0, 0, 1, 1], [], []>} : vector<1x32xf32>, vector<32x64xf32>, vector<1x64xf32> -> vector<1x64xf32>
    %148 = arith.addf %143, %147 : vector<1x64xf32>
    %149 = vector.extract_strided_slice %122 {offsets = [5, 0], sizes = [1, 32], strides = [1, 1]} : vector<16x32xf32> to vector<1x32xf32>
    %c5_98 = arith.constant 5 : index
    %c0_99 = arith.constant 0 : index
    %c0_100 = arith.constant 0 : index
    %150 = vector.load %arg7[%c5_98, %c0_99, %c0_100] : memref<16x32x64xf32, #tpu.memory_space<vmem>>, vector<1x32x64xf32>
    %151 = vector.shape_cast %150 : vector<1x32x64xf32> to vector<32x64xf32>
    %cst_101 = arith.constant dense<0.000000e+00> : vector<1x64xf32>
    %152 = tpu.matmul %149, %151, %cst_101 {dimension_numbers = #tpu.dot_dimension_numbers<[1], [0], [0], [1], [0, 0, 1, 1], [], []>} : vector<1x32xf32>, vector<32x64xf32>, vector<1x64xf32> -> vector<1x64xf32>
    %153 = arith.addf %148, %152 : vector<1x64xf32>
    %154 = vector.extract_strided_slice %122 {offsets = [6, 0], sizes = [1, 32], strides = [1, 1]} : vector<16x32xf32> to vector<1x32xf32>
    %c6_102 = arith.constant 6 : index
    %c0_103 = arith.constant 0 : index
    %c0_104 = arith.constant 0 : index
    %155 = vector.load %arg7[%c6_102, %c0_103, %c0_104] : memref<16x32x64xf32, #tpu.memory_space<vmem>>, vector<1x32x64xf32>
    %156 = vector.shape_cast %155 : vector<1x32x64xf32> to vector<32x64xf32>
    %cst_105 = arith.constant dense<0.000000e+00> : vector<1x64xf32>
    %157 = tpu.matmul %154, %156, %cst_105 {dimension_numbers = #tpu.dot_dimension_numbers<[1], [0], [0], [1], [0, 0, 1, 1], [], []>} : vector<1x32xf32>, vector<32x64xf32>, vector<1x64xf32> -> vector<1x64xf32>
    %158 = arith.addf %153, %157 : vector<1x64xf32>
    %159 = vector.extract_strided_slice %122 {offsets = [7, 0], sizes = [1, 32], strides = [1, 1]} : vector<16x32xf32> to vector<1x32xf32>
    %c7_106 = arith.constant 7 : index
    %c0_107 = arith.constant 0 : index
    %c0_108 = arith.constant 0 : index
    %160 = vector.load %arg7[%c7_106, %c0_107, %c0_108] : memref<16x32x64xf32, #tpu.memory_space<vmem>>, vector<1x32x64xf32>
    %161 = vector.shape_cast %160 : vector<1x32x64xf32> to vector<32x64xf32>
    %cst_109 = arith.constant dense<0.000000e+00> : vector<1x64xf32>
    %162 = tpu.matmul %159, %161, %cst_109 {dimension_numbers = #tpu.dot_dimension_numbers<[1], [0], [0], [1], [0, 0, 1, 1], [], []>} : vector<1x32xf32>, vector<32x64xf32>, vector<1x64xf32> -> vector<1x64xf32>
    %163 = arith.addf %158, %162 : vector<1x64xf32>
    %164 = vector.extract_strided_slice %122 {offsets = [8, 0], sizes = [1, 32], strides = [1, 1]} : vector<16x32xf32> to vector<1x32xf32>
    %c8_110 = arith.constant 8 : index
    %c0_111 = arith.constant 0 : index
    %c0_112 = arith.constant 0 : index
    %165 = vector.load %arg7[%c8_110, %c0_111, %c0_112] : memref<16x32x64xf32, #tpu.memory_space<vmem>>, vector<1x32x64xf32>
    %166 = vector.shape_cast %165 : vector<1x32x64xf32> to vector<32x64xf32>
    %cst_113 = arith.constant dense<0.000000e+00> : vector<1x64xf32>
    %167 = tpu.matmul %164, %166, %cst_113 {dimension_numbers = #tpu.dot_dimension_numbers<[1], [0], [0], [1], [0, 0, 1, 1], [], []>} : vector<1x32xf32>, vector<32x64xf32>, vector<1x64xf32> -> vector<1x64xf32>
    %168 = arith.addf %163, %167 : vector<1x64xf32>
    %169 = vector.extract_strided_slice %122 {offsets = [9, 0], sizes = [1, 32], strides = [1, 1]} : vector<16x32xf32> to vector<1x32xf32>
    %c9 = arith.constant 9 : index
    %c0_114 = arith.constant 0 : index
    %c0_115 = arith.constant 0 : index
    %170 = vector.load %arg7[%c9, %c0_114, %c0_115] : memref<16x32x64xf32, #tpu.memory_space<vmem>>, vector<1x32x64xf32>
    %171 = vector.shape_cast %170 : vector<1x32x64xf32> to vector<32x64xf32>
    %cst_116 = arith.constant dense<0.000000e+00> : vector<1x64xf32>
    %172 = tpu.matmul %169, %171, %cst_116 {dimension_numbers = #tpu.dot_dimension_numbers<[1], [0], [0], [1], [0, 0, 1, 1], [], []>} : vector<1x32xf32>, vector<32x64xf32>, vector<1x64xf32> -> vector<1x64xf32>
    %173 = arith.addf %168, %172 : vector<1x64xf32>
    %174 = vector.extract_strided_slice %122 {offsets = [10, 0], sizes = [1, 32], strides = [1, 1]} : vector<16x32xf32> to vector<1x32xf32>
    %c10 = arith.constant 10 : index
    %c0_117 = arith.constant 0 : index
    %c0_118 = arith.constant 0 : index
    %175 = vector.load %arg7[%c10, %c0_117, %c0_118] : memref<16x32x64xf32, #tpu.memory_space<vmem>>, vector<1x32x64xf32>
    %176 = vector.shape_cast %175 : vector<1x32x64xf32> to vector<32x64xf32>
    %cst_119 = arith.constant dense<0.000000e+00> : vector<1x64xf32>
    %177 = tpu.matmul %174, %176, %cst_119 {dimension_numbers = #tpu.dot_dimension_numbers<[1], [0], [0], [1], [0, 0, 1, 1], [], []>} : vector<1x32xf32>, vector<32x64xf32>, vector<1x64xf32> -> vector<1x64xf32>
    %178 = arith.addf %173, %177 : vector<1x64xf32>
    %179 = vector.extract_strided_slice %122 {offsets = [11, 0], sizes = [1, 32], strides = [1, 1]} : vector<16x32xf32> to vector<1x32xf32>
    %c11 = arith.constant 11 : index
    %c0_120 = arith.constant 0 : index
    %c0_121 = arith.constant 0 : index
    %180 = vector.load %arg7[%c11, %c0_120, %c0_121] : memref<16x32x64xf32, #tpu.memory_space<vmem>>, vector<1x32x64xf32>
    %181 = vector.shape_cast %180 : vector<1x32x64xf32> to vector<32x64xf32>
    %cst_122 = arith.constant dense<0.000000e+00> : vector<1x64xf32>
    %182 = tpu.matmul %179, %181, %cst_122 {dimension_numbers = #tpu.dot_dimension_numbers<[1], [0], [0], [1], [0, 0, 1, 1], [], []>} : vector<1x32xf32>, vector<32x64xf32>, vector<1x64xf32> -> vector<1x64xf32>
    %183 = arith.addf %178, %182 : vector<1x64xf32>
    %184 = vector.extract_strided_slice %122 {offsets = [12, 0], sizes = [1, 32], strides = [1, 1]} : vector<16x32xf32> to vector<1x32xf32>
    %c12 = arith.constant 12 : index
    %c0_123 = arith.constant 0 : index
    %c0_124 = arith.constant 0 : index
    %185 = vector.load %arg7[%c12, %c0_123, %c0_124] : memref<16x32x64xf32, #tpu.memory_space<vmem>>, vector<1x32x64xf32>
    %186 = vector.shape_cast %185 : vector<1x32x64xf32> to vector<32x64xf32>
    %cst_125 = arith.constant dense<0.000000e+00> : vector<1x64xf32>
    %187 = tpu.matmul %184, %186, %cst_125 {dimension_numbers = #tpu.dot_dimension_numbers<[1], [0], [0], [1], [0, 0, 1, 1], [], []>} : vector<1x32xf32>, vector<32x64xf32>, vector<1x64xf32> -> vector<1x64xf32>
    %188 = arith.addf %183, %187 : vector<1x64xf32>
    %189 = vector.extract_strided_slice %122 {offsets = [13, 0], sizes = [1, 32], strides = [1, 1]} : vector<16x32xf32> to vector<1x32xf32>
    %c13 = arith.constant 13 : index
    %c0_126 = arith.constant 0 : index
    %c0_127 = arith.constant 0 : index
    %190 = vector.load %arg7[%c13, %c0_126, %c0_127] : memref<16x32x64xf32, #tpu.memory_space<vmem>>, vector<1x32x64xf32>
    %191 = vector.shape_cast %190 : vector<1x32x64xf32> to vector<32x64xf32>
    %cst_128 = arith.constant dense<0.000000e+00> : vector<1x64xf32>
    %192 = tpu.matmul %189, %191, %cst_128 {dimension_numbers = #tpu.dot_dimension_numbers<[1], [0], [0], [1], [0, 0, 1, 1], [], []>} : vector<1x32xf32>, vector<32x64xf32>, vector<1x64xf32> -> vector<1x64xf32>
    %193 = arith.addf %188, %192 : vector<1x64xf32>
    %194 = vector.extract_strided_slice %122 {offsets = [14, 0], sizes = [1, 32], strides = [1, 1]} : vector<16x32xf32> to vector<1x32xf32>
    %c14 = arith.constant 14 : index
    %c0_129 = arith.constant 0 : index
    %c0_130 = arith.constant 0 : index
    %195 = vector.load %arg7[%c14, %c0_129, %c0_130] : memref<16x32x64xf32, #tpu.memory_space<vmem>>, vector<1x32x64xf32>
    %196 = vector.shape_cast %195 : vector<1x32x64xf32> to vector<32x64xf32>
    %cst_131 = arith.constant dense<0.000000e+00> : vector<1x64xf32>
    %197 = tpu.matmul %194, %196, %cst_131 {dimension_numbers = #tpu.dot_dimension_numbers<[1], [0], [0], [1], [0, 0, 1, 1], [], []>} : vector<1x32xf32>, vector<32x64xf32>, vector<1x64xf32> -> vector<1x64xf32>
    %198 = arith.addf %193, %197 : vector<1x64xf32>
    %199 = vector.extract_strided_slice %122 {offsets = [15, 0], sizes = [1, 32], strides = [1, 1]} : vector<16x32xf32> to vector<1x32xf32>
    %c15 = arith.constant 15 : index
    %c0_132 = arith.constant 0 : index
    %c0_133 = arith.constant 0 : index
    %200 = vector.load %arg7[%c15, %c0_132, %c0_133] : memref<16x32x64xf32, #tpu.memory_space<vmem>>, vector<1x32x64xf32>
    %201 = vector.shape_cast %200 : vector<1x32x64xf32> to vector<32x64xf32>
    %cst_134 = arith.constant dense<0.000000e+00> : vector<1x64xf32>
    %202 = tpu.matmul %199, %201, %cst_134 {dimension_numbers = #tpu.dot_dimension_numbers<[1], [0], [0], [1], [0, 0, 1, 1], [], []>} : vector<1x32xf32>, vector<32x64xf32>, vector<1x64xf32> -> vector<1x64xf32>
    %203 = arith.addf %198, %202 : vector<1x64xf32>
    %c0_135 = arith.constant 0 : index
    %c0_136 = arith.constant 0 : index
    %204 = vector.load %arg8[%c0_135, %c0_136] : memref<1x64xf32, #tpu.memory_space<vmem>>, vector<1x64xf32>
    %205 = arith.addf %203, %204 : vector<1x64xf32>
    %cst_137 = arith.constant 0.000000e+00 : f32
    %206 = vector.broadcast %cst_137 : f32 to vector<1x64xf32>
    %207 = arith.maximumf %205, %206 : vector<1x64xf32>
    %208 = vector.extract_strided_slice %207 {offsets = [0, 0], sizes = [1, 32], strides = [1, 1]} : vector<1x64xf32> to vector<1x32xf32>
    %c0_138 = arith.constant 0 : index
    %c0_139 = arith.constant 0 : index
    %209 = vector.load %arg9[%c0_138, %c0_139] : memref<32x10xf32, #tpu.memory_space<vmem>>, vector<32x10xf32>
    %cst_140 = arith.constant dense<0.000000e+00> : vector<1x10xf32>
    %210 = tpu.matmul %208, %209, %cst_140 {dimension_numbers = #tpu.dot_dimension_numbers<[1], [0], [0], [1], [0, 0, 1, 1], [], []>} : vector<1x32xf32>, vector<32x10xf32>, vector<1x10xf32> -> vector<1x10xf32>
    %c0_141 = arith.constant 0 : index
    %c0_142 = arith.constant 0 : index
    %211 = vector.load %arg10[%c0_141, %c0_142] : memref<1x10xf32, #tpu.memory_space<vmem>>, vector<1x10xf32>
    %212 = arith.addf %210, %211 : vector<1x10xf32>
    %213 = vector.extract_strided_slice %207 {offsets = [0, 32], sizes = [1, 32], strides = [1, 1]} : vector<1x64xf32> to vector<1x32xf32>
    %c0_143 = arith.constant 0 : index
    %c0_144 = arith.constant 0 : index
    %214 = vector.load %arg9[%c0_143, %c0_144] : memref<32x10xf32, #tpu.memory_space<vmem>>, vector<32x10xf32>
    %cst_145 = arith.constant dense<0.000000e+00> : vector<1x10xf32>
    %215 = tpu.matmul %213, %214, %cst_145 {dimension_numbers = #tpu.dot_dimension_numbers<[1], [0], [0], [1], [0, 0, 1, 1], [], []>} : vector<1x32xf32>, vector<32x10xf32>, vector<1x10xf32> -> vector<1x10xf32>
    %c0_146 = arith.constant 0 : index
    %c0_147 = arith.constant 0 : index
    %216 = vector.load %arg10[%c0_146, %c0_147] : memref<1x10xf32, #tpu.memory_space<vmem>>, vector<1x10xf32>
    %217 = arith.addf %215, %216 : vector<1x10xf32>
    %218 = tpu.concatenate %212, %217 in 0 : vector<1x10xf32>, vector<1x10xf32> -> vector<2x10xf32>
    %c0_148 = arith.constant 0 : index
    %c0_149 = arith.constant 0 : index
    %219 = vector.load %arg11[%c0_148, %c0_149] : memref<2x10xf32, #tpu.memory_space<vmem>>, vector<2x10xf32>
    tpu.vector_store %arg11[%c0_148, %c0_149], %218 {strides = array<i32>} : memref<2x10xf32, #tpu.memory_space<vmem>>, vector<2x10xf32>,
    return
  }
}

</mosaic_0001>

<llo_original>
// kernel: tile.8
$region0: #{tile.8}
  #allocation0 [shape = 's32[1]{0}', space=sflag, size = 0x4, scoped, tag = 'scoped memory for tile.8']
  %s0 = inlined_call_operand.vmem [shape: f32[32], index: 0, kind: input, shape index: {}]
  %s1 = inlined_call_operand.vmem [shape: f32[2,32], index: 1, kind: output, shape index: {}]
  // Predicated region
  $region2: #{tile.8} parent=0 // pred_check
    _
  $region3: #{tile.8} parent=0 // pred_check_branch
    %3 = sbr.rel (0) target = $region5
  $region4: #{tile.8} parent=0 // pred_region
    _
  $region5: #{tile.8} parent=0 // pred_fallthru
    _
  %v4 = vld [vmem:[%s0] ss:$0 sm:$0xff]
  %5 = vst [vmem:[%s1] sm:$0x3] %v4

// kernel: tile.9
$region0: #{tile.9}
  %s0 = inlined_call_operand.vmem [shape: f32[2,32], index: 0, kind: input, shape index: {}]
  %s1 = inlined_call_operand.vmem [shape: f32[1,64], index: 1, kind: output, shape index: {}]
  $region1: #{tile.9} parent=0
    #allocation0 [shape = 'u8[4096]{0}', space=vmem, size = 0x1000, scoped, tag = 'scoped mem for output reshape']
    #allocation1 [shape = 'u8[4096]{0}', space=vmem, size = 0x1000, scoped, tag = 'scoped mem for input reshape']
    %s3 = sshll.u32 1, 2
    %s4 = ssub.s32 %s3, 1
    %v5 = vld [vmem:[%s0] sm:%s4]
    %6 = vst [vmem:[#allocation1] sm:%s4] %v5
    %v7 = vld [vmem:[#allocation1] sm:$0x1]
    %vm8 = vcmask 261120
    %9 = vst.msk [vmem:[#allocation0] sm:$0x1] %vm8, %v7
    %s10 = scalar_lea.vmem [#allocation1], 1
    %v11 = vld [vmem:[%s10] sm:$0x1]
    %12 = vrot.lane.b32.xlu0 %v11, 32
    %v13 = vpop.permute.xlu0 %12
    %vm14 = vcmask 523520
    %15 = vst.msk [vmem:[#allocation0] sm:$0x1] %vm14, %v13
    %s17 = sshll.u32 1, 1
    %s18 = ssub.s32 %s17, 1
    %v20 = vld [vmem:[#allocation0] sm:%s18]
    %s21 = sshll.u32 1, 1
    %s22 = ssub.s32 %s21, 1
    %23 = vst [vmem:[%s1] sm:%s22] %v20

// kernel: cnn_forward.1
$region0: #{cnn_forward.1}
  #allocation0 [shape = 'u32[]', space=smem, size = 0x4, offset = 0x4, fixed_abs, tag = 'smem constant byte address 0x4 - core index']
  #allocation1 [shape = 'u32[144,128]{1,0:T(1,128)}', space=vmem, size = 0x12000, scoped, tag = 'internal scratch']
  %s0 = inlined_call_operand.vmem [shape: bf16[4,768], index: 0, kind: input, shape index: {}]
  %s1 = inlined_call_operand.vmem [shape: bf16[9,8,4], index: 1, kind: input, shape index: {}]
  %s2 = inlined_call_operand.vmem [shape: f32[8,1], index: 2, kind: input, shape index: {}]
  %s3 = inlined_call_operand.vmem [shape: f32[1,711], index: 3, kind: input, shape index: {}]
  %s4 = inlined_call_operand.vmem [shape: bf16[9,16,8], index: 4, kind: input, shape index: {}]
  %s5 = inlined_call_operand.vmem [shape: f32[16,1], index: 5, kind: input, shape index: {}]
  %s6 = inlined_call_operand.vmem [shape: f32[597,32], index: 6, kind: input, shape index: {}]
  %s7 = inlined_call_operand.vmem [shape: f32[16,32,64], index: 7, kind: input, shape index: {}]
  %s8 = inlined_call_operand.vmem [shape: f32[1,64], index: 8, kind: input, shape index: {}]
  %s9 = inlined_call_operand.vmem [shape: f32[32,10], index: 9, kind: input, shape index: {}]
  %s10 = inlined_call_operand.vmem [shape: f32[1,10], index: 10, kind: input, shape index: {}]
  %s11 = inlined_call_operand.hbm [shape: f32[2,10], index: 11, kind: output, shape index: {}]
  %s12 = sld [smem:[#allocation0]]
  $region54: #{cnn_forward.1} parent=0
    _
  %s14 = ssub.s32 1, %s12
  %s15 = scalar_select 0, %s14, %s12
  $region1: #{cnn_forward.1} parent=0
    #allocation2 [shape = 'u8[1024]{0}', space=vmem, size = 0x400, scoped, tag = 'output window, operand 0, single buffered']
    #allocation3 [shape = 's32[1]{0}', space=sflag, size = 0x4, scoped, tag = 'scoped memory for cnn_forward.1']
    %16 = vsyncpa [#allocation3], 0
    // Predicated region
    $region2: #{cnn_forward.1} parent=1 // pred_check
      _
    $region3: #{cnn_forward.1} parent=1 // pred_check_branch
      %18 = sbr.rel (0) target = $region5
    $region4: #{cnn_forward.1} parent=1 // pred_region
      _
    $region5: #{cnn_forward.1} parent=1 // pred_fallthru
      _
    // Predicated region
    $region6: #{cnn_forward.1} parent=1 // pred_check
      _
    $region7: #{cnn_forward.1} parent=1 // pred_check_branch
      %20 = sbr.rel (0) target = $region9
    $region8: #{cnn_forward.1} parent=1 // pred_region
      _
    $region9: #{cnn_forward.1} parent=1 // pred_fallthru
      _
    // Predicated region
    $region10: #{cnn_forward.1} parent=1 // pred_check
      _
    $region11: #{cnn_forward.1} parent=1 // pred_check_branch
      %22 = sbr.rel (0) target = $region13
    $region12: #{cnn_forward.1} parent=1 // pred_region
      _
    $region13: #{cnn_forward.1} parent=1 // pred_fallthru
      _
    // Predicated region
    $region14: #{cnn_forward.1} parent=1 // pred_check
      _
    $region15: #{cnn_forward.1} parent=1 // pred_check_branch
      %24 = sbr.rel (0) target = $region17
    $region16: #{cnn_forward.1} parent=1 // pred_region
      _
    $region17: #{cnn_forward.1} parent=1 // pred_fallthru
      _
    // Predicated region
    $region18: #{cnn_forward.1} parent=1 // pred_check
      _
    $region19: #{cnn_forward.1} parent=1 // pred_check_branch
      %26 = sbr.rel (0) target = $region21
    $region20: #{cnn_forward.1} parent=1 // pred_region
      _
    $region21: #{cnn_forward.1} parent=1 // pred_fallthru
      _
    // Predicated region
    $region22: #{cnn_forward.1} parent=1 // pred_check
      _
    $region23: #{cnn_forward.1} parent=1 // pred_check_branch
      %28 = sbr.rel (0) target = $region25
    $region24: #{cnn_forward.1} parent=1 // pred_region
      _
    $region25: #{cnn_forward.1} parent=1 // pred_fallthru
      _
    // Predicated region
    $region26: #{cnn_forward.1} parent=1 // pred_check
      _
    $region27: #{cnn_forward.1} parent=1 // pred_check_branch
      %30 = sbr.rel (0) target = $region29
    $region28: #{cnn_forward.1} parent=1 // pred_region
      _
    $region29: #{cnn_forward.1} parent=1 // pred_fallthru
      _
    // Predicated region
    $region30: #{cnn_forward.1} parent=1 // pred_check
      _
    $region31: #{cnn_forward.1} parent=1 // pred_check_branch
      %32 = sbr.rel (0) target = $region33
    $region32: #{cnn_forward.1} parent=1 // pred_region
      _
    $region33: #{cnn_forward.1} parent=1 // pred_fallthru
      _
    // Predicated region
    $region34: #{cnn_forward.1} parent=1 // pred_check
      _
    $region35: #{cnn_forward.1} parent=1 // pred_check_branch
      %34 = sbr.rel (0) target = $region37
    $region36: #{cnn_forward.1} parent=1 // pred_region
      _
    $region37: #{cnn_forward.1} parent=1 // pred_fallthru
      _
    // Predicated region
    $region38: #{cnn_forward.1} parent=1 // pred_check
      _
    $region39: #{cnn_forward.1} parent=1 // pred_check_branch
      %36 = sbr.rel (0) target = $region41
    $region40: #{cnn_forward.1} parent=1 // pred_region
      _
    $region41: #{cnn_forward.1} parent=1 // pred_fallthru
      _
    // Predicated region
    $region42: #{cnn_forward.1} parent=1 // pred_check
      _
    $region43: #{cnn_forward.1} parent=1 // pred_check_branch
      %38 = sbr.rel (0) target = $region45
    $region44: #{cnn_forward.1} parent=1 // pred_region
      _
    $region45: #{cnn_forward.1} parent=1 // pred_fallthru
      _
    %v40 = vld [vmem:[%s0] sm:$0xff]
    %v41 = vld [vmem:[%s0 + $0x8] sm:$0xf]
    %v42 = vld [vmem:[%s1] sm:$0xf]
    %s43 = scalar_lea.vmem %s1, 4
    %v44 = vld [vmem:[%s43] sm:$0xf]
    %v47 = vcombine.high %v40, %v40
    %v49 = vunpack.c.l.s4 1983009808
    %v50 = vunpack.c.0.s8 %v49
    %v51 = vlaneseq
    %v52 = vshrl.u32 %v51, 7
    %v53 = vsub.s32 %v50, %v52
    %v54 = vrot.slane %v40, %v53
    %v56 = vunpack.c.l.s4 1983009808
    %v57 = vunpack.c.0.s8 %v56
    %v58 = vlaneseq
    %v59 = vshrl.u32 %v58, 7
    %v60 = vsub.s32 %v57, %v59
    %v61 = vrot.slane %v47, %v60
    %v62 = vcombine.high %v54, %v54
    %v63 = vcombine.high %v61, %v61
    %v65 = vunpack.c.l.s4 1983009808
    %v66 = vunpack.c.0.s8 %v65
    %v67 = vlaneseq
    %v68 = vshrl.u32 %v67, 7
    %v69 = vsub.s32 %v66, %v68
    %v70 = vrot.slane %v41, %v69
    %v71 = vcombine.high %v70, %v70
    %72 = vrot.lane.b32.xlu0 %v54, 127
    %v73 = vpop.permute.xlu0 %72
    %74 = vrot.lane.b32.xlu0 %v62, 127
    %v75 = vpop.permute.xlu0 %74
    %76 = vrot.lane.b32.xlu0 %v61, 127
    %v77 = vpop.permute.xlu0 %76
    %78 = vrot.lane.b32.xlu0 %v63, 127
    %v79 = vpop.permute.xlu0 %78
    %80 = vrot.lane.b32.xlu0 %v70, 127
    %v81 = vpop.permute.xlu0 %80
    %82 = vrot.lane.b32.xlu0 %v71, 127
    %v83 = vpop.permute.xlu0 %82
    %vm84 = vcmask 1039360
    %v85 = vsel %vm84, %v73, %v75
    %v86 = vsel %vm84, %v75, %v77
    %v87 = vsel %vm84, %v77, %v79
    %v88 = vsel %vm84, %v79, %v81
    %v89 = vsel %vm84, %v81, %v83
    %vm90 = vcmask 31744
    %v92 = vsel %vm90, %v44, 0
    %vm94 = vcmask 1041408
    %v96 = vsel %vm94, %v85, 0
    %v99 = vsel %vm94, %v86, 0
    %v102 = vsel %vm94, %v87, 0
    %v105 = vsel %vm94, %v88, 0
    %v108 = vsel %vm94, %v89, 0
    %v111 = vsel %vm94, %v83, 0
    %113 = vmatprep.subr.bf16.mxu0 0
    %114 = vmatpush1.bf16.msra.mxu0 0
    %115 = vmatprep.subr.bf16.mxu0 0
    %116 = vmatpush1.bf16.msra.mxu0 0
    %117 = vmatprep.subr.bf16.mxu0 0
    %118 = vmatpush1.bf16.msra.mxu0 0
    %119 = vmatprep.subr.bf16.mxu0 0
    %120 = vmatpush1.bf16.msra.mxu0 0
    %121 = vmatprep.subr.bf16.mxu0 0
    %122 = vmatpush1.bf16.msra.mxu0 0
    %123 = vmatprep.subr.bf16.mxu0 0
    %124 = vmatpush1.bf16.msra.mxu0 0
    %125 = vmatprep.subr.bf16.mxu0 0
    %126 = vmatpush1.bf16.msra.mxu0 0
    %127 = vmatprep.subr.bf16.mxu0 %v99
    %128 = vmatpush1.bf16.msra.mxu0 %v96
    %129 = vmatprep.subr.bf16.mxu0 0
    %130 = vmatpush2.bf16.msra.mxu0 0
    %131 = vmatprep.subr.bf16.mxu0 0
    %132 = vmatpush2.bf16.msra.mxu0 0
    %133 = vmatprep.subr.bf16.mxu0 0
    %134 = vmatpush2.bf16.msra.mxu0 0
    %135 = vmatprep.subr.bf16.mxu0 0
    %136 = vmatpush2.bf16.msra.mxu0 0
    %137 = vmatprep.subr.bf16.mxu0 0
    %138 = vmatpush2.bf16.msra.mxu0 0
    %139 = vmatprep.subr.bf16.mxu0 0
    %140 = vmatpush2.bf16.msra.mxu0 0
    %141 = vmatprep.subr.bf16.mxu0 0
    %142 = vmatpush2.bf16.msra.mxu0 0
    %143 = vmatprep.subr.bf16.mxu0 0
    %144 = vmatpush2.bf16.msra.mxu0 0
    %145 = vmatprep.mubr.bf16.mxu0 0
    %146 = vmatmul.mubr.bf16.gmra.mxu0 %v92
    %v147 = vpop.f32.mrf.mxu0
    %v148 = vadd.f32 0.0, %v147
    %v149 = vpop.f32.mrf.mxu0
    %v150 = vadd.f32 0.0, %v149
    %v151 = vpop.f32.mrf.mxu0
    %v152 = vpop.f32.mrf.mxu0
    %153 = vdwg.mxu0
    %154 = vmatprep.subr.bf16.mxu0 0
    %155 = vmatpush1.bf16.msra.mxu0 0
    %156 = vmatprep.subr.bf16.mxu0 0
    %157 = vmatpush1.bf16.msra.mxu0 0
    %158 = vmatprep.subr.bf16.mxu0 0
    %159 = vmatpush1.bf16.msra.mxu0 0
    %160 = vmatprep.subr.bf16.mxu0 0
    %161 = vmatpush1.bf16.msra.mxu0 0
    %162 = vmatprep.subr.bf16.mxu0 0
    %163 = vmatpush1.bf16.msra.mxu0 0
    %164 = vmatprep.subr.bf16.mxu0 0
    %165 = vmatpush1.bf16.msra.mxu0 0
    %166 = vmatprep.subr.bf16.mxu0 0
    %167 = vmatpush1.bf16.msra.mxu0 0
    %168 = vmatprep.subr.bf16.mxu0 %v105
    %169 = vmatpush1.bf16.msra.mxu0 %v102
    %170 = vmatprep.subr.bf16.mxu0 0
    %171 = vmatpush2.bf16.msra.mxu0 0
    %172 = vmatprep.subr.bf16.mxu0 0
    %173 = vmatpush2.bf16.msra.mxu0 0
    %174 = vmatprep.subr.bf16.mxu0 0
    %175 = vmatpush2.bf16.msra.mxu0 0
    %176 = vmatprep.subr.bf16.mxu0 0
    %177 = vmatpush2.bf16.msra.mxu0 0
    %178 = vmatprep.subr.bf16.mxu0 0
    %179 = vmatpush2.bf16.msra.mxu0 0
    %180 = vmatprep.subr.bf16.mxu0 0
    %181 = vmatpush2.bf16.msra.mxu0 0
    %182 = vmatprep.subr.bf16.mxu0 0
    %183 = vmatpush2.bf16.msra.mxu0 0
    %184 = vmatprep.subr.bf16.mxu0 0
    %185 = vmatpush2.bf16.msra.mxu0 0
    %186 = vmatprep.mubr.bf16.mxu0 0
    %187 = vmatmul.mubr.bf16.gmra.mxu0 %v92
    %v188 = vpop.f32.mrf.mxu0
    %v189 = vadd.f32 0.0, %v188
    %v190 = vpop.f32.mrf.mxu0
    %v191 = vadd.f32 0.0, %v190
    %v192 = vpop.f32.mrf.mxu0
    %v193 = vpop.f32.mrf.mxu0
    %194 = vdwg.mxu0
    %195 = vmatprep.subr.bf16.mxu0 0
    %196 = vmatpush1.bf16.msra.mxu0 0
    %197 = vmatprep.subr.bf16.mxu0 0
    %198 = vmatpush1.bf16.msra.mxu0 0
    %199 = vmatprep.subr.bf16.mxu0 0
    %200 = vmatpush1.bf16.msra.mxu0 0
    %201 = vmatprep.subr.bf16.mxu0 0
    %202 = vmatpush1.bf16.msra.mxu0 0
    %203 = vmatprep.subr.bf16.mxu0 0
    %204 = vmatpush1.bf16.msra.mxu0 0
    %205 = vmatprep.subr.bf16.mxu0 0
    %206 = vmatpush1.bf16.msra.mxu0 0
    %207 = vmatprep.subr.bf16.mxu0 0
    %208 = vmatpush1.bf16.msra.mxu0 0
    %209 = vmatprep.subr.bf16.mxu0 %v111
    %210 = vmatpush1.bf16.msra.mxu0 %v108
    %211 = vmatprep.subr.bf16.mxu0 0
    %212 = vmatpush2.bf16.msra.mxu0 0
    %213 = vmatprep.subr.bf16.mxu0 0
    %214 = vmatpush2.bf16.msra.mxu0 0
    %215 = vmatprep.subr.bf16.mxu0 0
    %216 = vmatpush2.bf16.msra.mxu0 0
    %217 = vmatprep.subr.bf16.mxu0 0
    %218 = vmatpush2.bf16.msra.mxu0 0
    %219 = vmatprep.subr.bf16.mxu0 0
    %220 = vmatpush2.bf16.msra.mxu0 0
    %221 = vmatprep.subr.bf16.mxu0 0
    %222 = vmatpush2.bf16.msra.mxu0 0
    %223 = vmatprep.subr.bf16.mxu0 0
    %224 = vmatpush2.bf16.msra.mxu0 0
    %225 = vmatprep.subr.bf16.mxu0 0
    %226 = vmatpush2.bf16.msra.mxu0 0
    %227 = vmatprep.mubr.bf16.mxu0 0
    %228 = vmatmul.mubr.bf16.gmra.mxu0 %v92
    %v229 = vpop.f32.mrf.mxu0
    %v230 = vadd.f32 0.0, %v229
    %v231 = vpop.f32.mrf.mxu0
    %v232 = vadd.f32 0.0, %v231
    %v233 = vpop.f32.mrf.mxu0
    %v234 = vpop.f32.mrf.mxu0
    %235 = vdwg.mxu0
    %v237 = vsel %vm90, %v42, 0
    %v240 = vsel %vm94, %v54, 0
    %v243 = vsel %vm94, %v62, 0
    %v246 = vsel %vm94, %v61, 0
    %v249 = vsel %vm94, %v63, 0
    %v252 = vsel %vm94, %v70, 0
    %v255 = vsel %vm94, %v71, 0
    %257 = vmatprep.subr.bf16.mxu0 0
    %258 = vmatpush1.bf16.msra.mxu0 0
    %259 = vmatprep.subr.bf16.mxu0 0
    %260 = vmatpush1.bf16.msra.mxu0 0
    %261 = vmatprep.subr.bf16.mxu0 0
    %262 = vmatpush1.bf16.msra.mxu0 0
    %263 = vmatprep.subr.bf16.mxu0 0
    %264 = vmatpush1.bf16.msra.mxu0 0
    %265 = vmatprep.subr.bf16.mxu0 0
    %266 = vmatpush1.bf16.msra.mxu0 0
    %267 = vmatprep.subr.bf16.mxu0 0
    %268 = vmatpush1.bf16.msra.mxu0 0
    %269 = vmatprep.subr.bf16.mxu0 0
    %270 = vmatpush1.bf16.msra.mxu0 0
    %271 = vmatprep.subr.bf16.mxu0 %v243
    %272 = vmatpush1.bf16.msra.mxu0 %v240
    %273 = vmatprep.subr.bf16.mxu0 0
    %274 = vmatpush2.bf16.msra.mxu0 0
    %275 = vmatprep.subr.bf16.mxu0 0
    %276 = vmatpush2.bf16.msra.mxu0 0
    %277 = vmatprep.subr.bf16.mxu0 0
    %278 = vmatpush2.bf16.msra.mxu0 0
    %279 = vmatprep.subr.bf16.mxu0 0
    %280 = vmatpush2.bf16.msra.mxu0 0
    %281 = vmatprep.subr.bf16.mxu0 0
    %282 = vmatpush2.bf16.msra.mxu0 0
    %283 = vmatprep.subr.bf16.mxu0 0
    %284 = vmatpush2.bf16.msra.mxu0 0
    %285 = vmatprep.subr.bf16.mxu0 0
    %286 = vmatpush2.bf16.msra.mxu0 0
    %287 = vmatprep.subr.bf16.mxu0 0
    %288 = vmatpush2.bf16.msra.mxu0 0
    %289 = vmatprep.mubr.bf16.mxu0 0
    %290 = vmatmul.mubr.bf16.gmra.mxu0 %v237
    %v291 = vpop.f32.mrf.mxu0
    %v292 = vadd.f32 %v148, %v291
    %v293 = vpop.f32.mrf.mxu0
    %v294 = vadd.f32 %v150, %v293
    %v295 = vpop.f32.mrf.mxu0
    %v296 = vpop.f32.mrf.mxu0
    %297 = vdwg.mxu0
    %298 = vmatprep.subr.bf16.mxu0 0
    %299 = vmatpush1.bf16.msra.mxu0 0
    %300 = vmatprep.subr.bf16.mxu0 0
    %301 = vmatpush1.bf16.msra.mxu0 0
    %302 = vmatprep.subr.bf16.mxu0 0
    %303 = vmatpush1.bf16.msra.mxu0 0
    %304 = vmatprep.subr.bf16.mxu0 0
    %305 = vmatpush1.bf16.msra.mxu0 0
    %306 = vmatprep.subr.bf16.mxu0 0
    %307 = vmatpush1.bf16.msra.mxu0 0
    %308 = vmatprep.subr.bf16.mxu0 0
    %309 = vmatpush1.bf16.msra.mxu0 0
    %310 = vmatprep.subr.bf16.mxu0 0
    %311 = vmatpush1.bf16.msra.mxu0 0
    %312 = vmatprep.subr.bf16.mxu0 %v249
    %313 = vmatpush1.bf16.msra.mxu0 %v246
    %314 = vmatprep.subr.bf16.mxu0 0
    %315 = vmatpush2.bf16.msra.mxu0 0
    %316 = vmatprep.subr.bf16.mxu0 0
    %317 = vmatpush2.bf16.msra.mxu0 0
    %318 = vmatprep.subr.bf16.mxu0 0
    %319 = vmatpush2.bf16.msra.mxu0 0
    %320 = vmatprep.subr.bf16.mxu0 0
    %321 = vmatpush2.bf16.msra.mxu0 0
    %322 = vmatprep.subr.bf16.mxu0 0
    %323 = vmatpush2.bf16.msra.mxu0 0
    %324 = vmatprep.subr.bf16.mxu0 0
    %325 = vmatpush2.bf16.msra.mxu0 0
    %326 = vmatprep.subr.bf16.mxu0 0
    %327 = vmatpush2.bf16.msra.mxu0 0
    %328 = vmatprep.subr.bf16.mxu0 0
    %329 = vmatpush2.bf16.msra.mxu0 0
    %330 = vmatprep.mubr.bf16.mxu0 0
    %331 = vmatmul.mubr.bf16.gmra.mxu0 %v237
    %v332 = vpop.f32.mrf.mxu0
    %v333 = vadd.f32 %v189, %v332
    %v334 = vpop.f32.mrf.mxu0
    %v335 = vadd.f32 %v191, %v334
    %v336 = vpop.f32.mrf.mxu0
    %v337 = vpop.f32.mrf.mxu0
    %338 = vdwg.mxu0
    %339 = vmatprep.subr.bf16.mxu0 0
    %340 = vmatpush1.bf16.msra.mxu0 0
    %341 = vmatprep.subr.bf16.mxu0 0
    %342 = vmatpush1.bf16.msra.mxu0 0
    %343 = vmatprep.subr.bf16.mxu0 0
    %344 = vmatpush1.bf16.msra.mxu0 0
    %345 = vmatprep.subr.bf16.mxu0 0
    %346 = vmatpush1.bf16.msra.mxu0 0
    %347 = vmatprep.subr.bf16.mxu0 0
    %348 = vmatpush1.bf16.msra.mxu0 0
    %349 = vmatprep.subr.bf16.mxu0 0
    %350 = vmatpush1.bf16.msra.mxu0 0
    %351 = vmatprep.subr.bf16.mxu0 0
    %352 = vmatpush1.bf16.msra.mxu0 0
    %353 = vmatprep.subr.bf16.mxu0 %v255
    %354 = vmatpush1.bf16.msra.mxu0 %v252
    %355 = vmatprep.subr.bf16.mxu0 0
    %356 = vmatpush2.bf16.msra.mxu0 0
    %357 = vmatprep.subr.bf16.mxu0 0
    %358 = vmatpush2.bf16.msra.mxu0 0
    %359 = vmatprep.subr.bf16.mxu0 0
    %360 = vmatpush2.bf16.msra.mxu0 0
    %361 = vmatprep.subr.bf16.mxu0 0
    %362 = vmatpush2.bf16.msra.mxu0 0
    %363 = vmatprep.subr.bf16.mxu0 0
    %364 = vmatpush2.bf16.msra.mxu0 0
    %365 = vmatprep.subr.bf16.mxu0 0
    %366 = vmatpush2.bf16.msra.mxu0 0
    %367 = vmatprep.subr.bf16.mxu0 0
    %368 = vmatpush2.bf16.msra.mxu0 0
    %369 = vmatprep.subr.bf16.mxu0 0
    %370 = vmatpush2.bf16.msra.mxu0 0
    %371 = vmatprep.mubr.bf16.mxu0 0
    %372 = vmatmul.mubr.bf16.gmra.mxu0 %v237
    %v373 = vpop.f32.mrf.mxu0
    %v374 = vadd.f32 %v230, %v373
    %v375 = vpop.f32.mrf.mxu0
    %v376 = vadd.f32 %v232, %v375
    %v377 = vpop.f32.mrf.mxu0
    %v378 = vpop.f32.mrf.mxu0
    %379 = vdwg.mxu0
    %s380 = scalar_lea.vmem %s1, 8
    %v381 = vld [vmem:[%s380] sm:$0xf]
    %382 = vrot.lane.b32.xlu0 %v54, 126
    %v383 = vpop.permute.xlu0 %382
    %384 = vrot.lane.b32.xlu0 %v62, 126
    %v385 = vpop.permute.xlu0 %384
    %386 = vrot.lane.b32.xlu0 %v61, 126
    %v387 = vpop.permute.xlu0 %386
    %388 = vrot.lane.b32.xlu0 %v63, 126
    %v389 = vpop.permute.xlu0 %388
    %390 = vrot.lane.b32.xlu0 %v70, 126
    %v391 = vpop.permute.xlu0 %390
    %392 = vrot.lane.b32.xlu0 %v71, 126
    %v393 = vpop.permute.xlu0 %392
    %vm394 = vcmask 1031168
    %v395 = vsel %vm394, %v383, %v385
    %v396 = vsel %vm394, %v385, %v387
    %v397 = vsel %vm394, %v387, %v389
    %v398 = vsel %vm394, %v389, %v391
    %v399 = vsel %vm394, %v391, %v393
    %v401 = vsel %vm90, %v381, 0
    %v404 = vsel %vm94, %v395, 0
    %v407 = vsel %vm94, %v396, 0
    %v410 = vsel %vm94, %v397, 0
    %v413 = vsel %vm94, %v398, 0
    %v416 = vsel %vm94, %v399, 0
    %v419 = vsel %vm94, %v393, 0
    %421 = vmatprep.subr.bf16.mxu0 0
    %422 = vmatpush1.bf16.msra.mxu0 0
    %423 = vmatprep.subr.bf16.mxu0 0
    %424 = vmatpush1.bf16.msra.mxu0 0
    %425 = vmatprep.subr.bf16.mxu0 0
    %426 = vmatpush1.bf16.msra.mxu0 0
    %427 = vmatprep.subr.bf16.mxu0 0
    %428 = vmatpush1.bf16.msra.mxu0 0
    %429 = vmatprep.subr.bf16.mxu0 0
    %430 = vmatpush1.bf16.msra.mxu0 0
    %431 = vmatprep.subr.bf16.mxu0 0
    %432 = vmatpush1.bf16.msra.mxu0 0
    %433 = vmatprep.subr.bf16.mxu0 0
    %434 = vmatpush1.bf16.msra.mxu0 0
    %435 = vmatprep.subr.bf16.mxu0 %v407
    %436 = vmatpush1.bf16.msra.mxu0 %v404
    %437 = vmatprep.subr.bf16.mxu0 0
    %438 = vmatpush2.bf16.msra.mxu0 0
    %439 = vmatprep.subr.bf16.mxu0 0
    %440 = vmatpush2.bf16.msra.mxu0 0
    %441 = vmatprep.subr.bf16.mxu0 0
    %442 = vmatpush2.bf16.msra.mxu0 0
    %443 = vmatprep.subr.bf16.mxu0 0
    %444 = vmatpush2.bf16.msra.mxu0 0
    %445 = vmatprep.subr.bf16.mxu0 0
    %446 = vmatpush2.bf16.msra.mxu0 0
    %447 = vmatprep.subr.bf16.mxu0 0
    %448 = vmatpush2.bf16.msra.mxu0 0
    %449 = vmatprep.subr.bf16.mxu0 0
    %450 = vmatpush2.bf16.msra.mxu0 0
    %451 = vmatprep.subr.bf16.mxu0 0
    %452 = vmatpush2.bf16.msra.mxu0 0
    %453 = vmatprep.mubr.bf16.mxu0 0
    %454 = vmatmul.mubr.bf16.gmra.mxu0 %v401
    %v455 = vpop.f32.mrf.mxu0
    %v456 = vadd.f32 0.0, %v455
    %v457 = vpop.f32.mrf.mxu0
    %v458 = vadd.f32 0.0, %v457
    %v459 = vpop.f32.mrf.mxu0
    %v460 = vpop.f32.mrf.mxu0
    %461 = vdwg.mxu0
    %462 = vmatprep.subr.bf16.mxu0 0
    %463 = vmatpush1.bf16.msra.mxu0 0
    %464 = vmatprep.subr.bf16.mxu0 0
    %465 = vmatpush1.bf16.msra.mxu0 0
    %466 = vmatprep.subr.bf16.mxu0 0
    %467 = vmatpush1.bf16.msra.mxu0 0
    %468 = vmatprep.subr.bf16.mxu0 0
    %469 = vmatpush1.bf16.msra.mxu0 0
    %470 = vmatprep.subr.bf16.mxu0 0
    %471 = vmatpush1.bf16.msra.mxu0 0
    %472 = vmatprep.subr.bf16.mxu0 0
    %473 = vmatpush1.bf16.msra.mxu0 0
    %474 = vmatprep.subr.bf16.mxu0 0
    %475 = vmatpush1.bf16.msra.mxu0 0
    %476 = vmatprep.subr.bf16.mxu0 %v413
    %477 = vmatpush1.bf16.msra.mxu0 %v410
    %478 = vmatprep.subr.bf16.mxu0 0
    %479 = vmatpush2.bf16.msra.mxu0 0
    %480 = vmatprep.subr.bf16.mxu0 0
    %481 = vmatpush2.bf16.msra.mxu0 0
    %482 = vmatprep.subr.bf16.mxu0 0
    %483 = vmatpush2.bf16.msra.mxu0 0
    %484 = vmatprep.subr.bf16.mxu0 0
    %485 = vmatpush2.bf16.msra.mxu0 0
    %486 = vmatprep.subr.bf16.mxu0 0
    %487 = vmatpush2.bf16.msra.mxu0 0
    %488 = vmatprep.subr.bf16.mxu0 0
    %489 = vmatpush2.bf16.msra.mxu0 0
    %490 = vmatprep.subr.bf16.mxu0 0
    %491 = vmatpush2.bf16.msra.mxu0 0
    %492 = vmatprep.subr.bf16.mxu0 0
    %493 = vmatpush2.bf16.msra.mxu0 0
    %494 = vmatprep.mubr.bf16.mxu0 0
    %495 = vmatmul.mubr.bf16.gmra.mxu0 %v401
    %v496 = vpop.f32.mrf.mxu0
    %v497 = vadd.f32 0.0, %v496
    %v498 = vpop.f32.mrf.mxu0
    %v499 = vadd.f32 0.0, %v498
    %v500 = vpop.f32.mrf.mxu0
    %v501 = vpop.f32.mrf.mxu0
    %502 = vdwg.mxu0
    %503 = vmatprep.subr.bf16.mxu0 0
    %504 = vmatpush1.bf16.msra.mxu0 0
    %505 = vmatprep.subr.bf16.mxu0 0
    %506 = vmatpush1.bf16.msra.mxu0 0
    %507 = vmatprep.subr.bf16.mxu0 0
    %508 = vmatpush1.bf16.msra.mxu0 0
    %509 = vmatprep.subr.bf16.mxu0 0
    %510 = vmatpush1.bf16.msra.mxu0 0
    %511 = vmatprep.subr.bf16.mxu0 0
    %512 = vmatpush1.bf16.msra.mxu0 0
    %513 = vmatprep.subr.bf16.mxu0 0
    %514 = vmatpush1.bf16.msra.mxu0 0
    %515 = vmatprep.subr.bf16.mxu0 0
    %516 = vmatpush1.bf16.msra.mxu0 0
    %517 = vmatprep.subr.bf16.mxu0 %v419
    %518 = vmatpush1.bf16.msra.mxu0 %v416
    %519 = vmatprep.subr.bf16.mxu0 0
    %520 = vmatpush2.bf16.msra.mxu0 0
    %521 = vmatprep.subr.bf16.mxu0 0
    %522 = vmatpush2.bf16.msra.mxu0 0
    %523 = vmatprep.subr.bf16.mxu0 0
    %524 = vmatpush2.bf16.msra.mxu0 0
    %525 = vmatprep.subr.bf16.mxu0 0
    %526 = vmatpush2.bf16.msra.mxu0 0
    %527 = vmatprep.subr.bf16.mxu0 0
    %528 = vmatpush2.bf16.msra.mxu0 0
    %529 = vmatprep.subr.bf16.mxu0 0
    %530 = vmatpush2.bf16.msra.mxu0 0
    %531 = vmatprep.subr.bf16.mxu0 0
    %532 = vmatpush2.bf16.msra.mxu0 0
    %533 = vmatprep.subr.bf16.mxu0 0
    %534 = vmatpush2.bf16.msra.mxu0 0
    %535 = vmatprep.mubr.bf16.mxu0 0
    %536 = vmatmul.mubr.bf16.gmra.mxu0 %v401
    %v537 = vpop.f32.mrf.mxu0
    %v538 = vadd.f32 0.0, %v537
    %v539 = vpop.f32.mrf.mxu0
    %v540 = vadd.f32 0.0, %v539
    %v541 = vpop.f32.mrf.mxu0
    %v542 = vpop.f32.mrf.mxu0
    %543 = vdwg.mxu0
    %v544 = vadd.f32 %v292, %v456
    %v545 = vadd.f32 %v294, %v458
    %v546 = vadd.f32 %v333, %v497
    %v547 = vadd.f32 %v335, %v499
    %v548 = vadd.f32 %v374, %v538
    %v549 = vadd.f32 %v376, %v540
    %s550 = scalar_lea.vmem %s1, 12
    %v551 = vld [vmem:[%s550] sm:$0xf]
    %552 = vrot.lane.b32.xlu0 %v54, 110
    %v553 = vpop.permute.xlu0 %552
    %554 = vrot.lane.b32.xlu0 %v62, 110
    %v555 = vpop.permute.xlu0 %554
    %556 = vrot.lane.b32.xlu0 %v61, 110
    %v557 = vpop.permute.xlu0 %556
    %558 = vrot.lane.b32.xlu0 %v63, 110
    %v559 = vpop.permute.xlu0 %558
    %560 = vrot.lane.b32.xlu0 %v70, 110
    %v561 = vpop.permute.xlu0 %560
    %562 = vrot.lane.b32.xlu0 %v71, 110
    %v563 = vpop.permute.xlu0 %562
    %vm564 = vcmask 900096
    %v565 = vsel %vm564, %v553, %v555
    %v566 = vsel %vm564, %v555, %v557
    %v567 = vsel %vm564, %v557, %v559
    %v568 = vsel %vm564, %v559, %v561
    %v569 = vsel %vm564, %v561, %v563
    %v571 = vsel %vm90, %v551, 0
    %v574 = vsel %vm94, %v565, 0
    %v577 = vsel %vm94, %v566, 0
    %v580 = vsel %vm94, %v567, 0
    %v583 = vsel %vm94, %v568, 0
    %v586 = vsel %vm94, %v569, 0
    %v589 = vsel %vm94, %v563, 0
    %591 = vmatprep.subr.bf16.mxu0 0
    %592 = vmatpush1.bf16.msra.mxu0 0
    %593 = vmatprep.subr.bf16.mxu0 0
    %594 = vmatpush1.bf16.msra.mxu0 0
    %595 = vmatprep.subr.bf16.mxu0 0
    %596 = vmatpush1.bf16.msra.mxu0 0
    %597 = vmatprep.subr.bf16.mxu0 0
    %598 = vmatpush1.bf16.msra.mxu0 0
    %599 = vmatprep.subr.bf16.mxu0 0
    %600 = vmatpush1.bf16.msra.mxu0 0
    %601 = vmatprep.subr.bf16.mxu0 0
    %602 = vmatpush1.bf16.msra.mxu0 0
    %603 = vmatprep.subr.bf16.mxu0 0
    %604 = vmatpush1.bf16.msra.mxu0 0
    %605 = vmatprep.subr.bf16.mxu0 %v577
    %606 = vmatpush1.bf16.msra.mxu0 %v574
    %607 = vmatprep.subr.bf16.mxu0 0
    %608 = vmatpush2.bf16.msra.mxu0 0
    %609 = vmatprep.subr.bf16.mxu0 0
    %610 = vmatpush2.bf16.msra.mxu0 0
    %611 = vmatprep.subr.bf16.mxu0 0
    %612 = vmatpush2.bf16.msra.mxu0 0
    %613 = vmatprep.subr.bf16.mxu0 0
    %614 = vmatpush2.bf16.msra.mxu0 0
    %615 = vmatprep.subr.bf16.mxu0 0
    %616 = vmatpush2.bf16.msra.mxu0 0
    %617 = vmatprep.subr.bf16.mxu0 0
    %618 = vmatpush2.bf16.msra.mxu0 0
    %619 = vmatprep.subr.bf16.mxu0 0
    %620 = vmatpush2.bf16.msra.mxu0 0
    %621 = vmatprep.subr.bf16.mxu0 0
    %622 = vmatpush2.bf16.msra.mxu0 0
    %623 = vmatprep.mubr.bf16.mxu0 0
    %624 = vmatmul.mubr.bf16.gmra.mxu0 %v571
    %v625 = vpop.f32.mrf.mxu0
    %v626 = vadd.f32 0.0, %v625
    %v627 = vpop.f32.mrf.mxu0
    %v628 = vadd.f32 0.0, %v627
    %v629 = vpop.f32.mrf.mxu0
    %v630 = vpop.f32.mrf.mxu0
    %631 = vdwg.mxu0
    %632 = vmatprep.subr.bf16.mxu0 0
    %633 = vmatpush1.bf16.msra.mxu0 0
    %634 = vmatprep.subr.bf16.mxu0 0
    %635 = vmatpush1.bf16.msra.mxu0 0
    %636 = vmatprep.subr.bf16.mxu0 0
    %637 = vmatpush1.bf16.msra.mxu0 0
    %638 = vmatprep.subr.bf16.mxu0 0
    %639 = vmatpush1.bf16.msra.mxu0 0
    %640 = vmatprep.subr.bf16.mxu0 0
    %641 = vmatpush1.bf16.msra.mxu0 0
    %642 = vmatprep.subr.bf16.mxu0 0
    %643 = vmatpush1.bf16.msra.mxu0 0
    %644 = vmatprep.subr.bf16.mxu0 0
    %645 = vmatpush1.bf16.msra.mxu0 0
    %646 = vmatprep.subr.bf16.mxu0 %v583
    %647 = vmatpush1.bf16.msra.mxu0 %v580
    %648 = vmatprep.subr.bf16.mxu0 0
    %649 = vmatpush2.bf16.msra.mxu0 0
    %650 = vmatprep.subr.bf16.mxu0 0
    %651 = vmatpush2.bf16.msra.mxu0 0
    %652 = vmatprep.subr.bf16.mxu0 0
    %653 = vmatpush2.bf16.msra.mxu0 0
    %654 = vmatprep.subr.bf16.mxu0 0
    %655 = vmatpush2.bf16.msra.mxu0 0
    %656 = vmatprep.subr.bf16.mxu0 0
    %657 = vmatpush2.bf16.msra.mxu0 0
    %658 = vmatprep.subr.bf16.mxu0 0
    %659 = vmatpush2.bf16.msra.mxu0 0
    %660 = vmatprep.subr.bf16.mxu0 0
    %661 = vmatpush2.bf16.msra.mxu0 0
    %662 = vmatprep.subr.bf16.mxu0 0
    %663 = vmatpush2.bf16.msra.mxu0 0
    %664 = vmatprep.mubr.bf16.mxu0 0
    %665 = vmatmul.mubr.bf16.gmra.mxu0 %v571
    %v666 = vpop.f32.mrf.mxu0
    %v667 = vadd.f32 0.0, %v666
    %v668 = vpop.f32.mrf.mxu0
    %v669 = vadd.f32 0.0, %v668
    %v670 = vpop.f32.mrf.mxu0
    %v671 = vpop.f32.mrf.mxu0
    %672 = vdwg.mxu0
    %673 = vmatprep.subr.bf16.mxu0 0
    %674 = vmatpush1.bf16.msra.mxu0 0
    %675 = vmatprep.subr.bf16.mxu0 0
    %676 = vmatpush1.bf16.msra.mxu0 0
    %677 = vmatprep.subr.bf16.mxu0 0
    %678 = vmatpush1.bf16.msra.mxu0 0
    %679 = vmatprep.subr.bf16.mxu0 0
    %680 = vmatpush1.bf16.msra.mxu0 0
    %681 = vmatprep.subr.bf16.mxu0 0
    %682 = vmatpush1.bf16.msra.mxu0 0
    %683 = vmatprep.subr.bf16.mxu0 0
    %684 = vmatpush1.bf16.msra.mxu0 0
    %685 = vmatprep.subr.bf16.mxu0 0
    %686 = vmatpush1.bf16.msra.mxu0 0
    %687 = vmatprep.subr.bf16.mxu0 %v589
    %688 = vmatpush1.bf16.msra.mxu0 %v586
    %689 = vmatprep.subr.bf16.mxu0 0
    %690 = vmatpush2.bf16.msra.mxu0 0
    %691 = vmatprep.subr.bf16.mxu0 0
    %692 = vmatpush2.bf16.msra.mxu0 0
    %693 = vmatprep.subr.bf16.mxu0 0
    %694 = vmatpush2.bf16.msra.mxu0 0
    %695 = vmatprep.subr.bf16.mxu0 0
    %696 = vmatpush2.bf16.msra.mxu0 0
    %697 = vmatprep.subr.bf16.mxu0 0
    %698 = vmatpush2.bf16.msra.mxu0 0
    %699 = vmatprep.subr.bf16.mxu0 0
    %700 = vmatpush2.bf16.msra.mxu0 0
    %701 = vmatprep.subr.bf16.mxu0 0
    %702 = vmatpush2.bf16.msra.mxu0 0
    %703 = vmatprep.subr.bf16.mxu0 0
    %704 = vmatpush2.bf16.msra.mxu0 0
    %705 = vmatprep.mubr.bf16.mxu0 0
    %706 = vmatmul.mubr.bf16.gmra.mxu0 %v571
    %v707 = vpop.f32.mrf.mxu0
    %v708 = vadd.f32 0.0, %v707
    %v709 = vpop.f32.mrf.mxu0
    %v710 = vadd.f32 0.0, %v709
    %v711 = vpop.f32.mrf.mxu0
    %v712 = vpop.f32.mrf.mxu0
    %713 = vdwg.mxu0
    %v714 = vadd.f32 %v544, %v626
    %v715 = vadd.f32 %v545, %v628
    %v716 = vadd.f32 %v546, %v667
    %v717 = vadd.f32 %v547, %v669
    %v718 = vadd.f32 %v548, %v708
    %v719 = vadd.f32 %v549, %v710
    %s720 = scalar_lea.vmem %s1, 16
    %v721 = vld [vmem:[%s720] sm:$0xf]
    %722 = vrot.lane.b32.xlu0 %v54, 109
    %v723 = vpop.permute.xlu0 %722
    %724 = vrot.lane.b32.xlu0 %v62, 109
    %v725 = vpop.permute.xlu0 %724
    %726 = vrot.lane.b32.xlu0 %v61, 109
    %v727 = vpop.permute.xlu0 %726
    %728 = vrot.lane.b32.xlu0 %v63, 109
    %v729 = vpop.permute.xlu0 %728
    %730 = vrot.lane.b32.xlu0 %v70, 109
    %v731 = vpop.permute.xlu0 %730
    %732 = vrot.lane.b32.xlu0 %v71, 109
    %v733 = vpop.permute.xlu0 %732
    %vm734 = vcmask 891904
    %v735 = vsel %vm734, %v723, %v725
    %v736 = vsel %vm734, %v725, %v727
    %v737 = vsel %vm734, %v727, %v729
    %v738 = vsel %vm734, %v729, %v731
    %v739 = vsel %vm734, %v731, %v733
    %v741 = vsel %vm90, %v721, 0
    %v744 = vsel %vm94, %v735, 0
    %v747 = vsel %vm94, %v736, 0
    %v750 = vsel %vm94, %v737, 0
    %v753 = vsel %vm94, %v738, 0
    %v756 = vsel %vm94, %v739, 0
    %v759 = vsel %vm94, %v733, 0
    %761 = vmatprep.subr.bf16.mxu0 0
    %762 = vmatpush1.bf16.msra.mxu0 0
    %763 = vmatprep.subr.bf16.mxu0 0
    %764 = vmatpush1.bf16.msra.mxu0 0
    %765 = vmatprep.subr.bf16.mxu0 0
    %766 = vmatpush1.bf16.msra.mxu0 0
    %767 = vmatprep.subr.bf16.mxu0 0
    %768 = vmatpush1.bf16.msra.mxu0 0
    %769 = vmatprep.subr.bf16.mxu0 0
    %770 = vmatpush1.bf16.msra.mxu0 0
    %771 = vmatprep.subr.bf16.mxu0 0
    %772 = vmatpush1.bf16.msra.mxu0 0
    %773 = vmatprep.subr.bf16.mxu0 0
    %774 = vmatpush1.bf16.msra.mxu0 0
    %775 = vmatprep.subr.bf16.mxu0 %v747
    %776 = vmatpush1.bf16.msra.mxu0 %v744
    %777 = vmatprep.subr.bf16.mxu0 0
    %778 = vmatpush2.bf16.msra.mxu0 0
    %779 = vmatprep.subr.bf16.mxu0 0
    %780 = vmatpush2.bf16.msra.mxu0 0
    %781 = vmatprep.subr.bf16.mxu0 0
    %782 = vmatpush2.bf16.msra.mxu0 0
    %783 = vmatprep.subr.bf16.mxu0 0
    %784 = vmatpush2.bf16.msra.mxu0 0
    %785 = vmatprep.subr.bf16.mxu0 0
    %786 = vmatpush2.bf16.msra.mxu0 0
    %787 = vmatprep.subr.bf16.mxu0 0
    %788 = vmatpush2.bf16.msra.mxu0 0
    %789 = vmatprep.subr.bf16.mxu0 0
    %790 = vmatpush2.bf16.msra.mxu0 0
    %791 = vmatprep.subr.bf16.mxu0 0
    %792 = vmatpush2.bf16.msra.mxu0 0
    %793 = vmatprep.mubr.bf16.mxu0 0
    %794 = vmatmul.mubr.bf16.gmra.mxu0 %v741
    %v795 = vpop.f32.mrf.mxu0
    %v796 = vadd.f32 0.0, %v795
    %v797 = vpop.f32.mrf.mxu0
    %v798 = vadd.f32 0.0, %v797
    %v799 = vpop.f32.mrf.mxu0
    %v800 = vpop.f32.mrf.mxu0
    %801 = vdwg.mxu0
    %802 = vmatprep.subr.bf16.mxu0 0
    %803 = vmatpush1.bf16.msra.mxu0 0
    %804 = vmatprep.subr.bf16.mxu0 0
    %805 = vmatpush1.bf16.msra.mxu0 0
    %806 = vmatprep.subr.bf16.mxu0 0
    %807 = vmatpush1.bf16.msra.mxu0 0
    %808 = vmatprep.subr.bf16.mxu0 0
    %809 = vmatpush1.bf16.msra.mxu0 0
    %810 = vmatprep.subr.bf16.mxu0 0
    %811 = vmatpush1.bf16.msra.mxu0 0
    %812 = vmatprep.subr.bf16.mxu0 0
    %813 = vmatpush1.bf16.msra.mxu0 0
    %814 = vmatprep.subr.bf16.mxu0 0
    %815 = vmatpush1.bf16.msra.mxu0 0
    %816 = vmatprep.subr.bf16.mxu0 %v753
    %817 = vmatpush1.bf16.msra.mxu0 %v750
    %818 = vmatprep.subr.bf16.mxu0 0
    %819 = vmatpush2.bf16.msra.mxu0 0
    %820 = vmatprep.subr.bf16.mxu0 0
    %821 = vmatpush2.bf16.msra.mxu0 0
    %822 = vmatprep.subr.bf16.mxu0 0
    %823 = vmatpush2.bf16.msra.mxu0 0
    %824 = vmatprep.subr.bf16.mxu0 0
    %825 = vmatpush2.bf16.msra.mxu0 0
    %826 = vmatprep.subr.bf16.mxu0 0
    %827 = vmatpush2.bf16.msra.mxu0 0
    %828 = vmatprep.subr.bf16.mxu0 0
    %829 = vmatpush2.bf16.msra.mxu0 0
    %830 = vmatprep.subr.bf16.mxu0 0
    %831 = vmatpush2.bf16.msra.mxu0 0
    %832 = vmatprep.subr.bf16.mxu0 0
    %833 = vmatpush2.bf16.msra.mxu0 0
    %834 = vmatprep.mubr.bf16.mxu0 0
    %835 = vmatmul.mubr.bf16.gmra.mxu0 %v741
    %v836 = vpop.f32.mrf.mxu0
    %v837 = vadd.f32 0.0, %v836
    %v838 = vpop.f32.mrf.mxu0
    %v839 = vadd.f32 0.0, %v838
    %v840 = vpop.f32.mrf.mxu0
    %v841 = vpop.f32.mrf.mxu0
    %842 = vdwg.mxu0
    %843 = vmatprep.subr.bf16.mxu0 0
    %844 = vmatpush1.bf16.msra.mxu0 0
    %845 = vmatprep.subr.bf16.mxu0 0
    %846 = vmatpush1.bf16.msra.mxu0 0
    %847 = vmatprep.subr.bf16.mxu0 0
    %848 = vmatpush1.bf16.msra.mxu0 0
    %849 = vmatprep.subr.bf16.mxu0 0
    %850 = vmatpush1.bf16.msra.mxu0 0
    %851 = vmatprep.subr.bf16.mxu0 0
    %852 = vmatpush1.bf16.msra.mxu0 0
    %853 = vmatprep.subr.bf16.mxu0 0
    %854 = vmatpush1.bf16.msra.mxu0 0
    %855 = vmatprep.subr.bf16.mxu0 0
    %856 = vmatpush1.bf16.msra.mxu0 0
    %857 = vmatprep.subr.bf16.mxu0 %v759
    %858 = vmatpush1.bf16.msra.mxu0 %v756
    %859 = vmatprep.subr.bf16.mxu0 0
    %860 = vmatpush2.bf16.msra.mxu0 0
    %861 = vmatprep.subr.bf16.mxu0 0
    %862 = vmatpush2.bf16.msra.mxu0 0
    %863 = vmatprep.subr.bf16.mxu0 0
    %864 = vmatpush2.bf16.msra.mxu0 0
    %865 = vmatprep.subr.bf16.mxu0 0
    %866 = vmatpush2.bf16.msra.mxu0 0
    %867 = vmatprep.subr.bf16.mxu0 0
    %868 = vmatpush2.bf16.msra.mxu0 0
    %869 = vmatprep.subr.bf16.mxu0 0
    %870 = vmatpush2.bf16.msra.mxu0 0
    %871 = vmatprep.subr.bf16.mxu0 0
    %872 = vmatpush2.bf16.msra.mxu0 0
    %873 = vmatprep.subr.bf16.mxu0 0
    %874 = vmatpush2.bf16.msra.mxu0 0
    %875 = vmatprep.mubr.bf16.mxu0 0
    %876 = vmatmul.mubr.bf16.gmra.mxu0 %v741
    %v877 = vpop.f32.mrf.mxu0
    %v878 = vadd.f32 0.0, %v877
    %v879 = vpop.f32.mrf.mxu0
    %v880 = vadd.f32 0.0, %v879
    %v881 = vpop.f32.mrf.mxu0
    %v882 = vpop.f32.mrf.mxu0
    %883 = vdwg.mxu0
    %v884 = vadd.f32 %v714, %v796
    %v885 = vadd.f32 %v715, %v798
    %v886 = vadd.f32 %v716, %v837
    %v887 = vadd.f32 %v717, %v839
    %v888 = vadd.f32 %v718, %v878
    %v889 = vadd.f32 %v719, %v880
    %s890 = scalar_lea.vmem %s1, 20
    %v891 = vld [vmem:[%s890] sm:$0xf]
    %892 = vrot.lane.b32.xlu0 %v54, 108
    %v893 = vpop.permute.xlu0 %892
    %894 = vrot.lane.b32.xlu0 %v62, 108
    %v895 = vpop.permute.xlu0 %894
    %896 = vrot.lane.b32.xlu0 %v61, 108
    %v897 = vpop.permute.xlu0 %896
    %898 = vrot.lane.b32.xlu0 %v63, 108
    %v899 = vpop.permute.xlu0 %898
    %900 = vrot.lane.b32.xlu0 %v70, 108
    %v901 = vpop.permute.xlu0 %900
    %902 = vrot.lane.b32.xlu0 %v71, 108
    %v903 = vpop.permute.xlu0 %902
    %vm904 = vcmask 883712
    %v905 = vsel %vm904, %v893, %v895
    %v906 = vsel %vm904, %v895, %v897
    %v907 = vsel %vm904, %v897, %v899
    %v908 = vsel %vm904, %v899, %v901
    %v909 = vsel %vm904, %v901, %v903
    %v911 = vsel %vm90, %v891, 0
    %v914 = vsel %vm94, %v905, 0
    %v917 = vsel %vm94, %v906, 0
    %v920 = vsel %vm94, %v907, 0
    %v923 = vsel %vm94, %v908, 0
    %v926 = vsel %vm94, %v909, 0
    %v929 = vsel %vm94, %v903, 0
    %931 = vmatprep.subr.bf16.mxu0 0
    %932 = vmatpush1.bf16.msra.mxu0 0
    %933 = vmatprep.subr.bf16.mxu0 0
    %934 = vmatpush1.bf16.msra.mxu0 0
    %935 = vmatprep.subr.bf16.mxu0 0
    %936 = vmatpush1.bf16.msra.mxu0 0
    %937 = vmatprep.subr.bf16.mxu0 0
    %938 = vmatpush1.bf16.msra.mxu0 0
    %939 = vmatprep.subr.bf16.mxu0 0
    %940 = vmatpush1.bf16.msra.mxu0 0
    %941 = vmatprep.subr.bf16.mxu0 0
    %942 = vmatpush1.bf16.msra.mxu0 0
    %943 = vmatprep.subr.bf16.mxu0 0
    %944 = vmatpush1.bf16.msra.mxu0 0
    %945 = vmatprep.subr.bf16.mxu0 %v917
    %946 = vmatpush1.bf16.msra.mxu0 %v914
    %947 = vmatprep.subr.bf16.mxu0 0
    %948 = vmatpush2.bf16.msra.mxu0 0
    %949 = vmatprep.subr.bf16.mxu0 0
    %950 = vmatpush2.bf16.msra.mxu0 0
    %951 = vmatprep.subr.bf16.mxu0 0
    %952 = vmatpush2.bf16.msra.mxu0 0
    %953 = vmatprep.subr.bf16.mxu0 0
    %954 = vmatpush2.bf16.msra.mxu0 0
    %955 = vmatprep.subr.bf16.mxu0 0
    %956 = vmatpush2.bf16.msra.mxu0 0
    %957 = vmatprep.subr.bf16.mxu0 0
    %958 = vmatpush2.bf16.msra.mxu0 0
    %959 = vmatprep.subr.bf16.mxu0 0
    %960 = vmatpush2.bf16.msra.mxu0 0
    %961 = vmatprep.subr.bf16.mxu0 0
    %962 = vmatpush2.bf16.msra.mxu0 0
    %963 = vmatprep.mubr.bf16.mxu0 0
    %964 = vmatmul.mubr.bf16.gmra.mxu0 %v911
    %v965 = vpop.f32.mrf.mxu0
    %v966 = vadd.f32 0.0, %v965
    %v967 = vpop.f32.mrf.mxu0
    %v968 = vadd.f32 0.0, %v967
    %v969 = vpop.f32.mrf.mxu0
    %v970 = vpop.f32.mrf.mxu0
    %971 = vdwg.mxu0
    %972 = vmatprep.subr.bf16.mxu0 0
    %973 = vmatpush1.bf16.msra.mxu0 0
    %974 = vmatprep.subr.bf16.mxu0 0
    %975 = vmatpush1.bf16.msra.mxu0 0
    %976 = vmatprep.subr.bf16.mxu0 0
    %977 = vmatpush1.bf16.msra.mxu0 0
    %978 = vmatprep.subr.bf16.mxu0 0
    %979 = vmatpush1.bf16.msra.mxu0 0
    %980 = vmatprep.subr.bf16.mxu0 0
    %981 = vmatpush1.bf16.msra.mxu0 0
    %982 = vmatprep.subr.bf16.mxu0 0
    %983 = vmatpush1.bf16.msra.mxu0 0
    %984 = vmatprep.subr.bf16.mxu0 0
    %985 = vmatpush1.bf16.msra.mxu0 0
    %986 = vmatprep.subr.bf16.mxu0 %v923
    %987 = vmatpush1.bf16.msra.mxu0 %v920
    %988 = vmatprep.subr.bf16.mxu0 0
    %989 = vmatpush2.bf16.msra.mxu0 0
    %990 = vmatprep.subr.bf16.mxu0 0
    %991 = vmatpush2.bf16.msra.mxu0 0
    %992 = vmatprep.subr.bf16.mxu0 0
    %993 = vmatpush2.bf16.msra.mxu0 0
    %994 = vmatprep.subr.bf16.mxu0 0
    %995 = vmatpush2.bf16.msra.mxu0 0
    %996 = vmatprep.subr.bf16.mxu0 0
    %997 = vmatpush2.bf16.msra.mxu0 0
    %998 = vmatprep.subr.bf16.mxu0 0
    %999 = vmatpush2.bf16.msra.mxu0 0
    %1000 = vmatprep.subr.bf16.mxu0 0
    %1001 = vmatpush2.bf16.msra.mxu0 0
    %1002 = vmatprep.subr.bf16.mxu0 0
    %1003 = vmatpush2.bf16.msra.mxu0 0
    %1004 = vmatprep.mubr.bf16.mxu0 0
    %1005 = vmatmul.mubr.bf16.gmra.mxu0 %v911
    %v1006 = vpop.f32.mrf.mxu0
    %v1007 = vadd.f32 0.0, %v1006
    %v1008 = vpop.f32.mrf.mxu0
    %v1009 = vadd.f32 0.0, %v1008
    %v1010 = vpop.f32.mrf.mxu0
    %v1011 = vpop.f32.mrf.mxu0
    %1012 = vdwg.mxu0
    %1013 = vmatprep.subr.bf16.mxu0 0
    %1014 = vmatpush1.bf16.msra.mxu0 0
    %1015 = vmatprep.subr.bf16.mxu0 0
    %1016 = vmatpush1.bf16.msra.mxu0 0
    %1017 = vmatprep.subr.bf16.mxu0 0
    %1018 = vmatpush1.bf16.msra.mxu0 0
    %1019 = vmatprep.subr.bf16.mxu0 0
    %1020 = vmatpush1.bf16.msra.mxu0 0
    %1021 = vmatprep.subr.bf16.mxu0 0
    %1022 = vmatpush1.bf16.msra.mxu0 0
    %1023 = vmatprep.subr.bf16.mxu0 0
    %1024 = vmatpush1.bf16.msra.mxu0 0
    %1025 = vmatprep.subr.bf16.mxu0 0
    %1026 = vmatpush1.bf16.msra.mxu0 0
    %1027 = vmatprep.subr.bf16.mxu0 %v929
    %1028 = vmatpush1.bf16.msra.mxu0 %v926
    %1029 = vmatprep.subr.bf16.mxu0 0
    %1030 = vmatpush2.bf16.msra.mxu0 0
    %1031 = vmatprep.subr.bf16.mxu0 0
    %1032 = vmatpush2.bf16.msra.mxu0 0
    %1033 = vmatprep.subr.bf16.mxu0 0
    %1034 = vmatpush2.bf16.msra.mxu0 0
    %1035 = vmatprep.subr.bf16.mxu0 0
    %1036 = vmatpush2.bf16.msra.mxu0 0
    %1037 = vmatprep.subr.bf16.mxu0 0
    %1038 = vmatpush2.bf16.msra.mxu0 0
    %1039 = vmatprep.subr.bf16.mxu0 0
    %1040 = vmatpush2.bf16.msra.mxu0 0
    %1041 = vmatprep.subr.bf16.mxu0 0
    %1042 = vmatpush2.bf16.msra.mxu0 0
    %1043 = vmatprep.subr.bf16.mxu0 0
    %1044 = vmatpush2.bf16.msra.mxu0 0
    %1045 = vmatprep.mubr.bf16.mxu0 0
    %1046 = vmatmul.mubr.bf16.gmra.mxu0 %v911
    %v1047 = vpop.f32.mrf.mxu0
    %v1048 = vadd.f32 0.0, %v1047
    %v1049 = vpop.f32.mrf.mxu0
    %v1050 = vadd.f32 0.0, %v1049
    %v1051 = vpop.f32.mrf.mxu0
    %v1052 = vpop.f32.mrf.mxu0
    %1053 = vdwg.mxu0
    %v1054 = vadd.f32 %v884, %v966
    %v1055 = vadd.f32 %v885, %v968
    %v1056 = vadd.f32 %v886, %v1007
    %v1057 = vadd.f32 %v887, %v1009
    %v1058 = vadd.f32 %v888, %v1048
    %v1059 = vadd.f32 %v889, %v1050
    %s1060 = scalar_lea.vmem %s1, 24
    %v1061 = vld [vmem:[%s1060] sm:$0xf]
    %1062 = vrot.lane.b32.xlu0 %v54, 92
    %v1063 = vpop.permute.xlu0 %1062
    %1064 = vrot.lane.b32.xlu0 %v62, 92
    %v1065 = vpop.permute.xlu0 %1064
    %1066 = vrot.lane.b32.xlu0 %v61, 92
    %v1067 = vpop.permute.xlu0 %1066
    %1068 = vrot.lane.b32.xlu0 %v63, 92
    %v1069 = vpop.permute.xlu0 %1068
    %1070 = vrot.lane.b32.xlu0 %v70, 92
    %v1071 = vpop.permute.xlu0 %1070
    %1072 = vrot.lane.b32.xlu0 %v71, 92
    %v1073 = vpop.permute.xlu0 %1072
    %vm1074 = vcmask 752640
    %v1075 = vsel %vm1074, %v1063, %v1065
    %v1076 = vsel %vm1074, %v1065, %v1067
    %v1077 = vsel %vm1074, %v1067, %v1069
    %v1078 = vsel %vm1074, %v1069, %v1071
    %v1079 = vsel %vm1074, %v1071, %v1073
    %v1081 = vsel %vm90, %v1061, 0
    %v1084 = vsel %vm94, %v1075, 0
    %v1087 = vsel %vm94, %v1076, 0
    %v1090 = vsel %vm94, %v1077, 0
    %v1093 = vsel %vm94, %v1078, 0
    %v1096 = vsel %vm94, %v1079, 0
    %v1099 = vsel %vm94, %v1073, 0
    %1101 = vmatprep.subr.bf16.mxu0 0
    %1102 = vmatpush1.bf16.msra.mxu0 0
    %1103 = vmatprep.subr.bf16.mxu0 0
    %1104 = vmatpush1.bf16.msra.mxu0 0
    %1105 = vmatprep.subr.bf16.mxu0 0
    %1106 = vmatpush1.bf16.msra.mxu0 0
    %1107 = vmatprep.subr.bf16.mxu0 0
    %1108 = vmatpush1.bf16.msra.mxu0 0
    %1109 = vmatprep.subr.bf16.mxu0 0
    %1110 = vmatpush1.bf16.msra.mxu0 0
    %1111 = vmatprep.subr.bf16.mxu0 0
    %1112 = vmatpush1.bf16.msra.mxu0 0
    %1113 = vmatprep.subr.bf16.mxu0 0
    %1114 = vmatpush1.bf16.msra.mxu0 0
    %1115 = vmatprep.subr.bf16.mxu0 %v1087
    %1116 = vmatpush1.bf16.msra.mxu0 %v1084
    %1117 = vmatprep.subr.bf16.mxu0 0
    %1118 = vmatpush2.bf16.msra.mxu0 0
    %1119 = vmatprep.subr.bf16.mxu0 0
    %1120 = vmatpush2.bf16.msra.mxu0 0
    %1121 = vmatprep.subr.bf16.mxu0 0
    %1122 = vmatpush2.bf16.msra.mxu0 0
    %1123 = vmatprep.subr.bf16.mxu0 0
    %1124 = vmatpush2.bf16.msra.mxu0 0
    %1125 = vmatprep.subr.bf16.mxu0 0
    %1126 = vmatpush2.bf16.msra.mxu0 0
    %1127 = vmatprep.subr.bf16.mxu0 0
    %1128 = vmatpush2.bf16.msra.mxu0 0
    %1129 = vmatprep.subr.bf16.mxu0 0
    %1130 = vmatpush2.bf16.msra.mxu0 0
    %1131 = vmatprep.subr.bf16.mxu0 0
    %1132 = vmatpush2.bf16.msra.mxu0 0
    %1133 = vmatprep.mubr.bf16.mxu0 0
    %1134 = vmatmul.mubr.bf16.gmra.mxu0 %v1081
    %v1135 = vpop.f32.mrf.mxu0
    %v1136 = vadd.f32 0.0, %v1135
    %v1137 = vpop.f32.mrf.mxu0
    %v1138 = vadd.f32 0.0, %v1137
    %v1139 = vpop.f32.mrf.mxu0
    %v1140 = vpop.f32.mrf.mxu0
    %1141 = vdwg.mxu0
    %1142 = vmatprep.subr.bf16.mxu0 0
    %1143 = vmatpush1.bf16.msra.mxu0 0
    %1144 = vmatprep.subr.bf16.mxu0 0
    %1145 = vmatpush1.bf16.msra.mxu0 0
    %1146 = vmatprep.subr.bf16.mxu0 0
    %1147 = vmatpush1.bf16.msra.mxu0 0
    %1148 = vmatprep.subr.bf16.mxu0 0
    %1149 = vmatpush1.bf16.msra.mxu0 0
    %1150 = vmatprep.subr.bf16.mxu0 0
    %1151 = vmatpush1.bf16.msra.mxu0 0
    %1152 = vmatprep.subr.bf16.mxu0 0
    %1153 = vmatpush1.bf16.msra.mxu0 0
    %1154 = vmatprep.subr.bf16.mxu0 0
    %1155 = vmatpush1.bf16.msra.mxu0 0
    %1156 = vmatprep.subr.bf16.mxu0 %v1093
    %1157 = vmatpush1.bf16.msra.mxu0 %v1090
    %1158 = vmatprep.subr.bf16.mxu0 0
    %1159 = vmatpush2.bf16.msra.mxu0 0
    %1160 = vmatprep.subr.bf16.mxu0 0
    %1161 = vmatpush2.bf16.msra.mxu0 0
    %1162 = vmatprep.subr.bf16.mxu0 0
    %1163 = vmatpush2.bf16.msra.mxu0 0
    %1164 = vmatprep.subr.bf16.mxu0 0
    %1165 = vmatpush2.bf16.msra.mxu0 0
    %1166 = vmatprep.subr.bf16.mxu0 0
    %1167 = vmatpush2.bf16.msra.mxu0 0
    %1168 = vmatprep.subr.bf16.mxu0 0
    %1169 = vmatpush2.bf16.msra.mxu0 0
    %1170 = vmatprep.subr.bf16.mxu0 0
    %1171 = vmatpush2.bf16.msra.mxu0 0
    %1172 = vmatprep.subr.bf16.mxu0 0
    %1173 = vmatpush2.bf16.msra.mxu0 0
    %1174 = vmatprep.mubr.bf16.mxu0 0
    %1175 = vmatmul.mubr.bf16.gmra.mxu0 %v1081
    %v1176 = vpop.f32.mrf.mxu0
    %v1177 = vadd.f32 0.0, %v1176
    %v1178 = vpop.f32.mrf.mxu0
    %v1179 = vadd.f32 0.0, %v1178
    %v1180 = vpop.f32.mrf.mxu0
    %v1181 = vpop.f32.mrf.mxu0
    %1182 = vdwg.mxu0
    %1183 = vmatprep.subr.bf16.mxu0 0
    %1184 = vmatpush1.bf16.msra.mxu0 0
    %1185 = vmatprep.subr.bf16.mxu0 0
    %1186 = vmatpush1.bf16.msra.mxu0 0
    %1187 = vmatprep.subr.bf16.mxu0 0
    %1188 = vmatpush1.bf16.msra.mxu0 0
    %1189 = vmatprep.subr.bf16.mxu0 0
    %1190 = vmatpush1.bf16.msra.mxu0 0
    %1191 = vmatprep.subr.bf16.mxu0 0
    %1192 = vmatpush1.bf16.msra.mxu0 0
    %1193 = vmatprep.subr.bf16.mxu0 0
    %1194 = vmatpush1.bf16.msra.mxu0 0
    %1195 = vmatprep.subr.bf16.mxu0 0
    %1196 = vmatpush1.bf16.msra.mxu0 0
    %1197 = vmatprep.subr.bf16.mxu0 %v1099
    %1198 = vmatpush1.bf16.msra.mxu0 %v1096
    %1199 = vmatprep.subr.bf16.mxu0 0
    %1200 = vmatpush2.bf16.msra.mxu0 0
    %1201 = vmatprep.subr.bf16.mxu0 0
    %1202 = vmatpush2.bf16.msra.mxu0 0
    %1203 = vmatprep.subr.bf16.mxu0 0
    %1204 = vmatpush2.bf16.msra.mxu0 0
    %1205 = vmatprep.subr.bf16.mxu0 0
    %1206 = vmatpush2.bf16.msra.mxu0 0
    %1207 = vmatprep.subr.bf16.mxu0 0
    %1208 = vmatpush2.bf16.msra.mxu0 0
    %1209 = vmatprep.subr.bf16.mxu0 0
    %1210 = vmatpush2.bf16.msra.mxu0 0
    %1211 = vmatprep.subr.bf16.mxu0 0
    %1212 = vmatpush2.bf16.msra.mxu0 0
    %1213 = vmatprep.subr.bf16.mxu0 0
    %1214 = vmatpush2.bf16.msra.mxu0 0
    %1215 = vmatprep.mubr.bf16.mxu0 0
    %1216 = vmatmul.mubr.bf16.gmra.mxu0 %v1081
    %v1217 = vpop.f32.mrf.mxu0
    %v1218 = vadd.f32 0.0, %v1217
    %v1219 = vpop.f32.mrf.mxu0
    %v1220 = vadd.f32 0.0, %v1219
    %v1221 = vpop.f32.mrf.mxu0
    %v1222 = vpop.f32.mrf.mxu0
    %1223 = vdwg.mxu0
    %v1224 = vadd.f32 %v1054, %v1136
    %v1225 = vadd.f32 %v1055, %v1138
    %v1226 = vadd.f32 %v1056, %v1177
    %v1227 = vadd.f32 %v1057, %v1179
    %v1228 = vadd.f32 %v1058, %v1218
    %v1229 = vadd.f32 %v1059, %v1220
    %s1230 = scalar_lea.vmem %s1, 28
    %v1231 = vld [vmem:[%s1230] sm:$0xf]
    %1232 = vrot.lane.b32.xlu0 %v54, 91
    %v1233 = vpop.permute.xlu0 %1232
    %1234 = vrot.lane.b32.xlu0 %v62, 91
    %v1235 = vpop.permute.xlu0 %1234
    %1236 = vrot.lane.b32.xlu0 %v61, 91
    %v1237 = vpop.permute.xlu0 %1236
    %1238 = vrot.lane.b32.xlu0 %v63, 91
    %v1239 = vpop.permute.xlu0 %1238
    %1240 = vrot.lane.b32.xlu0 %v70, 91
    %v1241 = vpop.permute.xlu0 %1240
    %1242 = vrot.lane.b32.xlu0 %v71, 91
    %v1243 = vpop.permute.xlu0 %1242
    %vm1244 = vcmask 744448
    %v1245 = vsel %vm1244, %v1233, %v1235
    %v1246 = vsel %vm1244, %v1235, %v1237
    %v1247 = vsel %vm1244, %v1237, %v1239
    %v1248 = vsel %vm1244, %v1239, %v1241
    %v1249 = vsel %vm1244, %v1241, %v1243
    %v1251 = vsel %vm90, %v1231, 0
    %v1254 = vsel %vm94, %v1245, 0
    %v1257 = vsel %vm94, %v1246, 0
    %v1260 = vsel %vm94, %v1247, 0
    %v1263 = vsel %vm94, %v1248, 0
    %v1266 = vsel %vm94, %v1249, 0
    %v1269 = vsel %vm94, %v1243, 0
    %1271 = vmatprep.subr.bf16.mxu0 0
    %1272 = vmatpush1.bf16.msra.mxu0 0
    %1273 = vmatprep.subr.bf16.mxu0 0
    %1274 = vmatpush1.bf16.msra.mxu0 0
    %1275 = vmatprep.subr.bf16.mxu0 0
    %1276 = vmatpush1.bf16.msra.mxu0 0
    %1277 = vmatprep.subr.bf16.mxu0 0
    %1278 = vmatpush1.bf16.msra.mxu0 0
    %1279 = vmatprep.subr.bf16.mxu0 0
    %1280 = vmatpush1.bf16.msra.mxu0 0
    %1281 = vmatprep.subr.bf16.mxu0 0
    %1282 = vmatpush1.bf16.msra.mxu0 0
    %1283 = vmatprep.subr.bf16.mxu0 0
    %1284 = vmatpush1.bf16.msra.mxu0 0
    %1285 = vmatprep.subr.bf16.mxu0 %v1257
    %1286 = vmatpush1.bf16.msra.mxu0 %v1254
    %1287 = vmatprep.subr.bf16.mxu0 0
    %1288 = vmatpush2.bf16.msra.mxu0 0
    %1289 = vmatprep.subr.bf16.mxu0 0
    %1290 = vmatpush2.bf16.msra.mxu0 0
    %1291 = vmatprep.subr.bf16.mxu0 0
    %1292 = vmatpush2.bf16.msra.mxu0 0
    %1293 = vmatprep.subr.bf16.mxu0 0
    %1294 = vmatpush2.bf16.msra.mxu0 0
    %1295 = vmatprep.subr.bf16.mxu0 0
    %1296 = vmatpush2.bf16.msra.mxu0 0
    %1297 = vmatprep.subr.bf16.mxu0 0
    %1298 = vmatpush2.bf16.msra.mxu0 0
    %1299 = vmatprep.subr.bf16.mxu0 0
    %1300 = vmatpush2.bf16.msra.mxu0 0
    %1301 = vmatprep.subr.bf16.mxu0 0
    %1302 = vmatpush2.bf16.msra.mxu0 0
    %1303 = vmatprep.mubr.bf16.mxu0 0
    %1304 = vmatmul.mubr.bf16.gmra.mxu0 %v1251
    %v1305 = vpop.f32.mrf.mxu0
    %v1306 = vadd.f32 0.0, %v1305
    %v1307 = vpop.f32.mrf.mxu0
    %v1308 = vadd.f32 0.0, %v1307
    %v1309 = vpop.f32.mrf.mxu0
    %v1310 = vpop.f32.mrf.mxu0
    %1311 = vdwg.mxu0
    %1312 = vmatprep.subr.bf16.mxu0 0
    %1313 = vmatpush1.bf16.msra.mxu0 0
    %1314 = vmatprep.subr.bf16.mxu0 0
    %1315 = vmatpush1.bf16.msra.mxu0 0
    %1316 = vmatprep.subr.bf16.mxu0 0
    %1317 = vmatpush1.bf16.msra.mxu0 0
    %1318 = vmatprep.subr.bf16.mxu0 0
    %1319 = vmatpush1.bf16.msra.mxu0 0
    %1320 = vmatprep.subr.bf16.mxu0 0
    %1321 = vmatpush1.bf16.msra.mxu0 0
    %1322 = vmatprep.subr.bf16.mxu0 0
    %1323 = vmatpush1.bf16.msra.mxu0 0
    %1324 = vmatprep.subr.bf16.mxu0 0
    %1325 = vmatpush1.bf16.msra.mxu0 0
    %1326 = vmatprep.subr.bf16.mxu0 %v1263
    %1327 = vmatpush1.bf16.msra.mxu0 %v1260
    %1328 = vmatprep.subr.bf16.mxu0 0
    %1329 = vmatpush2.bf16.msra.mxu0 0
    %1330 = vmatprep.subr.bf16.mxu0 0
    %1331 = vmatpush2.bf16.msra.mxu0 0
    %1332 = vmatprep.subr.bf16.mxu0 0
    %1333 = vmatpush2.bf16.msra.mxu0 0
    %1334 = vmatprep.subr.bf16.mxu0 0
    %1335 = vmatpush2.bf16.msra.mxu0 0
    %1336 = vmatprep.subr.bf16.mxu0 0
    %1337 = vmatpush2.bf16.msra.mxu0 0
    %1338 = vmatprep.subr.bf16.mxu0 0
    %1339 = vmatpush2.bf16.msra.mxu0 0
    %1340 = vmatprep.subr.bf16.mxu0 0
    %1341 = vmatpush2.bf16.msra.mxu0 0
    %1342 = vmatprep.subr.bf16.mxu0 0
    %1343 = vmatpush2.bf16.msra.mxu0 0
    %1344 = vmatprep.mubr.bf16.mxu0 0
    %1345 = vmatmul.mubr.bf16.gmra.mxu0 %v1251
    %v1346 = vpop.f32.mrf.mxu0
    %v1347 = vadd.f32 0.0, %v1346
    %v1348 = vpop.f32.mrf.mxu0
    %v1349 = vadd.f32 0.0, %v1348
    %v1350 = vpop.f32.mrf.mxu0
    %v1351 = vpop.f32.mrf.mxu0
    %1352 = vdwg.mxu0
    %1353 = vmatprep.subr.bf16.mxu0 0
    %1354 = vmatpush1.bf16.msra.mxu0 0
    %1355 = vmatprep.subr.bf16.mxu0 0
    %1356 = vmatpush1.bf16.msra.mxu0 0
    %1357 = vmatprep.subr.bf16.mxu0 0
    %1358 = vmatpush1.bf16.msra.mxu0 0
    %1359 = vmatprep.subr.bf16.mxu0 0
    %1360 = vmatpush1.bf16.msra.mxu0 0
    %1361 = vmatprep.subr.bf16.mxu0 0
    %1362 = vmatpush1.bf16.msra.mxu0 0
    %1363 = vmatprep.subr.bf16.mxu0 0
    %1364 = vmatpush1.bf16.msra.mxu0 0
    %1365 = vmatprep.subr.bf16.mxu0 0
    %1366 = vmatpush1.bf16.msra.mxu0 0
    %1367 = vmatprep.subr.bf16.mxu0 %v1269
    %1368 = vmatpush1.bf16.msra.mxu0 %v1266
    %1369 = vmatprep.subr.bf16.mxu0 0
    %1370 = vmatpush2.bf16.msra.mxu0 0
    %1371 = vmatprep.subr.bf16.mxu0 0
    %1372 = vmatpush2.bf16.msra.mxu0 0
    %1373 = vmatprep.subr.bf16.mxu0 0
    %1374 = vmatpush2.bf16.msra.mxu0 0
    %1375 = vmatprep.subr.bf16.mxu0 0
    %1376 = vmatpush2.bf16.msra.mxu0 0
    %1377 = vmatprep.subr.bf16.mxu0 0
    %1378 = vmatpush2.bf16.msra.mxu0 0
    %1379 = vmatprep.subr.bf16.mxu0 0
    %1380 = vmatpush2.bf16.msra.mxu0 0
    %1381 = vmatprep.subr.bf16.mxu0 0
    %1382 = vmatpush2.bf16.msra.mxu0 0
    %1383 = vmatprep.subr.bf16.mxu0 0
    %1384 = vmatpush2.bf16.msra.mxu0 0
    %1385 = vmatprep.mubr.bf16.mxu0 0
    %1386 = vmatmul.mubr.bf16.gmra.mxu0 %v1251
    %v1387 = vpop.f32.mrf.mxu0
    %v1388 = vadd.f32 0.0, %v1387
    %v1389 = vpop.f32.mrf.mxu0
    %v1390 = vadd.f32 0.0, %v1389
    %v1391 = vpop.f32.mrf.mxu0
    %v1392 = vpop.f32.mrf.mxu0
    %1393 = vdwg.mxu0
    %v1394 = vadd.f32 %v1224, %v1306
    %v1395 = vadd.f32 %v1225, %v1308
    %v1396 = vadd.f32 %v1226, %v1347
    %v1397 = vadd.f32 %v1227, %v1349
    %v1398 = vadd.f32 %v1228, %v1388
    %v1399 = vadd.f32 %v1229, %v1390
    %s1400 = scalar_lea.vmem %s1, 32
    %v1401 = vld [vmem:[%s1400] sm:$0xf]
    %1402 = vrot.lane.b32.xlu0 %v54, 90
    %v1403 = vpop.permute.xlu0 %1402
    %1404 = vrot.lane.b32.xlu0 %v62, 90
    %v1405 = vpop.permute.xlu0 %1404
    %1406 = vrot.lane.b32.xlu0 %v61, 90
    %v1407 = vpop.permute.xlu0 %1406
    %1408 = vrot.lane.b32.xlu0 %v63, 90
    %v1409 = vpop.permute.xlu0 %1408
    %1410 = vrot.lane.b32.xlu0 %v70, 90
    %v1411 = vpop.permute.xlu0 %1410
    %1412 = vrot.lane.b32.xlu0 %v71, 90
    %v1413 = vpop.permute.xlu0 %1412
    %vm1414 = vcmask 736256
    %v1415 = vsel %vm1414, %v1403, %v1405
    %v1416 = vsel %vm1414, %v1405, %v1407
    %v1417 = vsel %vm1414, %v1407, %v1409
    %v1418 = vsel %vm1414, %v1409, %v1411
    %v1419 = vsel %vm1414, %v1411, %v1413
    %v1421 = vsel %vm90, %v1401, 0
    %v1424 = vsel %vm94, %v1415, 0
    %v1427 = vsel %vm94, %v1416, 0
    %v1430 = vsel %vm94, %v1417, 0
    %v1433 = vsel %vm94, %v1418, 0
    %v1436 = vsel %vm94, %v1419, 0
    %v1439 = vsel %vm94, %v1413, 0
    %1441 = vmatprep.subr.bf16.mxu0 0
    %1442 = vmatpush1.bf16.msra.mxu0 0
    %1443 = vmatprep.subr.bf16.mxu0 0
    %1444 = vmatpush1.bf16.msra.mxu0 0
    %1445 = vmatprep.subr.bf16.mxu0 0
    %1446 = vmatpush1.bf16.msra.mxu0 0
    %1447 = vmatprep.subr.bf16.mxu0 0
    %1448 = vmatpush1.bf16.msra.mxu0 0
    %1449 = vmatprep.subr.bf16.mxu0 0
    %1450 = vmatpush1.bf16.msra.mxu0 0
    %1451 = vmatprep.subr.bf16.mxu0 0
    %1452 = vmatpush1.bf16.msra.mxu0 0
    %1453 = vmatprep.subr.bf16.mxu0 0
    %1454 = vmatpush1.bf16.msra.mxu0 0
    %1455 = vmatprep.subr.bf16.mxu0 %v1427
    %1456 = vmatpush1.bf16.msra.mxu0 %v1424
    %1457 = vmatprep.subr.bf16.mxu0 0
    %1458 = vmatpush2.bf16.msra.mxu0 0
    %1459 = vmatprep.subr.bf16.mxu0 0
    %1460 = vmatpush2.bf16.msra.mxu0 0
    %1461 = vmatprep.subr.bf16.mxu0 0
    %1462 = vmatpush2.bf16.msra.mxu0 0
    %1463 = vmatprep.subr.bf16.mxu0 0
    %1464 = vmatpush2.bf16.msra.mxu0 0
    %1465 = vmatprep.subr.bf16.mxu0 0
    %1466 = vmatpush2.bf16.msra.mxu0 0
    %1467 = vmatprep.subr.bf16.mxu0 0
    %1468 = vmatpush2.bf16.msra.mxu0 0
    %1469 = vmatprep.subr.bf16.mxu0 0
    %1470 = vmatpush2.bf16.msra.mxu0 0
    %1471 = vmatprep.subr.bf16.mxu0 0
    %1472 = vmatpush2.bf16.msra.mxu0 0
    %1473 = vmatprep.mubr.bf16.mxu0 0
    %1474 = vmatmul.mubr.bf16.gmra.mxu0 %v1421
    %v1475 = vpop.f32.mrf.mxu0
    %v1476 = vadd.f32 0.0, %v1475
    %v1477 = vpop.f32.mrf.mxu0
    %v1478 = vadd.f32 0.0, %v1477
    %v1479 = vpop.f32.mrf.mxu0
    %v1480 = vpop.f32.mrf.mxu0
    %1481 = vdwg.mxu0
    %1482 = vmatprep.subr.bf16.mxu0 0
    %1483 = vmatpush1.bf16.msra.mxu0 0
    %1484 = vmatprep.subr.bf16.mxu0 0
    %1485 = vmatpush1.bf16.msra.mxu0 0
    %1486 = vmatprep.subr.bf16.mxu0 0
    %1487 = vmatpush1.bf16.msra.mxu0 0
    %1488 = vmatprep.subr.bf16.mxu0 0
    %1489 = vmatpush1.bf16.msra.mxu0 0
    %1490 = vmatprep.subr.bf16.mxu0 0
    %1491 = vmatpush1.bf16.msra.mxu0 0
    %1492 = vmatprep.subr.bf16.mxu0 0
    %1493 = vmatpush1.bf16.msra.mxu0 0
    %1494 = vmatprep.subr.bf16.mxu0 0
    %1495 = vmatpush1.bf16.msra.mxu0 0
    %1496 = vmatprep.subr.bf16.mxu0 %v1433
    %1497 = vmatpush1.bf16.msra.mxu0 %v1430
    %1498 = vmatprep.subr.bf16.mxu0 0
    %1499 = vmatpush2.bf16.msra.mxu0 0
    %1500 = vmatprep.subr.bf16.mxu0 0
    %1501 = vmatpush2.bf16.msra.mxu0 0
    %1502 = vmatprep.subr.bf16.mxu0 0
    %1503 = vmatpush2.bf16.msra.mxu0 0
    %1504 = vmatprep.subr.bf16.mxu0 0
    %1505 = vmatpush2.bf16.msra.mxu0 0
    %1506 = vmatprep.subr.bf16.mxu0 0
    %1507 = vmatpush2.bf16.msra.mxu0 0
    %1508 = vmatprep.subr.bf16.mxu0 0
    %1509 = vmatpush2.bf16.msra.mxu0 0
    %1510 = vmatprep.subr.bf16.mxu0 0
    %1511 = vmatpush2.bf16.msra.mxu0 0
    %1512 = vmatprep.subr.bf16.mxu0 0
    %1513 = vmatpush2.bf16.msra.mxu0 0
    %1514 = vmatprep.mubr.bf16.mxu0 0
    %1515 = vmatmul.mubr.bf16.gmra.mxu0 %v1421
    %v1516 = vpop.f32.mrf.mxu0
    %v1517 = vadd.f32 0.0, %v1516
    %v1518 = vpop.f32.mrf.mxu0
    %v1519 = vadd.f32 0.0, %v1518
    %v1520 = vpop.f32.mrf.mxu0
    %v1521 = vpop.f32.mrf.mxu0
    %1522 = vdwg.mxu0
    %1523 = vmatprep.subr.bf16.mxu0 0
    %1524 = vmatpush1.bf16.msra.mxu0 0
    %1525 = vmatprep.subr.bf16.mxu0 0
    %1526 = vmatpush1.bf16.msra.mxu0 0
    %1527 = vmatprep.subr.bf16.mxu0 0
    %1528 = vmatpush1.bf16.msra.mxu0 0
    %1529 = vmatprep.subr.bf16.mxu0 0
    %1530 = vmatpush1.bf16.msra.mxu0 0
    %1531 = vmatprep.subr.bf16.mxu0 0
    %1532 = vmatpush1.bf16.msra.mxu0 0
    %1533 = vmatprep.subr.bf16.mxu0 0
    %1534 = vmatpush1.bf16.msra.mxu0 0
    %1535 = vmatprep.subr.bf16.mxu0 0
    %1536 = vmatpush1.bf16.msra.mxu0 0
    %1537 = vmatprep.subr.bf16.mxu0 %v1439
    %1538 = vmatpush1.bf16.msra.mxu0 %v1436
    %1539 = vmatprep.subr.bf16.mxu0 0
    %1540 = vmatpush2.bf16.msra.mxu0 0
    %1541 = vmatprep.subr.bf16.mxu0 0
    %1542 = vmatpush2.bf16.msra.mxu0 0
    %1543 = vmatprep.subr.bf16.mxu0 0
    %1544 = vmatpush2.bf16.msra.mxu0 0
    %1545 = vmatprep.subr.bf16.mxu0 0
    %1546 = vmatpush2.bf16.msra.mxu0 0
    %1547 = vmatprep.subr.bf16.mxu0 0
    %1548 = vmatpush2.bf16.msra.mxu0 0
    %1549 = vmatprep.subr.bf16.mxu0 0
    %1550 = vmatpush2.bf16.msra.mxu0 0
    %1551 = vmatprep.subr.bf16.mxu0 0
    %1552 = vmatpush2.bf16.msra.mxu0 0
    %1553 = vmatprep.subr.bf16.mxu0 0
    %1554 = vmatpush2.bf16.msra.mxu0 0
    %1555 = vmatprep.mubr.bf16.mxu0 0
    %1556 = vmatmul.mubr.bf16.gmra.mxu0 %v1421
    %v1557 = vpop.f32.mrf.mxu0
    %v1558 = vadd.f32 0.0, %v1557
    %v1559 = vpop.f32.mrf.mxu0
    %v1560 = vadd.f32 0.0, %v1559
    %v1561 = vpop.f32.mrf.mxu0
    %v1562 = vpop.f32.mrf.mxu0
    %1563 = vdwg.mxu0
    %v1564 = vadd.f32 %v1394, %v1476
    %v1565 = vadd.f32 %v1395, %v1478
    %v1566 = vadd.f32 %v1396, %v1517
    %v1567 = vadd.f32 %v1397, %v1519
    %v1568 = vadd.f32 %v1398, %v1558
    %v1569 = vadd.f32 %v1399, %v1560
    %v1570 = vld [vmem:[%s2] sm:$0xff]
    %1572 = vset.pattern.permute.xlu0 0
    %1573 = vperm.xlu0 %1572, %v1570
    %v1574 = vpop.permute.xlu0 %1573
    %v1576 = vadd.f32 %v1564, %v1574
    %v1577 = vadd.f32 %v1565, %v1574
    %v1578 = vadd.f32 %v1566, %v1574
    %v1579 = vadd.f32 %v1567, %v1574
    %v1580 = vadd.f32 %v1568, %v1574
    %v1581 = vadd.f32 %v1569, %v1574
    %v1582 = vmax.f32 %v1576, 0.0
    %v1583 = vmax.f32 %v1577, 0.0
    %v1584 = vmax.f32 %v1578, 0.0
    %v1585 = vmax.f32 %v1579, 0.0
    %v1586 = vmax.f32 %v1580, 0.0
    %v1587 = vmax.f32 %v1581, 0.0
    %1594 = vrot.lane.b32.xlu0 %v1582, 127
    %v1595 = vpop.permute.xlu0 %1594
    %1596 = vrot.lane.b32.xlu0 %v1583, 127
    %v1597 = vpop.permute.xlu0 %1596
    %1598 = vrot.lane.b32.xlu0 %v1584, 127
    %v1599 = vpop.permute.xlu0 %1598
    %1600 = vrot.lane.b32.xlu0 %v1585, 127
    %v1601 = vpop.permute.xlu0 %1600
    %1602 = vrot.lane.b32.xlu0 %v1586, 127
    %v1603 = vpop.permute.xlu0 %1602
    %1604 = vrot.lane.b32.xlu0 %v1587, 127
    %v1605 = vpop.permute.xlu0 %1604
    %vm1606 = vcmask 1039360
    %v1607 = vsel %vm1606, %v1595, %v1597
    %v1608 = vsel %vm1606, %v1597, %v1599
    %v1609 = vsel %vm1606, %v1599, %v1601
    %v1610 = vsel %vm1606, %v1601, %v1603
    %v1611 = vsel %vm1606, %v1603, %v1605
    %v1618 = vmax.f32 %v1582, %v1607
    %v1619 = vmax.f32 %v1583, %v1608
    %v1620 = vmax.f32 %v1584, %v1609
    %v1621 = vmax.f32 %v1585, %v1610
    %v1622 = vmax.f32 %v1586, %v1611
    %v1623 = vmax.f32 %v1587, %v1605
    %1630 = vrot.lane.b32.xlu0 %v1618, 110
    %v1631 = vpop.permute.xlu0 %1630
    %1632 = vrot.lane.b32.xlu0 %v1619, 110
    %v1633 = vpop.permute.xlu0 %1632
    %1634 = vrot.lane.b32.xlu0 %v1620, 110
    %v1635 = vpop.permute.xlu0 %1634
    %1636 = vrot.lane.b32.xlu0 %v1621, 110
    %v1637 = vpop.permute.xlu0 %1636
    %1638 = vrot.lane.b32.xlu0 %v1622, 110
    %v1639 = vpop.permute.xlu0 %1638
    %1640 = vrot.lane.b32.xlu0 %v1623, 110
    %v1641 = vpop.permute.xlu0 %1640
    %vm1642 = vcmask 900096
    %v1643 = vsel %vm1642, %v1631, %v1633
    %v1644 = vsel %vm1642, %v1633, %v1635
    %v1645 = vsel %vm1642, %v1635, %v1637
    %v1646 = vsel %vm1642, %v1637, %v1639
    %v1647 = vsel %vm1642, %v1639, %v1641
    %v1654 = vmax.f32 %v1618, %v1643
    %v1655 = vmax.f32 %v1619, %v1644
    %v1656 = vmax.f32 %v1620, %v1645
    %v1657 = vmax.f32 %v1621, %v1646
    %v1658 = vmax.f32 %v1622, %v1647
    %v1659 = vmax.f32 %v1623, %v1641
    %v1660 = vld [vmem:[%s3] sm:$0x3f]
    %v1662 = vlaneseq
    %v1663 = vshrl.u32 %v1662, 7
    %v1664 = vsub.s32 0, %v1663
    %v1665 = vrot.slane %v1660, %v1664
    %v1666 = vlaneseq
    %v1667 = vshrl.u32 %v1666, 7
    %v1668 = vsub.s32 1, %v1667
    %v1669 = vrot.slane %v1660, %v1668
    %v1670 = vlaneseq
    %v1671 = vshrl.u32 %v1670, 7
    %v1672 = vsub.s32 2, %v1671
    %v1673 = vrot.slane %v1660, %v1672
    %v1674 = vlaneseq
    %v1675 = vshrl.u32 %v1674, 7
    %v1676 = vsub.s32 3, %v1675
    %v1677 = vrot.slane %v1660, %v1676
    %v1678 = vlaneseq
    %v1679 = vshrl.u32 %v1678, 7
    %v1680 = vsub.s32 4, %v1679
    %v1681 = vrot.slane %v1660, %v1680
    %v1682 = vlaneseq
    %v1683 = vshrl.u32 %v1682, 7
    %v1684 = vsub.s32 5, %v1683
    %v1685 = vrot.slane %v1660, %v1684
    %v1692 = vmul.f32 %v1654, %v1665
    %v1693 = vmul.f32 %v1655, %v1669
    %v1694 = vmul.f32 %v1656, %v1673
    %v1695 = vmul.f32 %v1657, %v1677
    %v1696 = vmul.f32 %v1658, %v1681
    %v1697 = vmul.f32 %v1659, %v1685
    %v1698 = vpack.c.bf16 %v1692, %v1692
    %v1699 = vpack.c.bf16 %v1693, %v1693
    %v1700 = vpack.c.bf16 %v1694, %v1694
    %v1701 = vpack.c.bf16 %v1695, %v1695
    %v1702 = vpack.c.bf16 %v1696, %v1696
    %v1703 = vpack.c.bf16 %v1697, %v1697
    %v1704 = vld [vmem:[%s4] sm:$0xf]
    %v1705 = vld [vmem:[%s4 + $0x4] sm:$0xf]
    %s1706 = scalar_lea.vmem %s4, 8
    %v1707 = vld [vmem:[%s1706] sm:$0xf]
    %v1708 = vld [vmem:[%s1706 + $0x4] sm:$0xf]
    %v1711 = vunpack.c.l.b16 %v1707
    %v1712 = vunpack.c.l.b16 %v1708
    %v1713 = vpack.c.b16 %v1712, %v1711
    %1719 = vrot.lane.b32.xlu0 %v1698, 126
    %v1720 = vpop.permute.xlu0 %1719
    %1721 = vrot.lane.b32.xlu0 %v1699, 126
    %v1722 = vpop.permute.xlu0 %1721
    %1723 = vrot.lane.b32.xlu0 %v1700, 126
    %v1724 = vpop.permute.xlu0 %1723
    %1725 = vrot.lane.b32.xlu0 %v1701, 126
    %v1726 = vpop.permute.xlu0 %1725
    %1727 = vrot.lane.b32.xlu0 %v1702, 126
    %v1728 = vpop.permute.xlu0 %1727
    %v1729 = vsel %vm394, %v1720, %v1722
    %v1730 = vsel %vm394, %v1722, %v1724
    %v1731 = vsel %vm394, %v1724, %v1726
    %v1732 = vsel %vm394, %v1726, %v1728
    %vm1733 = vcmask 64512
    %v1735 = vsel %vm1733, %v1713, 0
    %vm1737 = vcmask 1043456
    %v1739 = vsel %vm1737, %v1729, 0
    %v1742 = vsel %vm1737, %v1730, 0
    %v1745 = vsel %vm1737, %v1731, 0
    %v1748 = vsel %vm1737, %v1732, 0
    %v1751 = vsel %vm1737, %v1728, 0
    %1753 = vmatprep.subr.bf16.mxu0 0
    %1754 = vmatpush1.bf16.msra.mxu0 0
    %1755 = vmatprep.subr.bf16.mxu0 0
    %1756 = vmatpush1.bf16.msra.mxu0 0
    %1757 = vmatprep.subr.bf16.mxu0 0
    %1758 = vmatpush1.bf16.msra.mxu0 0
    %1759 = vmatprep.subr.bf16.mxu0 0
    %1760 = vmatpush1.bf16.msra.mxu0 0
    %1761 = vmatprep.subr.bf16.mxu0 0
    %1762 = vmatpush1.bf16.msra.mxu0 0
    %1763 = vmatprep.subr.bf16.mxu0 0
    %1764 = vmatpush1.bf16.msra.mxu0 0
    %1765 = vmatprep.subr.bf16.mxu0 0
    %1766 = vmatpush1.bf16.msra.mxu0 0
    %1767 = vmatprep.subr.bf16.mxu0 %v1742
    %1768 = vmatpush1.bf16.msra.mxu0 %v1739
    %1769 = vmatprep.subr.bf16.mxu0 0
    %1770 = vmatpush2.bf16.msra.mxu0 0
    %1771 = vmatprep.subr.bf16.mxu0 0
    %1772 = vmatpush2.bf16.msra.mxu0 0
    %1773 = vmatprep.subr.bf16.mxu0 0
    %1774 = vmatpush2.bf16.msra.mxu0 0
    %1775 = vmatprep.subr.bf16.mxu0 0
    %1776 = vmatpush2.bf16.msra.mxu0 0
    %1777 = vmatprep.subr.bf16.mxu0 0
    %1778 = vmatpush2.bf16.msra.mxu0 0
    %1779 = vmatprep.subr.bf16.mxu0 0
    %1780 = vmatpush2.bf16.msra.mxu0 0
    %1781 = vmatprep.subr.bf16.mxu0 0
    %1782 = vmatpush2.bf16.msra.mxu0 0
    %1783 = vmatprep.subr.bf16.mxu0 0
    %1784 = vmatpush2.bf16.msra.mxu0 0
    %1785 = vmatprep.mubr.bf16.mxu0 0
    %1786 = vmatmul.mubr.bf16.gmra.mxu0 %v1735
    %v1787 = vpop.f32.mrf.mxu0
    %v1788 = vadd.f32 0.0, %v1787
    %v1789 = vpop.f32.mrf.mxu0
    %v1790 = vadd.f32 0.0, %v1789
    %v1791 = vpop.f32.mrf.mxu0
    %v1792 = vadd.f32 0.0, %v1791
    %v1793 = vpop.f32.mrf.mxu0
    %v1794 = vadd.f32 0.0, %v1793
    %1795 = vdwg.mxu0
    %1796 = vmatprep.subr.bf16.mxu0 0
    %1797 = vmatpush1.bf16.msra.mxu0 0
    %1798 = vmatprep.subr.bf16.mxu0 0
    %1799 = vmatpush1.bf16.msra.mxu0 0
    %1800 = vmatprep.subr.bf16.mxu0 0
    %1801 = vmatpush1.bf16.msra.mxu0 0
    %1802 = vmatprep.subr.bf16.mxu0 0
    %1803 = vmatpush1.bf16.msra.mxu0 0
    %1804 = vmatprep.subr.bf16.mxu0 0
    %1805 = vmatpush1.bf16.msra.mxu0 0
    %1806 = vmatprep.subr.bf16.mxu0 0
    %1807 = vmatpush1.bf16.msra.mxu0 0
    %1808 = vmatprep.subr.bf16.mxu0 0
    %1809 = vmatpush1.bf16.msra.mxu0 0
    %1810 = vmatprep.subr.bf16.mxu0 %v1748
    %1811 = vmatpush1.bf16.msra.mxu0 %v1745
    %1812 = vmatprep.subr.bf16.mxu0 0
    %1813 = vmatpush2.bf16.msra.mxu0 0
    %1814 = vmatprep.subr.bf16.mxu0 0
    %1815 = vmatpush2.bf16.msra.mxu0 0
    %1816 = vmatprep.subr.bf16.mxu0 0
    %1817 = vmatpush2.bf16.msra.mxu0 0
    %1818 = vmatprep.subr.bf16.mxu0 0
    %1819 = vmatpush2.bf16.msra.mxu0 0
    %1820 = vmatprep.subr.bf16.mxu0 0
    %1821 = vmatpush2.bf16.msra.mxu0 0
    %1822 = vmatprep.subr.bf16.mxu0 0
    %1823 = vmatpush2.bf16.msra.mxu0 0
    %1824 = vmatprep.subr.bf16.mxu0 0
    %1825 = vmatpush2.bf16.msra.mxu0 0
    %1826 = vmatprep.subr.bf16.mxu0 0
    %1827 = vmatpush2.bf16.msra.mxu0 0
    %1828 = vmatprep.mubr.bf16.mxu0 0
    %1829 = vmatmul.mubr.bf16.gmra.mxu0 %v1735
    %v1830 = vpop.f32.mrf.mxu0
    %v1831 = vadd.f32 0.0, %v1830
    %v1832 = vpop.f32.mrf.mxu0
    %v1833 = vadd.f32 0.0, %v1832
    %v1834 = vpop.f32.mrf.mxu0
    %v1835 = vadd.f32 0.0, %v1834
    %v1836 = vpop.f32.mrf.mxu0
    %v1837 = vadd.f32 0.0, %v1836
    %1838 = vdwg.mxu0
    %1839 = vmatprep.subr.bf16.mxu0 0
    %1840 = vmatpush1.bf16.msra.mxu0 0
    %1841 = vmatprep.subr.bf16.mxu0 0
    %1842 = vmatpush1.bf16.msra.mxu0 0
    %1843 = vmatprep.subr.bf16.mxu0 0
    %1844 = vmatpush1.bf16.msra.mxu0 0
    %1845 = vmatprep.subr.bf16.mxu0 0
    %1846 = vmatpush1.bf16.msra.mxu0 0
    %1847 = vmatprep.subr.bf16.mxu0 0
    %1848 = vmatpush1.bf16.msra.mxu0 0
    %1849 = vmatprep.subr.bf16.mxu0 0
    %1850 = vmatpush1.bf16.msra.mxu0 0
    %1851 = vmatprep.subr.bf16.mxu0 0
    %1852 = vmatpush1.bf16.msra.mxu0 0
    %1853 = vmatprep.subr.bf16.mxu0 0
    %1854 = vmatpush1.bf16.msra.mxu0 %v1751
    %1855 = vmatprep.subr.bf16.mxu0 0
    %1856 = vmatpush2.bf16.msra.mxu0 0
    %1857 = vmatprep.subr.bf16.mxu0 0
    %1858 = vmatpush2.bf16.msra.mxu0 0
    %1859 = vmatprep.subr.bf16.mxu0 0
    %1860 = vmatpush2.bf16.msra.mxu0 0
    %1861 = vmatprep.subr.bf16.mxu0 0
    %1862 = vmatpush2.bf16.msra.mxu0 0
    %1863 = vmatprep.subr.bf16.mxu0 0
    %1864 = vmatpush2.bf16.msra.mxu0 0
    %1865 = vmatprep.subr.bf16.mxu0 0
    %1866 = vmatpush2.bf16.msra.mxu0 0
    %1867 = vmatprep.subr.bf16.mxu0 0
    %1868 = vmatpush2.bf16.msra.mxu0 0
    %1869 = vmatprep.subr.bf16.mxu0 0
    %1870 = vmatpush2.bf16.msra.mxu0 0
    %1871 = vmatprep.mubr.bf16.mxu0 0
    %1872 = vmatmul.mubr.bf16.gmra.mxu0 %v1735
    %v1873 = vpop.f32.mrf.mxu0
    %v1874 = vadd.f32 0.0, %v1873
    %v1875 = vpop.f32.mrf.mxu0
    %v1876 = vpop.f32.mrf.mxu0
    %v1877 = vadd.f32 0.0, %v1876
    %v1878 = vpop.f32.mrf.mxu0
    %1879 = vdwg.mxu0
    %v1882 = vunpack.c.l.b16 %v1704
    %v1883 = vunpack.c.l.b16 %v1705
    %v1884 = vpack.c.b16 %v1883, %v1882
    %v1886 = vsel %vm1733, %v1884, 0
    %v1889 = vsel %vm1737, %v1698, 0
    %v1892 = vsel %vm1737, %v1699, 0
    %v1895 = vsel %vm1737, %v1700, 0
    %v1898 = vsel %vm1737, %v1701, 0
    %v1901 = vsel %vm1737, %v1702, 0
    %1903 = vmatprep.subr.bf16.mxu0 0
    %1904 = vmatpush1.bf16.msra.mxu0 0
    %1905 = vmatprep.subr.bf16.mxu0 0
    %1906 = vmatpush1.bf16.msra.mxu0 0
    %1907 = vmatprep.subr.bf16.mxu0 0
    %1908 = vmatpush1.bf16.msra.mxu0 0
    %1909 = vmatprep.subr.bf16.mxu0 0
    %1910 = vmatpush1.bf16.msra.mxu0 0
    %1911 = vmatprep.subr.bf16.mxu0 0
    %1912 = vmatpush1.bf16.msra.mxu0 0
    %1913 = vmatprep.subr.bf16.mxu0 0
    %1914 = vmatpush1.bf16.msra.mxu0 0
    %1915 = vmatprep.subr.bf16.mxu0 0
    %1916 = vmatpush1.bf16.msra.mxu0 0
    %1917 = vmatprep.subr.bf16.mxu0 %v1892
    %1918 = vmatpush1.bf16.msra.mxu0 %v1889
    %1919 = vmatprep.subr.bf16.mxu0 0
    %1920 = vmatpush2.bf16.msra.mxu0 0
    %1921 = vmatprep.subr.bf16.mxu0 0
    %1922 = vmatpush2.bf16.msra.mxu0 0
    %1923 = vmatprep.subr.bf16.mxu0 0
    %1924 = vmatpush2.bf16.msra.mxu0 0
    %1925 = vmatprep.subr.bf16.mxu0 0
    %1926 = vmatpush2.bf16.msra.mxu0 0
    %1927 = vmatprep.subr.bf16.mxu0 0
    %1928 = vmatpush2.bf16.msra.mxu0 0
    %1929 = vmatprep.subr.bf16.mxu0 0
    %1930 = vmatpush2.bf16.msra.mxu0 0
    %1931 = vmatprep.subr.bf16.mxu0 0
    %1932 = vmatpush2.bf16.msra.mxu0 0
    %1933 = vmatprep.subr.bf16.mxu0 0
    %1934 = vmatpush2.bf16.msra.mxu0 0
    %1935 = vmatprep.mubr.bf16.mxu0 0
    %1936 = vmatmul.mubr.bf16.gmra.mxu0 %v1886
    %v1937 = vpop.f32.mrf.mxu0
    %v1938 = vadd.f32 %v1788, %v1937
    %v1939 = vpop.f32.mrf.mxu0
    %v1940 = vadd.f32 %v1790, %v1939
    %v1941 = vpop.f32.mrf.mxu0
    %v1942 = vadd.f32 %v1792, %v1941
    %v1943 = vpop.f32.mrf.mxu0
    %v1944 = vadd.f32 %v1794, %v1943
    %1945 = vdwg.mxu0
    %1946 = vmatprep.subr.bf16.mxu0 0
    %1947 = vmatpush1.bf16.msra.mxu0 0
    %1948 = vmatprep.subr.bf16.mxu0 0
    %1949 = vmatpush1.bf16.msra.mxu0 0
    %1950 = vmatprep.subr.bf16.mxu0 0
    %1951 = vmatpush1.bf16.msra.mxu0 0
    %1952 = vmatprep.subr.bf16.mxu0 0
    %1953 = vmatpush1.bf16.msra.mxu0 0
    %1954 = vmatprep.subr.bf16.mxu0 0
    %1955 = vmatpush1.bf16.msra.mxu0 0
    %1956 = vmatprep.subr.bf16.mxu0 0
    %1957 = vmatpush1.bf16.msra.mxu0 0
    %1958 = vmatprep.subr.bf16.mxu0 0
    %1959 = vmatpush1.bf16.msra.mxu0 0
    %1960 = vmatprep.subr.bf16.mxu0 %v1898
    %1961 = vmatpush1.bf16.msra.mxu0 %v1895
    %1962 = vmatprep.subr.bf16.mxu0 0
    %1963 = vmatpush2.bf16.msra.mxu0 0
    %1964 = vmatprep.subr.bf16.mxu0 0
    %1965 = vmatpush2.bf16.msra.mxu0 0
    %1966 = vmatprep.subr.bf16.mxu0 0
    %1967 = vmatpush2.bf16.msra.mxu0 0
    %1968 = vmatprep.subr.bf16.mxu0 0
    %1969 = vmatpush2.bf16.msra.mxu0 0
    %1970 = vmatprep.subr.bf16.mxu0 0
    %1971 = vmatpush2.bf16.msra.mxu0 0
    %1972 = vmatprep.subr.bf16.mxu0 0
    %1973 = vmatpush2.bf16.msra.mxu0 0
    %1974 = vmatprep.subr.bf16.mxu0 0
    %1975 = vmatpush2.bf16.msra.mxu0 0
    %1976 = vmatprep.subr.bf16.mxu0 0
    %1977 = vmatpush2.bf16.msra.mxu0 0
    %1978 = vmatprep.mubr.bf16.mxu0 0
    %1979 = vmatmul.mubr.bf16.gmra.mxu0 %v1886
    %v1980 = vpop.f32.mrf.mxu0
    %v1981 = vadd.f32 %v1831, %v1980
    %v1982 = vpop.f32.mrf.mxu0
    %v1983 = vadd.f32 %v1833, %v1982
    %v1984 = vpop.f32.mrf.mxu0
    %v1985 = vadd.f32 %v1835, %v1984
    %v1986 = vpop.f32.mrf.mxu0
    %v1987 = vadd.f32 %v1837, %v1986
    %1988 = vdwg.mxu0
    %1989 = vmatprep.subr.bf16.mxu0 0
    %1990 = vmatpush1.bf16.msra.mxu0 0
    %1991 = vmatprep.subr.bf16.mxu0 0
    %1992 = vmatpush1.bf16.msra.mxu0 0
    %1993 = vmatprep.subr.bf16.mxu0 0
    %1994 = vmatpush1.bf16.msra.mxu0 0
    %1995 = vmatprep.subr.bf16.mxu0 0
    %1996 = vmatpush1.bf16.msra.mxu0 0
    %1997 = vmatprep.subr.bf16.mxu0 0
    %1998 = vmatpush1.bf16.msra.mxu0 0
    %1999 = vmatprep.subr.bf16.mxu0 0
    %2000 = vmatpush1.bf16.msra.mxu0 0
    %2001 = vmatprep.subr.bf16.mxu0 0
    %2002 = vmatpush1.bf16.msra.mxu0 0
    %2003 = vmatprep.subr.bf16.mxu0 0
    %2004 = vmatpush1.bf16.msra.mxu0 %v1901
    %2005 = vmatprep.subr.bf16.mxu0 0
    %2006 = vmatpush2.bf16.msra.mxu0 0
    %2007 = vmatprep.subr.bf16.mxu0 0
    %2008 = vmatpush2.bf16.msra.mxu0 0
    %2009 = vmatprep.subr.bf16.mxu0 0
    %2010 = vmatpush2.bf16.msra.mxu0 0
    %2011 = vmatprep.subr.bf16.mxu0 0
    %2012 = vmatpush2.bf16.msra.mxu0 0
    %2013 = vmatprep.subr.bf16.mxu0 0
    %2014 = vmatpush2.bf16.msra.mxu0 0
    %2015 = vmatprep.subr.bf16.mxu0 0
    %2016 = vmatpush2.bf16.msra.mxu0 0
    %2017 = vmatprep.subr.bf16.mxu0 0
    %2018 = vmatpush2.bf16.msra.mxu0 0
    %2019 = vmatprep.subr.bf16.mxu0 0
    %2020 = vmatpush2.bf16.msra.mxu0 0
    %2021 = vmatprep.mubr.bf16.mxu0 0
    %2022 = vmatmul.mubr.bf16.gmra.mxu0 %v1886
    %v2023 = vpop.f32.mrf.mxu0
    %v2024 = vadd.f32 %v1874, %v2023
    %v2025 = vpop.f32.mrf.mxu0
    %v2026 = vpop.f32.mrf.mxu0
    %v2027 = vadd.f32 %v1877, %v2026
    %v2028 = vpop.f32.mrf.mxu0
    %2029 = vdwg.mxu0
    %s2030 = scalar_lea.vmem %s4, 16
    %v2031 = vld [vmem:[%s2030] sm:$0xf]
    %v2032 = vld [vmem:[%s2030 + $0x4] sm:$0xf]
    %v2035 = vunpack.c.l.b16 %v2031
    %v2036 = vunpack.c.l.b16 %v2032
    %v2037 = vpack.c.b16 %v2036, %v2035
    %2038 = vrot.lane.b32.xlu0 %v1698, 124
    %v2039 = vpop.permute.xlu0 %2038
    %2040 = vrot.lane.b32.xlu0 %v1699, 124
    %v2041 = vpop.permute.xlu0 %2040
    %2042 = vrot.lane.b32.xlu0 %v1700, 124
    %v2043 = vpop.permute.xlu0 %2042
    %2044 = vrot.lane.b32.xlu0 %v1701, 124
    %v2045 = vpop.permute.xlu0 %2044
    %2046 = vrot.lane.b32.xlu0 %v1702, 124
    %v2047 = vpop.permute.xlu0 %2046
    %vm2048 = vcmask 1014784
    %v2049 = vsel %vm2048, %v2039, %v2041
    %v2050 = vsel %vm2048, %v2041, %v2043
    %v2051 = vsel %vm2048, %v2043, %v2045
    %v2052 = vsel %vm2048, %v2045, %v2047
    %v2054 = vsel %vm1733, %v2037, 0
    %v2057 = vsel %vm1737, %v2049, 0
    %v2060 = vsel %vm1737, %v2050, 0
    %v2063 = vsel %vm1737, %v2051, 0
    %v2066 = vsel %vm1737, %v2052, 0
    %v2069 = vsel %vm1737, %v2047, 0
    %2071 = vmatprep.subr.bf16.mxu0 0
    %2072 = vmatpush1.bf16.msra.mxu0 0
    %2073 = vmatprep.subr.bf16.mxu0 0
    %2074 = vmatpush1.bf16.msra.mxu0 0
    %2075 = vmatprep.subr.bf16.mxu0 0
    %2076 = vmatpush1.bf16.msra.mxu0 0
    %2077 = vmatprep.subr.bf16.mxu0 0
    %2078 = vmatpush1.bf16.msra.mxu0 0
    %2079 = vmatprep.subr.bf16.mxu0 0
    %2080 = vmatpush1.bf16.msra.mxu0 0
    %2081 = vmatprep.subr.bf16.mxu0 0
    %2082 = vmatpush1.bf16.msra.mxu0 0
    %2083 = vmatprep.subr.bf16.mxu0 0
    %2084 = vmatpush1.bf16.msra.mxu0 0
    %2085 = vmatprep.subr.bf16.mxu0 %v2060
    %2086 = vmatpush1.bf16.msra.mxu0 %v2057
    %2087 = vmatprep.subr.bf16.mxu0 0
    %2088 = vmatpush2.bf16.msra.mxu0 0
    %2089 = vmatprep.subr.bf16.mxu0 0
    %2090 = vmatpush2.bf16.msra.mxu0 0
    %2091 = vmatprep.subr.bf16.mxu0 0
    %2092 = vmatpush2.bf16.msra.mxu0 0
    %2093 = vmatprep.subr.bf16.mxu0 0
    %2094 = vmatpush2.bf16.msra.mxu0 0
    %2095 = vmatprep.subr.bf16.mxu0 0
    %2096 = vmatpush2.bf16.msra.mxu0 0
    %2097 = vmatprep.subr.bf16.mxu0 0
    %2098 = vmatpush2.bf16.msra.mxu0 0
    %2099 = vmatprep.subr.bf16.mxu0 0
    %2100 = vmatpush2.bf16.msra.mxu0 0
    %2101 = vmatprep.subr.bf16.mxu0 0
    %2102 = vmatpush2.bf16.msra.mxu0 0
    %2103 = vmatprep.mubr.bf16.mxu0 0
    %2104 = vmatmul.mubr.bf16.gmra.mxu0 %v2054
    %v2105 = vpop.f32.mrf.mxu0
    %v2106 = vadd.f32 0.0, %v2105
    %v2107 = vpop.f32.mrf.mxu0
    %v2108 = vadd.f32 0.0, %v2107
    %v2109 = vpop.f32.mrf.mxu0
    %v2110 = vadd.f32 0.0, %v2109
    %v2111 = vpop.f32.mrf.mxu0
    %v2112 = vadd.f32 0.0, %v2111
    %2113 = vdwg.mxu0
    %2114 = vmatprep.subr.bf16.mxu0 0
    %2115 = vmatpush1.bf16.msra.mxu0 0
    %2116 = vmatprep.subr.bf16.mxu0 0
    %2117 = vmatpush1.bf16.msra.mxu0 0
    %2118 = vmatprep.subr.bf16.mxu0 0
    %2119 = vmatpush1.bf16.msra.mxu0 0
    %2120 = vmatprep.subr.bf16.mxu0 0
    %2121 = vmatpush1.bf16.msra.mxu0 0
    %2122 = vmatprep.subr.bf16.mxu0 0
    %2123 = vmatpush1.bf16.msra.mxu0 0
    %2124 = vmatprep.subr.bf16.mxu0 0
    %2125 = vmatpush1.bf16.msra.mxu0 0
    %2126 = vmatprep.subr.bf16.mxu0 0
    %2127 = vmatpush1.bf16.msra.mxu0 0
    %2128 = vmatprep.subr.bf16.mxu0 %v2066
    %2129 = vmatpush1.bf16.msra.mxu0 %v2063
    %2130 = vmatprep.subr.bf16.mxu0 0
    %2131 = vmatpush2.bf16.msra.mxu0 0
    %2132 = vmatprep.subr.bf16.mxu0 0
    %2133 = vmatpush2.bf16.msra.mxu0 0
    %2134 = vmatprep.subr.bf16.mxu0 0
    %2135 = vmatpush2.bf16.msra.mxu0 0
    %2136 = vmatprep.subr.bf16.mxu0 0
    %2137 = vmatpush2.bf16.msra.mxu0 0
    %2138 = vmatprep.subr.bf16.mxu0 0
    %2139 = vmatpush2.bf16.msra.mxu0 0
    %2140 = vmatprep.subr.bf16.mxu0 0
    %2141 = vmatpush2.bf16.msra.mxu0 0
    %2142 = vmatprep.subr.bf16.mxu0 0
    %2143 = vmatpush2.bf16.msra.mxu0 0
    %2144 = vmatprep.subr.bf16.mxu0 0
    %2145 = vmatpush2.bf16.msra.mxu0 0
    %2146 = vmatprep.mubr.bf16.mxu0 0
    %2147 = vmatmul.mubr.bf16.gmra.mxu0 %v2054
    %v2148 = vpop.f32.mrf.mxu0
    %v2149 = vadd.f32 0.0, %v2148
    %v2150 = vpop.f32.mrf.mxu0
    %v2151 = vadd.f32 0.0, %v2150
    %v2152 = vpop.f32.mrf.mxu0
    %v2153 = vadd.f32 0.0, %v2152
    %v2154 = vpop.f32.mrf.mxu0
    %v2155 = vadd.f32 0.0, %v2154
    %2156 = vdwg.mxu0
    %2157 = vmatprep.subr.bf16.mxu0 0
    %2158 = vmatpush1.bf16.msra.mxu0 0
    %2159 = vmatprep.subr.bf16.mxu0 0
    %2160 = vmatpush1.bf16.msra.mxu0 0
    %2161 = vmatprep.subr.bf16.mxu0 0
    %2162 = vmatpush1.bf16.msra.mxu0 0
    %2163 = vmatprep.subr.bf16.mxu0 0
    %2164 = vmatpush1.bf16.msra.mxu0 0
    %2165 = vmatprep.subr.bf16.mxu0 0
    %2166 = vmatpush1.bf16.msra.mxu0 0
    %2167 = vmatprep.subr.bf16.mxu0 0
    %2168 = vmatpush1.bf16.msra.mxu0 0
    %2169 = vmatprep.subr.bf16.mxu0 0
    %2170 = vmatpush1.bf16.msra.mxu0 0
    %2171 = vmatprep.subr.bf16.mxu0 0
    %2172 = vmatpush1.bf16.msra.mxu0 %v2069
    %2173 = vmatprep.subr.bf16.mxu0 0
    %2174 = vmatpush2.bf16.msra.mxu0 0
    %2175 = vmatprep.subr.bf16.mxu0 0
    %2176 = vmatpush2.bf16.msra.mxu0 0
    %2177 = vmatprep.subr.bf16.mxu0 0
    %2178 = vmatpush2.bf16.msra.mxu0 0
    %2179 = vmatprep.subr.bf16.mxu0 0
    %2180 = vmatpush2.bf16.msra.mxu0 0
    %2181 = vmatprep.subr.bf16.mxu0 0
    %2182 = vmatpush2.bf16.msra.mxu0 0
    %2183 = vmatprep.subr.bf16.mxu0 0
    %2184 = vmatpush2.bf16.msra.mxu0 0
    %2185 = vmatprep.subr.bf16.mxu0 0
    %2186 = vmatpush2.bf16.msra.mxu0 0
    %2187 = vmatprep.subr.bf16.mxu0 0
    %2188 = vmatpush2.bf16.msra.mxu0 0
    %2189 = vmatprep.mubr.bf16.mxu0 0
    %2190 = vmatmul.mubr.bf16.gmra.mxu0 %v2054
    %v2191 = vpop.f32.mrf.mxu0
    %v2192 = vadd.f32 0.0, %v2191
    %v2193 = vpop.f32.mrf.mxu0
    %v2194 = vpop.f32.mrf.mxu0
    %v2195 = vadd.f32 0.0, %v2194
    %v2196 = vpop.f32.mrf.mxu0
    %2197 = vdwg.mxu0
    %v2198 = vadd.f32 %v1938, %v2106
    %v2199 = vadd.f32 %v1940, %v2108
    %v2200 = vadd.f32 %v1981, %v2149
    %v2201 = vadd.f32 %v1983, %v2151
    %v2202 = vadd.f32 %v2024, %v2192
    %v2203 = vadd.f32 %v1942, %v2110
    %v2204 = vadd.f32 %v1944, %v2112
    %v2205 = vadd.f32 %v1985, %v2153
    %v2206 = vadd.f32 %v1987, %v2155
    %v2207 = vadd.f32 %v2027, %v2195
    %s2208 = scalar_lea.vmem %s4, 24
    %v2209 = vld [vmem:[%s2208] sm:$0xf]
    %v2210 = vld [vmem:[%s2208 + $0x4] sm:$0xf]
    %v2213 = vunpack.c.l.b16 %v2209
    %v2214 = vunpack.c.l.b16 %v2210
    %v2215 = vpack.c.b16 %v2214, %v2213
    %2217 = vrot.lane.b32.xlu0 %v1698, 92
    %v2218 = vpop.permute.xlu0 %2217
    %2219 = vrot.lane.b32.xlu0 %v1699, 92
    %v2220 = vpop.permute.xlu0 %2219
    %2221 = vrot.lane.b32.xlu0 %v1700, 92
    %v2222 = vpop.permute.xlu0 %2221
    %2223 = vrot.lane.b32.xlu0 %v1701, 92
    %v2224 = vpop.permute.xlu0 %2223
    %2225 = vrot.lane.b32.xlu0 %v1702, 92
    %v2226 = vpop.permute.xlu0 %2225
    %2227 = vrot.lane.b32.xlu0 %v1703, 92
    %v2228 = vpop.permute.xlu0 %2227
    %v2229 = vsel %vm1074, %v2218, %v2220
    %v2230 = vsel %vm1074, %v2220, %v2222
    %v2231 = vsel %vm1074, %v2222, %v2224
    %v2232 = vsel %vm1074, %v2224, %v2226
    %v2233 = vsel %vm1074, %v2226, %v2228
    %v2235 = vsel %vm1733, %v2215, 0
    %v2238 = vsel %vm1737, %v2229, 0
    %v2241 = vsel %vm1737, %v2230, 0
    %v2244 = vsel %vm1737, %v2231, 0
    %v2247 = vsel %vm1737, %v2232, 0
    %v2250 = vsel %vm1737, %v2233, 0
    %2252 = vmatprep.subr.bf16.mxu0 0
    %2253 = vmatpush1.bf16.msra.mxu0 0
    %2254 = vmatprep.subr.bf16.mxu0 0
    %2255 = vmatpush1.bf16.msra.mxu0 0
    %2256 = vmatprep.subr.bf16.mxu0 0
    %2257 = vmatpush1.bf16.msra.mxu0 0
    %2258 = vmatprep.subr.bf16.mxu0 0
    %2259 = vmatpush1.bf16.msra.mxu0 0
    %2260 = vmatprep.subr.bf16.mxu0 0
    %2261 = vmatpush1.bf16.msra.mxu0 0
    %2262 = vmatprep.subr.bf16.mxu0 0
    %2263 = vmatpush1.bf16.msra.mxu0 0
    %2264 = vmatprep.subr.bf16.mxu0 0
    %2265 = vmatpush1.bf16.msra.mxu0 0
    %2266 = vmatprep.subr.bf16.mxu0 %v2241
    %2267 = vmatpush1.bf16.msra.mxu0 %v2238
    %2268 = vmatprep.subr.bf16.mxu0 0
    %2269 = vmatpush2.bf16.msra.mxu0 0
    %2270 = vmatprep.subr.bf16.mxu0 0
    %2271 = vmatpush2.bf16.msra.mxu0 0
    %2272 = vmatprep.subr.bf16.mxu0 0
    %2273 = vmatpush2.bf16.msra.mxu0 0
    %2274 = vmatprep.subr.bf16.mxu0 0
    %2275 = vmatpush2.bf16.msra.mxu0 0
    %2276 = vmatprep.subr.bf16.mxu0 0
    %2277 = vmatpush2.bf16.msra.mxu0 0
    %2278 = vmatprep.subr.bf16.mxu0 0
    %2279 = vmatpush2.bf16.msra.mxu0 0
    %2280 = vmatprep.subr.bf16.mxu0 0
    %2281 = vmatpush2.bf16.msra.mxu0 0
    %2282 = vmatprep.subr.bf16.mxu0 0
    %2283 = vmatpush2.bf16.msra.mxu0 0
    %2284 = vmatprep.mubr.bf16.mxu0 0
    %2285 = vmatmul.mubr.bf16.gmra.mxu0 %v2235
    %v2286 = vpop.f32.mrf.mxu0
    %v2287 = vadd.f32 0.0, %v2286
    %v2288 = vpop.f32.mrf.mxu0
    %v2289 = vadd.f32 0.0, %v2288
    %v2290 = vpop.f32.mrf.mxu0
    %v2291 = vadd.f32 0.0, %v2290
    %v2292 = vpop.f32.mrf.mxu0
    %v2293 = vadd.f32 0.0, %v2292
    %2294 = vdwg.mxu0
    %2295 = vmatprep.subr.bf16.mxu0 0
    %2296 = vmatpush1.bf16.msra.mxu0 0
    %2297 = vmatprep.subr.bf16.mxu0 0
    %2298 = vmatpush1.bf16.msra.mxu0 0
    %2299 = vmatprep.subr.bf16.mxu0 0
    %2300 = vmatpush1.bf16.msra.mxu0 0
    %2301 = vmatprep.subr.bf16.mxu0 0
    %2302 = vmatpush1.bf16.msra.mxu0 0
    %2303 = vmatprep.subr.bf16.mxu0 0
    %2304 = vmatpush1.bf16.msra.mxu0 0
    %2305 = vmatprep.subr.bf16.mxu0 0
    %2306 = vmatpush1.bf16.msra.mxu0 0
    %2307 = vmatprep.subr.bf16.mxu0 0
    %2308 = vmatpush1.bf16.msra.mxu0 0
    %2309 = vmatprep.subr.bf16.mxu0 %v2247
    %2310 = vmatpush1.bf16.msra.mxu0 %v2244
    %2311 = vmatprep.subr.bf16.mxu0 0
    %2312 = vmatpush2.bf16.msra.mxu0 0
    %2313 = vmatprep.subr.bf16.mxu0 0
    %2314 = vmatpush2.bf16.msra.mxu0 0
    %2315 = vmatprep.subr.bf16.mxu0 0
    %2316 = vmatpush2.bf16.msra.mxu0 0
    %2317 = vmatprep.subr.bf16.mxu0 0
    %2318 = vmatpush2.bf16.msra.mxu0 0
    %2319 = vmatprep.subr.bf16.mxu0 0
    %2320 = vmatpush2.bf16.msra.mxu0 0
    %2321 = vmatprep.subr.bf16.mxu0 0
    %2322 = vmatpush2.bf16.msra.mxu0 0
    %2323 = vmatprep.subr.bf16.mxu0 0
    %2324 = vmatpush2.bf16.msra.mxu0 0
    %2325 = vmatprep.subr.bf16.mxu0 0
    %2326 = vmatpush2.bf16.msra.mxu0 0
    %2327 = vmatprep.mubr.bf16.mxu0 0
    %2328 = vmatmul.mubr.bf16.gmra.mxu0 %v2235
    %v2329 = vpop.f32.mrf.mxu0
    %v2330 = vadd.f32 0.0, %v2329
    %v2331 = vpop.f32.mrf.mxu0
    %v2332 = vadd.f32 0.0, %v2331
    %v2333 = vpop.f32.mrf.mxu0
    %v2334 = vadd.f32 0.0, %v2333
    %v2335 = vpop.f32.mrf.mxu0
    %v2336 = vadd.f32 0.0, %v2335
    %2337 = vdwg.mxu0
    %2338 = vmatprep.subr.bf16.mxu0 0
    %2339 = vmatpush1.bf16.msra.mxu0 0
    %2340 = vmatprep.subr.bf16.mxu0 0
    %2341 = vmatpush1.bf16.msra.mxu0 0
    %2342 = vmatprep.subr.bf16.mxu0 0
    %2343 = vmatpush1.bf16.msra.mxu0 0
    %2344 = vmatprep.subr.bf16.mxu0 0
    %2345 = vmatpush1.bf16.msra.mxu0 0
    %2346 = vmatprep.subr.bf16.mxu0 0
    %2347 = vmatpush1.bf16.msra.mxu0 0
    %2348 = vmatprep.subr.bf16.mxu0 0
    %2349 = vmatpush1.bf16.msra.mxu0 0
    %2350 = vmatprep.subr.bf16.mxu0 0
    %2351 = vmatpush1.bf16.msra.mxu0 0
    %2352 = vmatprep.subr.bf16.mxu0 0
    %2353 = vmatpush1.bf16.msra.mxu0 %v2250
    %2354 = vmatprep.subr.bf16.mxu0 0
    %2355 = vmatpush2.bf16.msra.mxu0 0
    %2356 = vmatprep.subr.bf16.mxu0 0
    %2357 = vmatpush2.bf16.msra.mxu0 0
    %2358 = vmatprep.subr.bf16.mxu0 0
    %2359 = vmatpush2.bf16.msra.mxu0 0
    %2360 = vmatprep.subr.bf16.mxu0 0
    %2361 = vmatpush2.bf16.msra.mxu0 0
    %2362 = vmatprep.subr.bf16.mxu0 0
    %2363 = vmatpush2.bf16.msra.mxu0 0
    %2364 = vmatprep.subr.bf16.mxu0 0
    %2365 = vmatpush2.bf16.msra.mxu0 0
    %2366 = vmatprep.subr.bf16.mxu0 0
    %2367 = vmatpush2.bf16.msra.mxu0 0
    %2368 = vmatprep.subr.bf16.mxu0 0
    %2369 = vmatpush2.bf16.msra.mxu0 0
    %2370 = vmatprep.mubr.bf16.mxu0 0
    %2371 = vmatmul.mubr.bf16.gmra.mxu0 %v2235
    %v2372 = vpop.f32.mrf.mxu0
    %v2373 = vadd.f32 0.0, %v2372
    %v2374 = vpop.f32.mrf.mxu0
    %v2375 = vpop.f32.mrf.mxu0
    %v2376 = vadd.f32 0.0, %v2375
    %v2377 = vpop.f32.mrf.mxu0
    %2378 = vdwg.mxu0
    %v2379 = vadd.f32 %v2198, %v2287
    %v2380 = vadd.f32 %v2199, %v2289
    %v2381 = vadd.f32 %v2200, %v2330
    %v2382 = vadd.f32 %v2201, %v2332
    %v2383 = vadd.f32 %v2202, %v2373
    %v2384 = vadd.f32 %v2203, %v2291
    %v2385 = vadd.f32 %v2204, %v2293
    %v2386 = vadd.f32 %v2205, %v2334
    %v2387 = vadd.f32 %v2206, %v2336
    %v2388 = vadd.f32 %v2207, %v2376
    %s2389 = scalar_lea.vmem %s4, 32
    %v2390 = vld [vmem:[%s2389] sm:$0xf]
    %v2391 = vld [vmem:[%s2389 + $0x4] sm:$0xf]
    %v2394 = vunpack.c.l.b16 %v2390
    %v2395 = vunpack.c.l.b16 %v2391
    %v2396 = vpack.c.b16 %v2395, %v2394
    %2397 = vrot.lane.b32.xlu0 %v1698, 90
    %v2398 = vpop.permute.xlu0 %2397
    %2399 = vrot.lane.b32.xlu0 %v1699, 90
    %v2400 = vpop.permute.xlu0 %2399
    %2401 = vrot.lane.b32.xlu0 %v1700, 90
    %v2402 = vpop.permute.xlu0 %2401
    %2403 = vrot.lane.b32.xlu0 %v1701, 90
    %v2404 = vpop.permute.xlu0 %2403
    %2405 = vrot.lane.b32.xlu0 %v1702, 90
    %v2406 = vpop.permute.xlu0 %2405
    %2407 = vrot.lane.b32.xlu0 %v1703, 90
    %v2408 = vpop.permute.xlu0 %2407
    %v2409 = vsel %vm1414, %v2398, %v2400
    %v2410 = vsel %vm1414, %v2400, %v2402
    %v2411 = vsel %vm1414, %v2402, %v2404
    %v2412 = vsel %vm1414, %v2404, %v2406
    %v2413 = vsel %vm1414, %v2406, %v2408
    %v2415 = vsel %vm1733, %v2396, 0
    %v2418 = vsel %vm1737, %v2409, 0
    %v2421 = vsel %vm1737, %v2410, 0
    %v2424 = vsel %vm1737, %v2411, 0
    %v2427 = vsel %vm1737, %v2412, 0
    %v2430 = vsel %vm1737, %v2413, 0
    %2432 = vmatprep.subr.bf16.mxu0 0
    %2433 = vmatpush1.bf16.msra.mxu0 0
    %2434 = vmatprep.subr.bf16.mxu0 0
    %2435 = vmatpush1.bf16.msra.mxu0 0
    %2436 = vmatprep.subr.bf16.mxu0 0
    %2437 = vmatpush1.bf16.msra.mxu0 0
    %2438 = vmatprep.subr.bf16.mxu0 0
    %2439 = vmatpush1.bf16.msra.mxu0 0
    %2440 = vmatprep.subr.bf16.mxu0 0
    %2441 = vmatpush1.bf16.msra.mxu0 0
    %2442 = vmatprep.subr.bf16.mxu0 0
    %2443 = vmatpush1.bf16.msra.mxu0 0
    %2444 = vmatprep.subr.bf16.mxu0 0
    %2445 = vmatpush1.bf16.msra.mxu0 0
    %2446 = vmatprep.subr.bf16.mxu0 %v2421
    %2447 = vmatpush1.bf16.msra.mxu0 %v2418
    %2448 = vmatprep.subr.bf16.mxu0 0
    %2449 = vmatpush2.bf16.msra.mxu0 0
    %2450 = vmatprep.subr.bf16.mxu0 0
    %2451 = vmatpush2.bf16.msra.mxu0 0
    %2452 = vmatprep.subr.bf16.mxu0 0
    %2453 = vmatpush2.bf16.msra.mxu0 0
    %2454 = vmatprep.subr.bf16.mxu0 0
    %2455 = vmatpush2.bf16.msra.mxu0 0
    %2456 = vmatprep.subr.bf16.mxu0 0
    %2457 = vmatpush2.bf16.msra.mxu0 0
    %2458 = vmatprep.subr.bf16.mxu0 0
    %2459 = vmatpush2.bf16.msra.mxu0 0
    %2460 = vmatprep.subr.bf16.mxu0 0
    %2461 = vmatpush2.bf16.msra.mxu0 0
    %2462 = vmatprep.subr.bf16.mxu0 0
    %2463 = vmatpush2.bf16.msra.mxu0 0
    %2464 = vmatprep.mubr.bf16.mxu0 0
    %2465 = vmatmul.mubr.bf16.gmra.mxu0 %v2415
    %v2466 = vpop.f32.mrf.mxu0
    %v2467 = vadd.f32 0.0, %v2466
    %v2468 = vpop.f32.mrf.mxu0
    %v2469 = vadd.f32 0.0, %v2468
    %v2470 = vpop.f32.mrf.mxu0
    %v2471 = vadd.f32 0.0, %v2470
    %v2472 = vpop.f32.mrf.mxu0
    %v2473 = vadd.f32 0.0, %v2472
    %2474 = vdwg.mxu0
    %2475 = vmatprep.subr.bf16.mxu0 0
    %2476 = vmatpush1.bf16.msra.mxu0 0
    %2477 = vmatprep.subr.bf16.mxu0 0
    %2478 = vmatpush1.bf16.msra.mxu0 0
    %2479 = vmatprep.subr.bf16.mxu0 0
    %2480 = vmatpush1.bf16.msra.mxu0 0
    %2481 = vmatprep.subr.bf16.mxu0 0
    %2482 = vmatpush1.bf16.msra.mxu0 0
    %2483 = vmatprep.subr.bf16.mxu0 0
    %2484 = vmatpush1.bf16.msra.mxu0 0
    %2485 = vmatprep.subr.bf16.mxu0 0
    %2486 = vmatpush1.bf16.msra.mxu0 0
    %2487 = vmatprep.subr.bf16.mxu0 0
    %2488 = vmatpush1.bf16.msra.mxu0 0
    %2489 = vmatprep.subr.bf16.mxu0 %v2427
    %2490 = vmatpush1.bf16.msra.mxu0 %v2424
    %2491 = vmatprep.subr.bf16.mxu0 0
    %2492 = vmatpush2.bf16.msra.mxu0 0
    %2493 = vmatprep.subr.bf16.mxu0 0
    %2494 = vmatpush2.bf16.msra.mxu0 0
    %2495 = vmatprep.subr.bf16.mxu0 0
    %2496 = vmatpush2.bf16.msra.mxu0 0
    %2497 = vmatprep.subr.bf16.mxu0 0
    %2498 = vmatpush2.bf16.msra.mxu0 0
    %2499 = vmatprep.subr.bf16.mxu0 0
    %2500 = vmatpush2.bf16.msra.mxu0 0
    %2501 = vmatprep.subr.bf16.mxu0 0
    %2502 = vmatpush2.bf16.msra.mxu0 0
    %2503 = vmatprep.subr.bf16.mxu0 0
    %2504 = vmatpush2.bf16.msra.mxu0 0
    %2505 = vmatprep.subr.bf16.mxu0 0
    %2506 = vmatpush2.bf16.msra.mxu0 0
    %2507 = vmatprep.mubr.bf16.mxu0 0
    %2508 = vmatmul.mubr.bf16.gmra.mxu0 %v2415
    %v2509 = vpop.f32.mrf.mxu0
    %v2510 = vadd.f32 0.0, %v2509
    %v2511 = vpop.f32.mrf.mxu0
    %v2512 = vadd.f32 0.0, %v2511
    %v2513 = vpop.f32.mrf.mxu0
    %v2514 = vadd.f32 0.0, %v2513
    %v2515 = vpop.f32.mrf.mxu0
    %v2516 = vadd.f32 0.0, %v2515
    %2517 = vdwg.mxu0
    %2518 = vmatprep.subr.bf16.mxu0 0
    %2519 = vmatpush1.bf16.msra.mxu0 0
    %2520 = vmatprep.subr.bf16.mxu0 0
    %2521 = vmatpush1.bf16.msra.mxu0 0
    %2522 = vmatprep.subr.bf16.mxu0 0
    %2523 = vmatpush1.bf16.msra.mxu0 0
    %2524 = vmatprep.subr.bf16.mxu0 0
    %2525 = vmatpush1.bf16.msra.mxu0 0
    %2526 = vmatprep.subr.bf16.mxu0 0
    %2527 = vmatpush1.bf16.msra.mxu0 0
    %2528 = vmatprep.subr.bf16.mxu0 0
    %2529 = vmatpush1.bf16.msra.mxu0 0
    %2530 = vmatprep.subr.bf16.mxu0 0
    %2531 = vmatpush1.bf16.msra.mxu0 0
    %2532 = vmatprep.subr.bf16.mxu0 0
    %2533 = vmatpush1.bf16.msra.mxu0 %v2430
    %2534 = vmatprep.subr.bf16.mxu0 0
    %2535 = vmatpush2.bf16.msra.mxu0 0
    %2536 = vmatprep.subr.bf16.mxu0 0
    %2537 = vmatpush2.bf16.msra.mxu0 0
    %2538 = vmatprep.subr.bf16.mxu0 0
    %2539 = vmatpush2.bf16.msra.mxu0 0
    %2540 = vmatprep.subr.bf16.mxu0 0
    %2541 = vmatpush2.bf16.msra.mxu0 0
    %2542 = vmatprep.subr.bf16.mxu0 0
    %2543 = vmatpush2.bf16.msra.mxu0 0
    %2544 = vmatprep.subr.bf16.mxu0 0
    %2545 = vmatpush2.bf16.msra.mxu0 0
    %2546 = vmatprep.subr.bf16.mxu0 0
    %2547 = vmatpush2.bf16.msra.mxu0 0
    %2548 = vmatprep.subr.bf16.mxu0 0
    %2549 = vmatpush2.bf16.msra.mxu0 0
    %2550 = vmatprep.mubr.bf16.mxu0 0
    %2551 = vmatmul.mubr.bf16.gmra.mxu0 %v2415
    %v2552 = vpop.f32.mrf.mxu0
    %v2553 = vadd.f32 0.0, %v2552
    %v2554 = vpop.f32.mrf.mxu0
    %v2555 = vpop.f32.mrf.mxu0
    %v2556 = vadd.f32 0.0, %v2555
    %v2557 = vpop.f32.mrf.mxu0
    %2558 = vdwg.mxu0
    %v2559 = vadd.f32 %v2379, %v2467
    %v2560 = vadd.f32 %v2380, %v2469
    %v2561 = vadd.f32 %v2381, %v2510
    %v2562 = vadd.f32 %v2382, %v2512
    %v2563 = vadd.f32 %v2383, %v2553
    %v2564 = vadd.f32 %v2384, %v2471
    %v2565 = vadd.f32 %v2385, %v2473
    %v2566 = vadd.f32 %v2386, %v2514
    %v2567 = vadd.f32 %v2387, %v2516
    %v2568 = vadd.f32 %v2388, %v2556
    %s2569 = scalar_lea.vmem %s4, 40
    %v2570 = vld [vmem:[%s2569] sm:$0xf]
    %v2571 = vld [vmem:[%s2569 + $0x4] sm:$0xf]
    %v2574 = vunpack.c.l.b16 %v2570
    %v2575 = vunpack.c.l.b16 %v2571
    %v2576 = vpack.c.b16 %v2575, %v2574
    %2577 = vrot.lane.b32.xlu0 %v1698, 88
    %v2578 = vpop.permute.xlu0 %2577
    %2579 = vrot.lane.b32.xlu0 %v1699, 88
    %v2580 = vpop.permute.xlu0 %2579
    %2581 = vrot.lane.b32.xlu0 %v1700, 88
    %v2582 = vpop.permute.xlu0 %2581
    %2583 = vrot.lane.b32.xlu0 %v1701, 88
    %v2584 = vpop.permute.xlu0 %2583
    %2585 = vrot.lane.b32.xlu0 %v1702, 88
    %v2586 = vpop.permute.xlu0 %2585
    %2587 = vrot.lane.b32.xlu0 %v1703, 88
    %v2588 = vpop.permute.xlu0 %2587
    %vm2589 = vcmask 719872
    %v2590 = vsel %vm2589, %v2578, %v2580
    %v2591 = vsel %vm2589, %v2580, %v2582
    %v2592 = vsel %vm2589, %v2582, %v2584
    %v2593 = vsel %vm2589, %v2584, %v2586
    %v2594 = vsel %vm2589, %v2586, %v2588
    %v2596 = vsel %vm1733, %v2576, 0
    %v2599 = vsel %vm1737, %v2590, 0
    %v2602 = vsel %vm1737, %v2591, 0
    %v2605 = vsel %vm1737, %v2592, 0
    %v2608 = vsel %vm1737, %v2593, 0
    %v2611 = vsel %vm1737, %v2594, 0
    %2613 = vmatprep.subr.bf16.mxu0 0
    %2614 = vmatpush1.bf16.msra.mxu0 0
    %2615 = vmatprep.subr.bf16.mxu0 0
    %2616 = vmatpush1.bf16.msra.mxu0 0
    %2617 = vmatprep.subr.bf16.mxu0 0
    %2618 = vmatpush1.bf16.msra.mxu0 0
    %2619 = vmatprep.subr.bf16.mxu0 0
    %2620 = vmatpush1.bf16.msra.mxu0 0
    %2621 = vmatprep.subr.bf16.mxu0 0
    %2622 = vmatpush1.bf16.msra.mxu0 0
    %2623 = vmatprep.subr.bf16.mxu0 0
    %2624 = vmatpush1.bf16.msra.mxu0 0
    %2625 = vmatprep.subr.bf16.mxu0 0
    %2626 = vmatpush1.bf16.msra.mxu0 0
    %2627 = vmatprep.subr.bf16.mxu0 %v2602
    %2628 = vmatpush1.bf16.msra.mxu0 %v2599
    %2629 = vmatprep.subr.bf16.mxu0 0
    %2630 = vmatpush2.bf16.msra.mxu0 0
    %2631 = vmatprep.subr.bf16.mxu0 0
    %2632 = vmatpush2.bf16.msra.mxu0 0
    %2633 = vmatprep.subr.bf16.mxu0 0
    %2634 = vmatpush2.bf16.msra.mxu0 0
    %2635 = vmatprep.subr.bf16.mxu0 0
    %2636 = vmatpush2.bf16.msra.mxu0 0
    %2637 = vmatprep.subr.bf16.mxu0 0
    %2638 = vmatpush2.bf16.msra.mxu0 0
    %2639 = vmatprep.subr.bf16.mxu0 0
    %2640 = vmatpush2.bf16.msra.mxu0 0
    %2641 = vmatprep.subr.bf16.mxu0 0
    %2642 = vmatpush2.bf16.msra.mxu0 0
    %2643 = vmatprep.subr.bf16.mxu0 0
    %2644 = vmatpush2.bf16.msra.mxu0 0
    %2645 = vmatprep.mubr.bf16.mxu0 0
    %2646 = vmatmul.mubr.bf16.gmra.mxu0 %v2596
    %v2647 = vpop.f32.mrf.mxu0
    %v2648 = vadd.f32 0.0, %v2647
    %v2649 = vpop.f32.mrf.mxu0
    %v2650 = vadd.f32 0.0, %v2649
    %v2651 = vpop.f32.mrf.mxu0
    %v2652 = vadd.f32 0.0, %v2651
    %v2653 = vpop.f32.mrf.mxu0
    %v2654 = vadd.f32 0.0, %v2653
    %2655 = vdwg.mxu0
    %2656 = vmatprep.subr.bf16.mxu0 0
    %2657 = vmatpush1.bf16.msra.mxu0 0
    %2658 = vmatprep.subr.bf16.mxu0 0
    %2659 = vmatpush1.bf16.msra.mxu0 0
    %2660 = vmatprep.subr.bf16.mxu0 0
    %2661 = vmatpush1.bf16.msra.mxu0 0
    %2662 = vmatprep.subr.bf16.mxu0 0
    %2663 = vmatpush1.bf16.msra.mxu0 0
    %2664 = vmatprep.subr.bf16.mxu0 0
    %2665 = vmatpush1.bf16.msra.mxu0 0
    %2666 = vmatprep.subr.bf16.mxu0 0
    %2667 = vmatpush1.bf16.msra.mxu0 0
    %2668 = vmatprep.subr.bf16.mxu0 0
    %2669 = vmatpush1.bf16.msra.mxu0 0
    %2670 = vmatprep.subr.bf16.mxu0 %v2608
    %2671 = vmatpush1.bf16.msra.mxu0 %v2605
    %2672 = vmatprep.subr.bf16.mxu0 0
    %2673 = vmatpush2.bf16.msra.mxu0 0
    %2674 = vmatprep.subr.bf16.mxu0 0
    %2675 = vmatpush2.bf16.msra.mxu0 0
    %2676 = vmatprep.subr.bf16.mxu0 0
    %2677 = vmatpush2.bf16.msra.mxu0 0
    %2678 = vmatprep.subr.bf16.mxu0 0
    %2679 = vmatpush2.bf16.msra.mxu0 0
    %2680 = vmatprep.subr.bf16.mxu0 0
    %2681 = vmatpush2.bf16.msra.mxu0 0
    %2682 = vmatprep.subr.bf16.mxu0 0
    %2683 = vmatpush2.bf16.msra.mxu0 0
    %2684 = vmatprep.subr.bf16.mxu0 0
    %2685 = vmatpush2.bf16.msra.mxu0 0
    %2686 = vmatprep.subr.bf16.mxu0 0
    %2687 = vmatpush2.bf16.msra.mxu0 0
    %2688 = vmatprep.mubr.bf16.mxu0 0
    %2689 = vmatmul.mubr.bf16.gmra.mxu0 %v2596
    %v2690 = vpop.f32.mrf.mxu0
    %v2691 = vadd.f32 0.0, %v2690
    %v2692 = vpop.f32.mrf.mxu0
    %v2693 = vadd.f32 0.0, %v2692
    %v2694 = vpop.f32.mrf.mxu0
    %v2695 = vadd.f32 0.0, %v2694
    %v2696 = vpop.f32.mrf.mxu0
    %v2697 = vadd.f32 0.0, %v2696
    %2698 = vdwg.mxu0
    %2699 = vmatprep.subr.bf16.mxu0 0
    %2700 = vmatpush1.bf16.msra.mxu0 0
    %2701 = vmatprep.subr.bf16.mxu0 0
    %2702 = vmatpush1.bf16.msra.mxu0 0
    %2703 = vmatprep.subr.bf16.mxu0 0
    %2704 = vmatpush1.bf16.msra.mxu0 0
    %2705 = vmatprep.subr.bf16.mxu0 0
    %2706 = vmatpush1.bf16.msra.mxu0 0
    %2707 = vmatprep.subr.bf16.mxu0 0
    %2708 = vmatpush1.bf16.msra.mxu0 0
    %2709 = vmatprep.subr.bf16.mxu0 0
    %2710 = vmatpush1.bf16.msra.mxu0 0
    %2711 = vmatprep.subr.bf16.mxu0 0
    %2712 = vmatpush1.bf16.msra.mxu0 0
    %2713 = vmatprep.subr.bf16.mxu0 0
    %2714 = vmatpush1.bf16.msra.mxu0 %v2611
    %2715 = vmatprep.subr.bf16.mxu0 0
    %2716 = vmatpush2.bf16.msra.mxu0 0
    %2717 = vmatprep.subr.bf16.mxu0 0
    %2718 = vmatpush2.bf16.msra.mxu0 0
    %2719 = vmatprep.subr.bf16.mxu0 0
    %2720 = vmatpush2.bf16.msra.mxu0 0
    %2721 = vmatprep.subr.bf16.mxu0 0
    %2722 = vmatpush2.bf16.msra.mxu0 0
    %2723 = vmatprep.subr.bf16.mxu0 0
    %2724 = vmatpush2.bf16.msra.mxu0 0
    %2725 = vmatprep.subr.bf16.mxu0 0
    %2726 = vmatpush2.bf16.msra.mxu0 0
    %2727 = vmatprep.subr.bf16.mxu0 0
    %2728 = vmatpush2.bf16.msra.mxu0 0
    %2729 = vmatprep.subr.bf16.mxu0 0
    %2730 = vmatpush2.bf16.msra.mxu0 0
    %2731 = vmatprep.mubr.bf16.mxu0 0
    %2732 = vmatmul.mubr.bf16.gmra.mxu0 %v2596
    %v2733 = vpop.f32.mrf.mxu0
    %v2734 = vadd.f32 0.0, %v2733
    %v2735 = vpop.f32.mrf.mxu0
    %v2736 = vpop.f32.mrf.mxu0
    %v2737 = vadd.f32 0.0, %v2736
    %v2738 = vpop.f32.mrf.mxu0
    %2739 = vdwg.mxu0
    %v2740 = vadd.f32 %v2559, %v2648
    %v2741 = vadd.f32 %v2560, %v2650
    %v2742 = vadd.f32 %v2561, %v2691
    %v2743 = vadd.f32 %v2562, %v2693
    %v2744 = vadd.f32 %v2563, %v2734
    %v2745 = vadd.f32 %v2564, %v2652
    %v2746 = vadd.f32 %v2565, %v2654
    %v2747 = vadd.f32 %v2566, %v2695
    %v2748 = vadd.f32 %v2567, %v2697
    %v2749 = vadd.f32 %v2568, %v2737
    %s2750 = scalar_lea.vmem %s4, 48
    %v2751 = vld [vmem:[%s2750] sm:$0xf]
    %v2752 = vld [vmem:[%s2750 + $0x4] sm:$0xf]
    %v2755 = vunpack.c.l.b16 %v2751
    %v2756 = vunpack.c.l.b16 %v2752
    %v2757 = vpack.c.b16 %v2756, %v2755
    %2758 = vrot.lane.b32.xlu0 %v1698, 56
    %v2759 = vpop.permute.xlu0 %2758
    %2760 = vrot.lane.b32.xlu0 %v1699, 56
    %v2761 = vpop.permute.xlu0 %2760
    %2762 = vrot.lane.b32.xlu0 %v1700, 56
    %v2763 = vpop.permute.xlu0 %2762
    %2764 = vrot.lane.b32.xlu0 %v1701, 56
    %v2765 = vpop.permute.xlu0 %2764
    %2766 = vrot.lane.b32.xlu0 %v1702, 56
    %v2767 = vpop.permute.xlu0 %2766
    %2768 = vrot.lane.b32.xlu0 %v1703, 56
    %v2769 = vpop.permute.xlu0 %2768
    %vm2770 = vcmask 457728
    %v2771 = vsel %vm2770, %v2759, %v2761
    %v2772 = vsel %vm2770, %v2761, %v2763
    %v2773 = vsel %vm2770, %v2763, %v2765
    %v2774 = vsel %vm2770, %v2765, %v2767
    %v2775 = vsel %vm2770, %v2767, %v2769
    %v2777 = vsel %vm1733, %v2757, 0
    %v2780 = vsel %vm1737, %v2771, 0
    %v2783 = vsel %vm1737, %v2772, 0
    %v2786 = vsel %vm1737, %v2773, 0
    %v2789 = vsel %vm1737, %v2774, 0
    %v2792 = vsel %vm1737, %v2775, 0
    %2794 = vmatprep.subr.bf16.mxu0 0
    %2795 = vmatpush1.bf16.msra.mxu0 0
    %2796 = vmatprep.subr.bf16.mxu0 0
    %2797 = vmatpush1.bf16.msra.mxu0 0
    %2798 = vmatprep.subr.bf16.mxu0 0
    %2799 = vmatpush1.bf16.msra.mxu0 0
    %2800 = vmatprep.subr.bf16.mxu0 0
    %2801 = vmatpush1.bf16.msra.mxu0 0
    %2802 = vmatprep.subr.bf16.mxu0 0
    %2803 = vmatpush1.bf16.msra.mxu0 0
    %2804 = vmatprep.subr.bf16.mxu0 0
    %2805 = vmatpush1.bf16.msra.mxu0 0
    %2806 = vmatprep.subr.bf16.mxu0 0
    %2807 = vmatpush1.bf16.msra.mxu0 0
    %2808 = vmatprep.subr.bf16.mxu0 %v2783
    %2809 = vmatpush1.bf16.msra.mxu0 %v2780
    %2810 = vmatprep.subr.bf16.mxu0 0
    %2811 = vmatpush2.bf16.msra.mxu0 0
    %2812 = vmatprep.subr.bf16.mxu0 0
    %2813 = vmatpush2.bf16.msra.mxu0 0
    %2814 = vmatprep.subr.bf16.mxu0 0
    %2815 = vmatpush2.bf16.msra.mxu0 0
    %2816 = vmatprep.subr.bf16.mxu0 0
    %2817 = vmatpush2.bf16.msra.mxu0 0
    %2818 = vmatprep.subr.bf16.mxu0 0
    %2819 = vmatpush2.bf16.msra.mxu0 0
    %2820 = vmatprep.subr.bf16.mxu0 0
    %2821 = vmatpush2.bf16.msra.mxu0 0
    %2822 = vmatprep.subr.bf16.mxu0 0
    %2823 = vmatpush2.bf16.msra.mxu0 0
    %2824 = vmatprep.subr.bf16.mxu0 0
    %2825 = vmatpush2.bf16.msra.mxu0 0
    %2826 = vmatprep.mubr.bf16.mxu0 0
    %2827 = vmatmul.mubr.bf16.gmra.mxu0 %v2777
    %v2828 = vpop.f32.mrf.mxu0
    %v2829 = vadd.f32 0.0, %v2828
    %v2830 = vpop.f32.mrf.mxu0
    %v2831 = vadd.f32 0.0, %v2830
    %v2832 = vpop.f32.mrf.mxu0
    %v2833 = vadd.f32 0.0, %v2832
    %v2834 = vpop.f32.mrf.mxu0
    %v2835 = vadd.f32 0.0, %v2834
    %2836 = vdwg.mxu0
    %2837 = vmatprep.subr.bf16.mxu0 0
    %2838 = vmatpush1.bf16.msra.mxu0 0
    %2839 = vmatprep.subr.bf16.mxu0 0
    %2840 = vmatpush1.bf16.msra.mxu0 0
    %2841 = vmatprep.subr.bf16.mxu0 0
    %2842 = vmatpush1.bf16.msra.mxu0 0
    %2843 = vmatprep.subr.bf16.mxu0 0
    %2844 = vmatpush1.bf16.msra.mxu0 0
    %2845 = vmatprep.subr.bf16.mxu0 0
    %2846 = vmatpush1.bf16.msra.mxu0 0
    %2847 = vmatprep.subr.bf16.mxu0 0
    %2848 = vmatpush1.bf16.msra.mxu0 0
    %2849 = vmatprep.subr.bf16.mxu0 0
    %2850 = vmatpush1.bf16.msra.mxu0 0
    %2851 = vmatprep.subr.bf16.mxu0 %v2789
    %2852 = vmatpush1.bf16.msra.mxu0 %v2786
    %2853 = vmatprep.subr.bf16.mxu0 0
    %2854 = vmatpush2.bf16.msra.mxu0 0
    %2855 = vmatprep.subr.bf16.mxu0 0
    %2856 = vmatpush2.bf16.msra.mxu0 0
    %2857 = vmatprep.subr.bf16.mxu0 0
    %2858 = vmatpush2.bf16.msra.mxu0 0
    %2859 = vmatprep.subr.bf16.mxu0 0
    %2860 = vmatpush2.bf16.msra.mxu0 0
    %2861 = vmatprep.subr.bf16.mxu0 0
    %2862 = vmatpush2.bf16.msra.mxu0 0
    %2863 = vmatprep.subr.bf16.mxu0 0
    %2864 = vmatpush2.bf16.msra.mxu0 0
    %2865 = vmatprep.subr.bf16.mxu0 0
    %2866 = vmatpush2.bf16.msra.mxu0 0
    %2867 = vmatprep.subr.bf16.mxu0 0
    %2868 = vmatpush2.bf16.msra.mxu0 0
    %2869 = vmatprep.mubr.bf16.mxu0 0
    %2870 = vmatmul.mubr.bf16.gmra.mxu0 %v2777
    %v2871 = vpop.f32.mrf.mxu0
    %v2872 = vadd.f32 0.0, %v2871
    %v2873 = vpop.f32.mrf.mxu0
    %v2874 = vadd.f32 0.0, %v2873
    %v2875 = vpop.f32.mrf.mxu0
    %v2876 = vadd.f32 0.0, %v2875
    %v2877 = vpop.f32.mrf.mxu0
    %v2878 = vadd.f32 0.0, %v2877
    %2879 = vdwg.mxu0
    %2880 = vmatprep.subr.bf16.mxu0 0
    %2881 = vmatpush1.bf16.msra.mxu0 0
    %2882 = vmatprep.subr.bf16.mxu0 0
    %2883 = vmatpush1.bf16.msra.mxu0 0
    %2884 = vmatprep.subr.bf16.mxu0 0
    %2885 = vmatpush1.bf16.msra.mxu0 0
    %2886 = vmatprep.subr.bf16.mxu0 0
    %2887 = vmatpush1.bf16.msra.mxu0 0
    %2888 = vmatprep.subr.bf16.mxu0 0
    %2889 = vmatpush1.bf16.msra.mxu0 0
    %2890 = vmatprep.subr.bf16.mxu0 0
    %2891 = vmatpush1.bf16.msra.mxu0 0
    %2892 = vmatprep.subr.bf16.mxu0 0
    %2893 = vmatpush1.bf16.msra.mxu0 0
    %2894 = vmatprep.subr.bf16.mxu0 0
    %2895 = vmatpush1.bf16.msra.mxu0 %v2792
    %2896 = vmatprep.subr.bf16.mxu0 0
    %2897 = vmatpush2.bf16.msra.mxu0 0
    %2898 = vmatprep.subr.bf16.mxu0 0
    %2899 = vmatpush2.bf16.msra.mxu0 0
    %2900 = vmatprep.subr.bf16.mxu0 0
    %2901 = vmatpush2.bf16.msra.mxu0 0
    %2902 = vmatprep.subr.bf16.mxu0 0
    %2903 = vmatpush2.bf16.msra.mxu0 0
    %2904 = vmatprep.subr.bf16.mxu0 0
    %2905 = vmatpush2.bf16.msra.mxu0 0
    %2906 = vmatprep.subr.bf16.mxu0 0
    %2907 = vmatpush2.bf16.msra.mxu0 0
    %2908 = vmatprep.subr.bf16.mxu0 0
    %2909 = vmatpush2.bf16.msra.mxu0 0
    %2910 = vmatprep.subr.bf16.mxu0 0
    %2911 = vmatpush2.bf16.msra.mxu0 0
    %2912 = vmatprep.mubr.bf16.mxu0 0
    %2913 = vmatmul.mubr.bf16.gmra.mxu0 %v2777
    %v2914 = vpop.f32.mrf.mxu0
    %v2915 = vadd.f32 0.0, %v2914
    %v2916 = vpop.f32.mrf.mxu0
    %v2917 = vpop.f32.mrf.mxu0
    %v2918 = vadd.f32 0.0, %v2917
    %v2919 = vpop.f32.mrf.mxu0
    %2920 = vdwg.mxu0
    %v2921 = vadd.f32 %v2740, %v2829
    %v2922 = vadd.f32 %v2741, %v2831
    %v2923 = vadd.f32 %v2742, %v2872
    %v2924 = vadd.f32 %v2743, %v2874
    %v2925 = vadd.f32 %v2744, %v2915
    %v2926 = vadd.f32 %v2745, %v2833
    %v2927 = vadd.f32 %v2746, %v2835
    %v2928 = vadd.f32 %v2747, %v2876
    %v2929 = vadd.f32 %v2748, %v2878
    %v2930 = vadd.f32 %v2749, %v2918
    %s2931 = scalar_lea.vmem %s4, 56
    %v2932 = vld [vmem:[%s2931] sm:$0xf]
    %v2933 = vld [vmem:[%s2931 + $0x4] sm:$0xf]
    %v2936 = vunpack.c.l.b16 %v2932
    %v2937 = vunpack.c.l.b16 %v2933
    %v2938 = vpack.c.b16 %v2937, %v2936
    %2939 = vrot.lane.b32.xlu0 %v1698, 54
    %v2940 = vpop.permute.xlu0 %2939
    %2941 = vrot.lane.b32.xlu0 %v1699, 54
    %v2942 = vpop.permute.xlu0 %2941
    %2943 = vrot.lane.b32.xlu0 %v1700, 54
    %v2944 = vpop.permute.xlu0 %2943
    %2945 = vrot.lane.b32.xlu0 %v1701, 54
    %v2946 = vpop.permute.xlu0 %2945
    %2947 = vrot.lane.b32.xlu0 %v1702, 54
    %v2948 = vpop.permute.xlu0 %2947
    %2949 = vrot.lane.b32.xlu0 %v1703, 54
    %v2950 = vpop.permute.xlu0 %2949
    %vm2951 = vcmask 441344
    %v2952 = vsel %vm2951, %v2940, %v2942
    %v2953 = vsel %vm2951, %v2942, %v2944
    %v2954 = vsel %vm2951, %v2944, %v2946
    %v2955 = vsel %vm2951, %v2946, %v2948
    %v2956 = vsel %vm2951, %v2948, %v2950
    %v2958 = vsel %vm1733, %v2938, 0
    %v2961 = vsel %vm1737, %v2952, 0
    %v2964 = vsel %vm1737, %v2953, 0
    %v2967 = vsel %vm1737, %v2954, 0
    %v2970 = vsel %vm1737, %v2955, 0
    %v2973 = vsel %vm1737, %v2956, 0
    %2975 = vmatprep.subr.bf16.mxu0 0
    %2976 = vmatpush1.bf16.msra.mxu0 0
    %2977 = vmatprep.subr.bf16.mxu0 0
    %2978 = vmatpush1.bf16.msra.mxu0 0
    %2979 = vmatprep.subr.bf16.mxu0 0
    %2980 = vmatpush1.bf16.msra.mxu0 0
    %2981 = vmatprep.subr.bf16.mxu0 0
    %2982 = vmatpush1.bf16.msra.mxu0 0
    %2983 = vmatprep.subr.bf16.mxu0 0
    %2984 = vmatpush1.bf16.msra.mxu0 0
    %2985 = vmatprep.subr.bf16.mxu0 0
    %2986 = vmatpush1.bf16.msra.mxu0 0
    %2987 = vmatprep.subr.bf16.mxu0 0
    %2988 = vmatpush1.bf16.msra.mxu0 0
    %2989 = vmatprep.subr.bf16.mxu0 %v2964
    %2990 = vmatpush1.bf16.msra.mxu0 %v2961
    %2991 = vmatprep.subr.bf16.mxu0 0
    %2992 = vmatpush2.bf16.msra.mxu0 0
    %2993 = vmatprep.subr.bf16.mxu0 0
    %2994 = vmatpush2.bf16.msra.mxu0 0
    %2995 = vmatprep.subr.bf16.mxu0 0
    %2996 = vmatpush2.bf16.msra.mxu0 0
    %2997 = vmatprep.subr.bf16.mxu0 0
    %2998 = vmatpush2.bf16.msra.mxu0 0
    %2999 = vmatprep.subr.bf16.mxu0 0
    %3000 = vmatpush2.bf16.msra.mxu0 0
    %3001 = vmatprep.subr.bf16.mxu0 0
    %3002 = vmatpush2.bf16.msra.mxu0 0
    %3003 = vmatprep.subr.bf16.mxu0 0
    %3004 = vmatpush2.bf16.msra.mxu0 0
    %3005 = vmatprep.subr.bf16.mxu0 0
    %3006 = vmatpush2.bf16.msra.mxu0 0
    %3007 = vmatprep.mubr.bf16.mxu0 0
    %3008 = vmatmul.mubr.bf16.gmra.mxu0 %v2958
    %v3009 = vpop.f32.mrf.mxu0
    %v3010 = vadd.f32 0.0, %v3009
    %v3011 = vpop.f32.mrf.mxu0
    %v3012 = vadd.f32 0.0, %v3011
    %v3013 = vpop.f32.mrf.mxu0
    %v3014 = vadd.f32 0.0, %v3013
    %v3015 = vpop.f32.mrf.mxu0
    %v3016 = vadd.f32 0.0, %v3015
    %3017 = vdwg.mxu0
    %3018 = vmatprep.subr.bf16.mxu0 0
    %3019 = vmatpush1.bf16.msra.mxu0 0
    %3020 = vmatprep.subr.bf16.mxu0 0
    %3021 = vmatpush1.bf16.msra.mxu0 0
    %3022 = vmatprep.subr.bf16.mxu0 0
    %3023 = vmatpush1.bf16.msra.mxu0 0
    %3024 = vmatprep.subr.bf16.mxu0 0
    %3025 = vmatpush1.bf16.msra.mxu0 0
    %3026 = vmatprep.subr.bf16.mxu0 0
    %3027 = vmatpush1.bf16.msra.mxu0 0
    %3028 = vmatprep.subr.bf16.mxu0 0
    %3029 = vmatpush1.bf16.msra.mxu0 0
    %3030 = vmatprep.subr.bf16.mxu0 0
    %3031 = vmatpush1.bf16.msra.mxu0 0
    %3032 = vmatprep.subr.bf16.mxu0 %v2970
    %3033 = vmatpush1.bf16.msra.mxu0 %v2967
    %3034 = vmatprep.subr.bf16.mxu0 0
    %3035 = vmatpush2.bf16.msra.mxu0 0
    %3036 = vmatprep.subr.bf16.mxu0 0
    %3037 = vmatpush2.bf16.msra.mxu0 0
    %3038 = vmatprep.subr.bf16.mxu0 0
    %3039 = vmatpush2.bf16.msra.mxu0 0
    %3040 = vmatprep.subr.bf16.mxu0 0
    %3041 = vmatpush2.bf16.msra.mxu0 0
    %3042 = vmatprep.subr.bf16.mxu0 0
    %3043 = vmatpush2.bf16.msra.mxu0 0
    %3044 = vmatprep.subr.bf16.mxu0 0
    %3045 = vmatpush2.bf16.msra.mxu0 0
    %3046 = vmatprep.subr.bf16.mxu0 0
    %3047 = vmatpush2.bf16.msra.mxu0 0
    %3048 = vmatprep.subr.bf16.mxu0 0
    %3049 = vmatpush2.bf16.msra.mxu0 0
    %3050 = vmatprep.mubr.bf16.mxu0 0
    %3051 = vmatmul.mubr.bf16.gmra.mxu0 %v2958
    %v3052 = vpop.f32.mrf.mxu0
    %v3053 = vadd.f32 0.0, %v3052
    %v3054 = vpop.f32.mrf.mxu0
    %v3055 = vadd.f32 0.0, %v3054
    %v3056 = vpop.f32.mrf.mxu0
    %v3057 = vadd.f32 0.0, %v3056
    %v3058 = vpop.f32.mrf.mxu0
    %v3059 = vadd.f32 0.0, %v3058
    %3060 = vdwg.mxu0
    %3061 = vmatprep.subr.bf16.mxu0 0
    %3062 = vmatpush1.bf16.msra.mxu0 0
    %3063 = vmatprep.subr.bf16.mxu0 0
    %3064 = vmatpush1.bf16.msra.mxu0 0
    %3065 = vmatprep.subr.bf16.mxu0 0
    %3066 = vmatpush1.bf16.msra.mxu0 0
    %3067 = vmatprep.subr.bf16.mxu0 0
    %3068 = vmatpush1.bf16.msra.mxu0 0
    %3069 = vmatprep.subr.bf16.mxu0 0
    %3070 = vmatpush1.bf16.msra.mxu0 0
    %3071 = vmatprep.subr.bf16.mxu0 0
    %3072 = vmatpush1.bf16.msra.mxu0 0
    %3073 = vmatprep.subr.bf16.mxu0 0
    %3074 = vmatpush1.bf16.msra.mxu0 0
    %3075 = vmatprep.subr.bf16.mxu0 0
    %3076 = vmatpush1.bf16.msra.mxu0 %v2973
    %3077 = vmatprep.subr.bf16.mxu0 0
    %3078 = vmatpush2.bf16.msra.mxu0 0
    %3079 = vmatprep.subr.bf16.mxu0 0
    %3080 = vmatpush2.bf16.msra.mxu0 0
    %3081 = vmatprep.subr.bf16.mxu0 0
    %3082 = vmatpush2.bf16.msra.mxu0 0
    %3083 = vmatprep.subr.bf16.mxu0 0
    %3084 = vmatpush2.bf16.msra.mxu0 0
    %3085 = vmatprep.subr.bf16.mxu0 0
    %3086 = vmatpush2.bf16.msra.mxu0 0
    %3087 = vmatprep.subr.bf16.mxu0 0
    %3088 = vmatpush2.bf16.msra.mxu0 0
    %3089 = vmatprep.subr.bf16.mxu0 0
    %3090 = vmatpush2.bf16.msra.mxu0 0
    %3091 = vmatprep.subr.bf16.mxu0 0
    %3092 = vmatpush2.bf16.msra.mxu0 0
    %3093 = vmatprep.mubr.bf16.mxu0 0
    %3094 = vmatmul.mubr.bf16.gmra.mxu0 %v2958
    %v3095 = vpop.f32.mrf.mxu0
    %v3096 = vadd.f32 0.0, %v3095
    %v3097 = vpop.f32.mrf.mxu0
    %v3098 = vpop.f32.mrf.mxu0
    %v3099 = vadd.f32 0.0, %v3098
    %v3100 = vpop.f32.mrf.mxu0
    %3101 = vdwg.mxu0
    %v3102 = vadd.f32 %v2921, %v3010
    %v3103 = vadd.f32 %v2922, %v3012
    %v3104 = vadd.f32 %v2923, %v3053
    %v3105 = vadd.f32 %v2924, %v3055
    %v3106 = vadd.f32 %v2925, %v3096
    %v3107 = vadd.f32 %v2926, %v3014
    %v3108 = vadd.f32 %v2927, %v3016
    %v3109 = vadd.f32 %v2928, %v3057
    %v3110 = vadd.f32 %v2929, %v3059
    %v3111 = vadd.f32 %v2930, %v3099
    %s3112 = scalar_lea.vmem %s4, 64
    %v3113 = vld [vmem:[%s3112] sm:$0xf]
    %v3114 = vld [vmem:[%s3112 + $0x4] sm:$0xf]
    %v3117 = vunpack.c.l.b16 %v3113
    %v3118 = vunpack.c.l.b16 %v3114
    %v3119 = vpack.c.b16 %v3118, %v3117
    %3120 = vrot.lane.b32.xlu0 %v1698, 52
    %v3121 = vpop.permute.xlu0 %3120
    %3122 = vrot.lane.b32.xlu0 %v1699, 52
    %v3123 = vpop.permute.xlu0 %3122
    %3124 = vrot.lane.b32.xlu0 %v1700, 52
    %v3125 = vpop.permute.xlu0 %3124
    %3126 = vrot.lane.b32.xlu0 %v1701, 52
    %v3127 = vpop.permute.xlu0 %3126
    %3128 = vrot.lane.b32.xlu0 %v1702, 52
    %v3129 = vpop.permute.xlu0 %3128
    %3130 = vrot.lane.b32.xlu0 %v1703, 52
    %v3131 = vpop.permute.xlu0 %3130
    %vm3132 = vcmask 424960
    %v3133 = vsel %vm3132, %v3121, %v3123
    %v3134 = vsel %vm3132, %v3123, %v3125
    %v3135 = vsel %vm3132, %v3125, %v3127
    %v3136 = vsel %vm3132, %v3127, %v3129
    %v3137 = vsel %vm3132, %v3129, %v3131
    %v3139 = vsel %vm1733, %v3119, 0
    %v3142 = vsel %vm1737, %v3133, 0
    %v3145 = vsel %vm1737, %v3134, 0
    %v3148 = vsel %vm1737, %v3135, 0
    %v3151 = vsel %vm1737, %v3136, 0
    %v3154 = vsel %vm1737, %v3137, 0
    %3156 = vmatprep.subr.bf16.mxu0 0
    %3157 = vmatpush1.bf16.msra.mxu0 0
    %3158 = vmatprep.subr.bf16.mxu0 0
    %3159 = vmatpush1.bf16.msra.mxu0 0
    %3160 = vmatprep.subr.bf16.mxu0 0
    %3161 = vmatpush1.bf16.msra.mxu0 0
    %3162 = vmatprep.subr.bf16.mxu0 0
    %3163 = vmatpush1.bf16.msra.mxu0 0
    %3164 = vmatprep.subr.bf16.mxu0 0
    %3165 = vmatpush1.bf16.msra.mxu0 0
    %3166 = vmatprep.subr.bf16.mxu0 0
    %3167 = vmatpush1.bf16.msra.mxu0 0
    %3168 = vmatprep.subr.bf16.mxu0 0
    %3169 = vmatpush1.bf16.msra.mxu0 0
    %3170 = vmatprep.subr.bf16.mxu0 %v3145
    %3171 = vmatpush1.bf16.msra.mxu0 %v3142
    %3172 = vmatprep.subr.bf16.mxu0 0
    %3173 = vmatpush2.bf16.msra.mxu0 0
    %3174 = vmatprep.subr.bf16.mxu0 0
    %3175 = vmatpush2.bf16.msra.mxu0 0
    %3176 = vmatprep.subr.bf16.mxu0 0
    %3177 = vmatpush2.bf16.msra.mxu0 0
    %3178 = vmatprep.subr.bf16.mxu0 0
    %3179 = vmatpush2.bf16.msra.mxu0 0
    %3180 = vmatprep.subr.bf16.mxu0 0
    %3181 = vmatpush2.bf16.msra.mxu0 0
    %3182 = vmatprep.subr.bf16.mxu0 0
    %3183 = vmatpush2.bf16.msra.mxu0 0
    %3184 = vmatprep.subr.bf16.mxu0 0
    %3185 = vmatpush2.bf16.msra.mxu0 0
    %3186 = vmatprep.subr.bf16.mxu0 0
    %3187 = vmatpush2.bf16.msra.mxu0 0
    %3188 = vmatprep.mubr.bf16.mxu0 0
    %3189 = vmatmul.mubr.bf16.gmra.mxu0 %v3139
    %v3190 = vpop.f32.mrf.mxu0
    %v3191 = vadd.f32 0.0, %v3190
    %v3192 = vpop.f32.mrf.mxu0
    %v3193 = vadd.f32 0.0, %v3192
    %v3194 = vpop.f32.mrf.mxu0
    %v3195 = vadd.f32 0.0, %v3194
    %v3196 = vpop.f32.mrf.mxu0
    %v3197 = vadd.f32 0.0, %v3196
    %3198 = vdwg.mxu0
    %3199 = vmatprep.subr.bf16.mxu0 0
    %3200 = vmatpush1.bf16.msra.mxu0 0
    %3201 = vmatprep.subr.bf16.mxu0 0
    %3202 = vmatpush1.bf16.msra.mxu0 0
    %3203 = vmatprep.subr.bf16.mxu0 0
    %3204 = vmatpush1.bf16.msra.mxu0 0
    %3205 = vmatprep.subr.bf16.mxu0 0
    %3206 = vmatpush1.bf16.msra.mxu0 0
    %3207 = vmatprep.subr.bf16.mxu0 0
    %3208 = vmatpush1.bf16.msra.mxu0 0
    %3209 = vmatprep.subr.bf16.mxu0 0
    %3210 = vmatpush1.bf16.msra.mxu0 0
    %3211 = vmatprep.subr.bf16.mxu0 0
    %3212 = vmatpush1.bf16.msra.mxu0 0
    %3213 = vmatprep.subr.bf16.mxu0 %v3151
    %3214 = vmatpush1.bf16.msra.mxu0 %v3148
    %3215 = vmatprep.subr.bf16.mxu0 0
    %3216 = vmatpush2.bf16.msra.mxu0 0
    %3217 = vmatprep.subr.bf16.mxu0 0
    %3218 = vmatpush2.bf16.msra.mxu0 0
    %3219 = vmatprep.subr.bf16.mxu0 0
    %3220 = vmatpush2.bf16.msra.mxu0 0
    %3221 = vmatprep.subr.bf16.mxu0 0
    %3222 = vmatpush2.bf16.msra.mxu0 0
    %3223 = vmatprep.subr.bf16.mxu0 0
    %3224 = vmatpush2.bf16.msra.mxu0 0
    %3225 = vmatprep.subr.bf16.mxu0 0
    %3226 = vmatpush2.bf16.msra.mxu0 0
    %3227 = vmatprep.subr.bf16.mxu0 0
    %3228 = vmatpush2.bf16.msra.mxu0 0
    %3229 = vmatprep.subr.bf16.mxu0 0
    %3230 = vmatpush2.bf16.msra.mxu0 0
    %3231 = vmatprep.mubr.bf16.mxu0 0
    %3232 = vmatmul.mubr.bf16.gmra.mxu0 %v3139
    %v3233 = vpop.f32.mrf.mxu0
    %v3234 = vadd.f32 0.0, %v3233
    %v3235 = vpop.f32.mrf.mxu0
    %v3236 = vadd.f32 0.0, %v3235
    %v3237 = vpop.f32.mrf.mxu0
    %v3238 = vadd.f32 0.0, %v3237
    %v3239 = vpop.f32.mrf.mxu0
    %v3240 = vadd.f32 0.0, %v3239
    %3241 = vdwg.mxu0
    %3242 = vmatprep.subr.bf16.mxu0 0
    %3243 = vmatpush1.bf16.msra.mxu0 0
    %3244 = vmatprep.subr.bf16.mxu0 0
    %3245 = vmatpush1.bf16.msra.mxu0 0
    %3246 = vmatprep.subr.bf16.mxu0 0
    %3247 = vmatpush1.bf16.msra.mxu0 0
    %3248 = vmatprep.subr.bf16.mxu0 0
    %3249 = vmatpush1.bf16.msra.mxu0 0
    %3250 = vmatprep.subr.bf16.mxu0 0
    %3251 = vmatpush1.bf16.msra.mxu0 0
    %3252 = vmatprep.subr.bf16.mxu0 0
    %3253 = vmatpush1.bf16.msra.mxu0 0
    %3254 = vmatprep.subr.bf16.mxu0 0
    %3255 = vmatpush1.bf16.msra.mxu0 0
    %3256 = vmatprep.subr.bf16.mxu0 0
    %3257 = vmatpush1.bf16.msra.mxu0 %v3154
    %3258 = vmatprep.subr.bf16.mxu0 0
    %3259 = vmatpush2.bf16.msra.mxu0 0
    %3260 = vmatprep.subr.bf16.mxu0 0
    %3261 = vmatpush2.bf16.msra.mxu0 0
    %3262 = vmatprep.subr.bf16.mxu0 0
    %3263 = vmatpush2.bf16.msra.mxu0 0
    %3264 = vmatprep.subr.bf16.mxu0 0
    %3265 = vmatpush2.bf16.msra.mxu0 0
    %3266 = vmatprep.subr.bf16.mxu0 0
    %3267 = vmatpush2.bf16.msra.mxu0 0
    %3268 = vmatprep.subr.bf16.mxu0 0
    %3269 = vmatpush2.bf16.msra.mxu0 0
    %3270 = vmatprep.subr.bf16.mxu0 0
    %3271 = vmatpush2.bf16.msra.mxu0 0
    %3272 = vmatprep.subr.bf16.mxu0 0
    %3273 = vmatpush2.bf16.msra.mxu0 0
    %3274 = vmatprep.mubr.bf16.mxu0 0
    %3275 = vmatmul.mubr.bf16.gmra.mxu0 %v3139
    %v3276 = vpop.f32.mrf.mxu0
    %v3277 = vadd.f32 0.0, %v3276
    %v3278 = vpop.f32.mrf.mxu0
    %v3279 = vpop.f32.mrf.mxu0
    %v3280 = vadd.f32 0.0, %v3279
    %v3281 = vpop.f32.mrf.mxu0
    %3282 = vdwg.mxu0
    %v3283 = vadd.f32 %v3102, %v3191
    %v3284 = vadd.f32 %v3103, %v3193
    %v3285 = vadd.f32 %v3104, %v3234
    %v3286 = vadd.f32 %v3105, %v3236
    %v3287 = vadd.f32 %v3106, %v3277
    %v3288 = vadd.f32 %v3107, %v3195
    %v3289 = vadd.f32 %v3108, %v3197
    %v3290 = vadd.f32 %v3109, %v3238
    %v3291 = vadd.f32 %v3110, %v3240
    %v3292 = vadd.f32 %v3111, %v3280
    %v3293 = vld [vmem:[%s5] sm:$0xff]
    %v3294 = vld [vmem:[%s5 + $0x8] sm:$0xff]
    %3296 = vset.pattern.permute.xlu0 0
    %3297 = vperm.xlu0 %3296, %v3293
    %v3298 = vpop.permute.xlu0 %3297
    %3301 = vset.pattern.permute.xlu0 0
    %3302 = vperm.xlu0 %3301, %v3294
    %v3303 = vpop.permute.xlu0 %3302
    %v3305 = vadd.f32 %v3283, %v3298
    %v3306 = vadd.f32 %v3284, %v3298
    %v3307 = vadd.f32 %v3285, %v3298
    %v3308 = vadd.f32 %v3286, %v3298
    %v3309 = vadd.f32 %v3287, %v3298
    %v3310 = vadd.f32 %v3288, %v3303
    %v3311 = vadd.f32 %v3289, %v3303
    %v3312 = vadd.f32 %v3290, %v3303
    %v3313 = vadd.f32 %v3291, %v3303
    %v3314 = vadd.f32 %v3292, %v3303
    %v3315 = vmax.f32 %v3305, 0.0
    %v3316 = vmax.f32 %v3306, 0.0
    %v3317 = vmax.f32 %v3307, 0.0
    %v3318 = vmax.f32 %v3308, 0.0
    %v3319 = vmax.f32 %v3309, 0.0
    %v3320 = vmax.f32 %v3310, 0.0
    %v3321 = vmax.f32 %v3311, 0.0
    %v3322 = vmax.f32 %v3312, 0.0
    %v3323 = vmax.f32 %v3313, 0.0
    %v3324 = vmax.f32 %v3314, 0.0
    %3335 = vrot.lane.b32.xlu0 %v3315, 126
    %v3336 = vpop.permute.xlu0 %3335
    %3337 = vrot.lane.b32.xlu0 %v3316, 126
    %v3338 = vpop.permute.xlu0 %3337
    %3339 = vrot.lane.b32.xlu0 %v3317, 126
    %v3340 = vpop.permute.xlu0 %3339
    %3341 = vrot.lane.b32.xlu0 %v3318, 126
    %v3342 = vpop.permute.xlu0 %3341
    %3343 = vrot.lane.b32.xlu0 %v3319, 126
    %v3344 = vpop.permute.xlu0 %3343
    %3345 = vrot.lane.b32.xlu0 %v3320, 126
    %v3346 = vpop.permute.xlu0 %3345
    %3347 = vrot.lane.b32.xlu0 %v3321, 126
    %v3348 = vpop.permute.xlu0 %3347
    %3349 = vrot.lane.b32.xlu0 %v3322, 126
    %v3350 = vpop.permute.xlu0 %3349
    %3351 = vrot.lane.b32.xlu0 %v3323, 126
    %v3352 = vpop.permute.xlu0 %3351
    %3353 = vrot.lane.b32.xlu0 %v3324, 126
    %v3354 = vpop.permute.xlu0 %3353
    %vm3355 = vcmask 1031168
    %v3356 = vsel %vm3355, %v3336, %v3338
    %v3357 = vsel %vm3355, %v3338, %v3340
    %v3358 = vsel %vm3355, %v3340, %v3342
    %v3359 = vsel %vm3355, %v3342, %v3344
    %v3360 = vsel %vm3355, %v3346, %v3348
    %v3361 = vsel %vm3355, %v3348, %v3350
    %v3362 = vsel %vm3355, %v3350, %v3352
    %v3363 = vsel %vm3355, %v3352, %v3354
    %v3374 = vmax.f32 %v3315, %v3356
    %v3375 = vmax.f32 %v3316, %v3357
    %v3376 = vmax.f32 %v3317, %v3358
    %v3377 = vmax.f32 %v3318, %v3359
    %v3378 = vmax.f32 %v3319, %v3344
    %v3379 = vmax.f32 %v3320, %v3360
    %v3380 = vmax.f32 %v3321, %v3361
    %v3381 = vmax.f32 %v3322, %v3362
    %v3382 = vmax.f32 %v3323, %v3363
    %v3383 = vmax.f32 %v3324, %v3354
    %3394 = vrot.lane.b32.xlu0 %v3374, 92
    %v3395 = vpop.permute.xlu0 %3394
    %3396 = vrot.lane.b32.xlu0 %v3375, 92
    %v3397 = vpop.permute.xlu0 %3396
    %3398 = vrot.lane.b32.xlu0 %v3376, 92
    %v3399 = vpop.permute.xlu0 %3398
    %3400 = vrot.lane.b32.xlu0 %v3377, 92
    %v3401 = vpop.permute.xlu0 %3400
    %3402 = vrot.lane.b32.xlu0 %v3378, 92
    %v3403 = vpop.permute.xlu0 %3402
    %3404 = vrot.lane.b32.xlu0 %v3379, 92
    %v3405 = vpop.permute.xlu0 %3404
    %3406 = vrot.lane.b32.xlu0 %v3380, 92
    %v3407 = vpop.permute.xlu0 %3406
    %3408 = vrot.lane.b32.xlu0 %v3381, 92
    %v3409 = vpop.permute.xlu0 %3408
    %3410 = vrot.lane.b32.xlu0 %v3382, 92
    %v3411 = vpop.permute.xlu0 %3410
    %3412 = vrot.lane.b32.xlu0 %v3383, 92
    %v3413 = vpop.permute.xlu0 %3412
    %vm3414 = vcmask 752640
    %v3415 = vsel %vm3414, %v3395, %v3397
    %v3416 = vsel %vm3414, %v3397, %v3399
    %v3417 = vsel %vm3414, %v3399, %v3401
    %v3418 = vsel %vm3414, %v3401, %v3403
    %v3419 = vsel %vm3414, %v3405, %v3407
    %v3420 = vsel %vm3414, %v3407, %v3409
    %v3421 = vsel %vm3414, %v3409, %v3411
    %v3422 = vsel %vm3414, %v3411, %v3413
    %v3433 = vmax.f32 %v3374, %v3415
    %v3434 = vmax.f32 %v3375, %v3416
    %v3435 = vmax.f32 %v3376, %v3417
    %v3436 = vmax.f32 %v3377, %v3418
    %v3437 = vmax.f32 %v3378, %v3403
    %v3438 = vmax.f32 %v3379, %v3419
    %v3439 = vmax.f32 %v3380, %v3420
    %v3440 = vmax.f32 %v3381, %v3421
    %v3441 = vmax.f32 %v3382, %v3422
    %v3442 = vmax.f32 %v3383, %v3413
    %v3443 = vld [vmem:[%s6] sm:$0xff]
    %v3444 = vld [vmem:[%s6 + $0x8] sm:$0xff]
    %v3445 = vld [vmem:[%s6 + $0x10] sm:$0xff]
    %v3446 = vld [vmem:[%s6 + $0x18] sm:$0xff]
    %v3447 = vld [vmem:[%s6 + $0x20] sm:$0xff]
    %v3448 = vld [vmem:[%s6 + $0x28] sm:$0xff]
    %v3449 = vld [vmem:[%s6 + $0x30] sm:$0xff]
    %v3450 = vld [vmem:[%s6 + $0x38] sm:$0xff]
    %v3451 = vld [vmem:[%s6 + $0x40] sm:$0xff]
    %v3452 = vld [vmem:[%s6 + $0x48] sm:$0xff]
    %v3453 = vld [vmem:[%s6 + $0x50] sm:$0xff]
    %v3454 = vld [vmem:[%s6 + $0x58] sm:$0xff]
    %v3455 = vld [vmem:[%s6 + $0x60] sm:$0xff]
    %v3456 = vld [vmem:[%s6 + $0x68] sm:$0xff]
    %v3457 = vld [vmem:[%s6 + $0x70] sm:$0xff]
    %v3458 = vld [vmem:[%s6 + $0x78] sm:$0xff]
    %v3459 = vld [vmem:[%s6 + $0x80] sm:$0xff]
    %v3460 = vld [vmem:[%s6 + $0x88] sm:$0xff]
    %v3461 = vld [vmem:[%s6 + $0x90] sm:$0xff]
    %v3462 = vld [vmem:[%s6 + $0x98] sm:$0xff]
    %v3463 = vld [vmem:[%s6 + $0xa0] sm:$0xff]
    %v3464 = vld [vmem:[%s6 + $0xa8] sm:$0xff]
    %v3465 = vld [vmem:[%s6 + $0xb0] sm:$0xff]
    %v3466 = vld [vmem:[%s6 + $0xb8] sm:$0xff]
    %v3467 = vld [vmem:[%s6 + $0xc0] sm:$0xff]
    %v3468 = vld [vmem:[%s6 + $0xc8] sm:$0xff]
    %v3469 = vld [vmem:[%s6 + $0xd0] sm:$0xff]
    %v3470 = vld [vmem:[%s6 + $0xd8] sm:$0xff]
    %v3471 = vld [vmem:[%s6 + $0xe0] sm:$0xff]
    %v3472 = vld [vmem:[%s6 + $0xe8] sm:$0xff]
    %v3473 = vld [vmem:[%s6 + $0xf0] sm:$0xff]
    %v3474 = vld [vmem:[%s6 + $0xf8] sm:$0xff]
    %v3475 = vld [vmem:[%s6 + $0x100] sm:$0xff]
    %v3476 = vld [vmem:[%s6 + $0x108] sm:$0xff]
    %v3477 = vld [vmem:[%s6 + $0x110] sm:$0xff]
    %v3478 = vld [vmem:[%s6 + $0x118] sm:$0xff]
    %v3479 = vld [vmem:[%s6 + $0x120] sm:$0xff]
    %v3480 = vld [vmem:[%s6 + $0x128] sm:$0xff]
    %v3481 = vld [vmem:[%s6 + $0x130] sm:$0xff]
    %v3482 = vld [vmem:[%s6 + $0x138] sm:$0xff]
    %v3483 = vld [vmem:[%s6 + $0x140] sm:$0xff]
    %v3484 = vld [vmem:[%s6 + $0x148] sm:$0xff]
    %v3485 = vld [vmem:[%s6 + $0x150] sm:$0xff]
    %v3486 = vld [vmem:[%s6 + $0x158] sm:$0xff]
    %v3487 = vld [vmem:[%s6 + $0x160] sm:$0xff]
    %v3488 = vld [vmem:[%s6 + $0x168] sm:$0xff]
    %v3489 = vld [vmem:[%s6 + $0x170] sm:$0xff]
    %v3490 = vld [vmem:[%s6 + $0x178] sm:$0xff]
    %v3491 = vld [vmem:[%s6 + $0x180] sm:$0xff]
    %v3492 = vld [vmem:[%s6 + $0x188] sm:$0xff]
    %v3493 = vld [vmem:[%s6 + $0x190] sm:$0xff]
    %v3494 = vld [vmem:[%s6 + $0x198] sm:$0xff]
    %v3495 = vld [vmem:[%s6 + $0x1a0] sm:$0xff]
    %v3496 = vld [vmem:[%s6 + $0x1a8] sm:$0xff]
    %v3497 = vld [vmem:[%s6 + $0x1b0] sm:$0xff]
    %v3498 = vld [vmem:[%s6 + $0x1b8] sm:$0xff]
    %v3499 = vld [vmem:[%s6 + $0x1c0] sm:$0xff]
    %v3500 = vld [vmem:[%s6 + $0x1c8] sm:$0xff]
    %v3501 = vld [vmem:[%s6 + $0x1d0] sm:$0xff]
    %v3502 = vld [vmem:[%s6 + $0x1d8] sm:$0xff]
    %v3503 = vld [vmem:[%s6 + $0x1e0] sm:$0xff]
    %v3504 = vld [vmem:[%s6 + $0x1e8] sm:$0xff]
    %v3505 = vld [vmem:[%s6 + $0x1f0] sm:$0xff]
    %v3506 = vld [vmem:[%s6 + $0x1f8] sm:$0xff]
    %v3507 = vld [vmem:[%s6 + $0x200] sm:$0xff]
    %v3508 = vld [vmem:[%s6 + $0x208] sm:$0xff]
    %v3509 = vld [vmem:[%s6 + $0x210] sm:$0xff]
    %v3510 = vld [vmem:[%s6 + $0x218] sm:$0xff]
    %v3511 = vld [vmem:[%s6 + $0x220] sm:$0xff]
    %v3512 = vld [vmem:[%s6 + $0x228] sm:$0xff]
    %v3513 = vld [vmem:[%s6 + $0x230] sm:$0xff]
    %v3514 = vld [vmem:[%s6 + $0x238] sm:$0xff]
    %v3515 = vld [vmem:[%s6 + $0x240] sm:$0xff]
    %v3516 = vld [vmem:[%s6 + $0x248] sm:$0xff]
    %v3517 = vld [vmem:[%s6 + $0x250] sm:$0x1f]
    %vm3518 = vcmask 695296
    %v3520 = vsel %vm3518, %v3437, 0
    %v3523 = vsel %vm3518, %v3442, 0
    %vm3525 = vcmask 1044480
    %v3527 = vsel %vm3525, %v3517, 0
    %3529 = vmatprep.subr.mxu0 0.0
    %3530 = vmatpush1.msra.mxu0 %v3458
    %3531 = vmatprep.subr.mxu0 0.0
    %3532 = vmatpush1.msra.mxu0 %v3457
    %3533 = vmatprep.subr.mxu0 0.0
    %3534 = vmatpush1.msra.mxu0 %v3456
    %3535 = vmatprep.subr.mxu0 0.0
    %3536 = vmatpush1.msra.mxu0 %v3455
    %3537 = vmatprep.subr.mxu0 0.0
    %3538 = vmatpush1.msra.mxu0 %v3454
    %3539 = vmatprep.subr.mxu0 0.0
    %3540 = vmatpush1.msra.mxu0 %v3453
    %3541 = vmatprep.subr.mxu0 0.0
    %3542 = vmatpush1.msra.mxu0 %v3452
    %3543 = vmatprep.subr.mxu0 0.0
    %3544 = vmatpush1.msra.mxu0 %v3451
    %3545 = vmatprep.subr.mxu0 0.0
    %3546 = vmatpush1.msra.mxu0 %v3450
    %3547 = vmatprep.subr.mxu0 0.0
    %3548 = vmatpush1.msra.mxu0 %v3449
    %3549 = vmatprep.subr.mxu0 0.0
    %3550 = vmatpush1.msra.mxu0 %v3448
    %3551 = vmatprep.subr.mxu0 0.0
    %3552 = vmatpush1.msra.mxu0 %v3447
    %3553 = vmatprep.subr.mxu0 0.0
    %3554 = vmatpush1.msra.mxu0 %v3446
    %3555 = vmatprep.subr.mxu0 0.0
    %3556 = vmatpush1.msra.mxu0 %v3445
    %3557 = vmatprep.subr.mxu0 0.0
    %3558 = vmatpush1.msra.mxu0 %v3444
    %3559 = vmatprep.subr.mxu0 0.0
    %3560 = vmatpush1.msra.mxu0 %v3443
    %3561 = vmatprep.subr.mxu0 0.0
    %3562 = vmatpush2.msra.mxu0 %v3474
    %3563 = vmatprep.subr.mxu0 0.0
    %3564 = vmatpush2.msra.mxu0 %v3473
    %3565 = vmatprep.subr.mxu0 0.0
    %3566 = vmatpush2.msra.mxu0 %v3472
    %3567 = vmatprep.subr.mxu0 0.0
    %3568 = vmatpush2.msra.mxu0 %v3471
    %3569 = vmatprep.subr.mxu0 0.0
    %3570 = vmatpush2.msra.mxu0 %v3470
    %3571 = vmatprep.subr.mxu0 0.0
    %3572 = vmatpush2.msra.mxu0 %v3469
    %3573 = vmatprep.subr.mxu0 0.0
    %3574 = vmatpush2.msra.mxu0 %v3468
    %3575 = vmatprep.subr.mxu0 0.0
    %3576 = vmatpush2.msra.mxu0 %v3467
    %3577 = vmatprep.subr.mxu0 0.0
    %3578 = vmatpush2.msra.mxu0 %v3466
    %3579 = vmatprep.subr.mxu0 0.0
    %3580 = vmatpush2.msra.mxu0 %v3465
    %3581 = vmatprep.subr.mxu0 0.0
    %3582 = vmatpush2.msra.mxu0 %v3464
    %3583 = vmatprep.subr.mxu0 0.0
    %3584 = vmatpush2.msra.mxu0 %v3463
    %3585 = vmatprep.subr.mxu0 0.0
    %3586 = vmatpush2.msra.mxu0 %v3462
    %3587 = vmatprep.subr.mxu0 0.0
    %3588 = vmatpush2.msra.mxu0 %v3461
    %3589 = vmatprep.subr.mxu0 0.0
    %3590 = vmatpush2.msra.mxu0 %v3460
    %3591 = vmatprep.subr.mxu0 0.0
    %3592 = vmatpush2.msra.mxu0 %v3459
    %3593 = vmatprep.mubr.f32.mxu0 %v3434
    %3594 = vmatmul.mubr.f32.gmra.mxu0 %v3433
    %v3595 = vpop.f32.mrf.mxu0
    %v3596 = vadd.f32 0.0, %v3595
    %v3597 = vpop.f32.mrf.mxu0
    %3598 = vmatprep.mubr.f32.mxu0 %v3439
    %3599 = vmatmul.mubr.f32.gmra.mxu0 %v3438
    %v3600 = vpop.f32.mrf.mxu0
    %v3601 = vadd.f32 0.0, %v3600
    %v3602 = vpop.f32.mrf.mxu0
    %3603 = vdwg.mxu0
    %3604 = vmatprep.subr.mxu0 0.0
    %3605 = vmatpush1.msra.mxu0 %v3490
    %3606 = vmatprep.subr.mxu0 0.0
    %3607 = vmatpush1.msra.mxu0 %v3489
    %3608 = vmatprep.subr.mxu0 0.0
    %3609 = vmatpush1.msra.mxu0 %v3488
    %3610 = vmatprep.subr.mxu0 0.0
    %3611 = vmatpush1.msra.mxu0 %v3487
    %3612 = vmatprep.subr.mxu0 0.0
    %3613 = vmatpush1.msra.mxu0 %v3486
    %3614 = vmatprep.subr.mxu0 0.0
    %3615 = vmatpush1.msra.mxu0 %v3485
    %3616 = vmatprep.subr.mxu0 0.0
    %3617 = vmatpush1.msra.mxu0 %v3484
    %3618 = vmatprep.subr.mxu0 0.0
    %3619 = vmatpush1.msra.mxu0 %v3483
    %3620 = vmatprep.subr.mxu0 0.0
    %3621 = vmatpush1.msra.mxu0 %v3482
    %3622 = vmatprep.subr.mxu0 0.0
    %3623 = vmatpush1.msra.mxu0 %v3481
    %3624 = vmatprep.subr.mxu0 0.0
    %3625 = vmatpush1.msra.mxu0 %v3480
    %3626 = vmatprep.subr.mxu0 0.0
    %3627 = vmatpush1.msra.mxu0 %v3479
    %3628 = vmatprep.subr.mxu0 0.0
    %3629 = vmatpush1.msra.mxu0 %v3478
    %3630 = vmatprep.subr.mxu0 0.0
    %3631 = vmatpush1.msra.mxu0 %v3477
    %3632 = vmatprep.subr.mxu0 0.0
    %3633 = vmatpush1.msra.mxu0 %v3476
    %3634 = vmatprep.subr.mxu0 0.0
    %3635 = vmatpush1.msra.mxu0 %v3475
    %3636 = vmatprep.subr.mxu0 0.0
    %3637 = vmatpush2.msra.mxu0 %v3506
    %3638 = vmatprep.subr.mxu0 0.0
    %3639 = vmatpush2.msra.mxu0 %v3505
    %3640 = vmatprep.subr.mxu0 0.0
    %3641 = vmatpush2.msra.mxu0 %v3504
    %3642 = vmatprep.subr.mxu0 0.0
    %3643 = vmatpush2.msra.mxu0 %v3503
    %3644 = vmatprep.subr.mxu0 0.0
    %3645 = vmatpush2.msra.mxu0 %v3502
    %3646 = vmatprep.subr.mxu0 0.0
    %3647 = vmatpush2.msra.mxu0 %v3501
    %3648 = vmatprep.subr.mxu0 0.0
    %3649 = vmatpush2.msra.mxu0 %v3500
    %3650 = vmatprep.subr.mxu0 0.0
    %3651 = vmatpush2.msra.mxu0 %v3499
    %3652 = vmatprep.subr.mxu0 0.0
    %3653 = vmatpush2.msra.mxu0 %v3498
    %3654 = vmatprep.subr.mxu0 0.0
    %3655 = vmatpush2.msra.mxu0 %v3497
    %3656 = vmatprep.subr.mxu0 0.0
    %3657 = vmatpush2.msra.mxu0 %v3496
    %3658 = vmatprep.subr.mxu0 0.0
    %3659 = vmatpush2.msra.mxu0 %v3495
    %3660 = vmatprep.subr.mxu0 0.0
    %3661 = vmatpush2.msra.mxu0 %v3494
    %3662 = vmatprep.subr.mxu0 0.0
    %3663 = vmatpush2.msra.mxu0 %v3493
    %3664 = vmatprep.subr.mxu0 0.0
    %3665 = vmatpush2.msra.mxu0 %v3492
    %3666 = vmatprep.subr.mxu0 0.0
    %3667 = vmatpush2.msra.mxu0 %v3491
    %3668 = vmatprep.mubr.f32.mxu0 %v3436
    %3669 = vmatmul.mubr.f32.gmra.mxu0 %v3435
    %v3670 = vpop.f32.mrf.mxu0
    %v3671 = vadd.f32 %v3596, %v3670
    %v3672 = vpop.f32.mrf.mxu0
    %3673 = vmatprep.mubr.f32.mxu0 %v3441
    %3674 = vmatmul.mubr.f32.gmra.mxu0 %v3440
    %v3675 = vpop.f32.mrf.mxu0
    %v3676 = vadd.f32 %v3601, %v3675
    %v3677 = vpop.f32.mrf.mxu0
    %3678 = vdwg.mxu0
    %3679 = vmatprep.subr.mxu0 0.0
    %3680 = vmatpush1.msra.mxu0 0.0
    %3681 = vmatprep.subr.mxu0 0.0
    %3682 = vmatpush1.msra.mxu0 0.0
    %3683 = vmatprep.subr.mxu0 0.0
    %3684 = vmatpush1.msra.mxu0 0.0
    %3685 = vmatprep.subr.mxu0 0.0
    %3686 = vmatpush1.msra.mxu0 0.0
    %3687 = vmatprep.subr.mxu0 0.0
    %3688 = vmatpush1.msra.mxu0 0.0
    %3689 = vmatprep.subr.mxu0 0.0
    %3690 = vmatpush1.msra.mxu0 %v3527
    %3691 = vmatprep.subr.mxu0 0.0
    %3692 = vmatpush1.msra.mxu0 %v3516
    %3693 = vmatprep.subr.mxu0 0.0
    %3694 = vmatpush1.msra.mxu0 %v3515
    %3695 = vmatprep.subr.mxu0 0.0
    %3696 = vmatpush1.msra.mxu0 %v3514
    %3697 = vmatprep.subr.mxu0 0.0
    %3698 = vmatpush1.msra.mxu0 %v3513
    %3699 = vmatprep.subr.mxu0 0.0
    %3700 = vmatpush1.msra.mxu0 %v3512
    %3701 = vmatprep.subr.mxu0 0.0
    %3702 = vmatpush1.msra.mxu0 %v3511
    %3703 = vmatprep.subr.mxu0 0.0
    %3704 = vmatpush1.msra.mxu0 %v3510
    %3705 = vmatprep.subr.mxu0 0.0
    %3706 = vmatpush1.msra.mxu0 %v3509
    %3707 = vmatprep.subr.mxu0 0.0
    %3708 = vmatpush1.msra.mxu0 %v3508
    %3709 = vmatprep.subr.mxu0 0.0
    %3710 = vmatpush1.msra.mxu0 %v3507
    %3711 = vmatprep.subr.mxu0 0.0
    %3712 = vmatpush2.msra.mxu0 0.0
    %3713 = vmatprep.subr.mxu0 0.0
    %3714 = vmatpush2.msra.mxu0 0.0
    %3715 = vmatprep.subr.mxu0 0.0
    %3716 = vmatpush2.msra.mxu0 0.0
    %3717 = vmatprep.subr.mxu0 0.0
    %3718 = vmatpush2.msra.mxu0 0.0
    %3719 = vmatprep.subr.mxu0 0.0
    %3720 = vmatpush2.msra.mxu0 0.0
    %3721 = vmatprep.subr.mxu0 0.0
    %3722 = vmatpush2.msra.mxu0 0.0
    %3723 = vmatprep.subr.mxu0 0.0
    %3724 = vmatpush2.msra.mxu0 0.0
    %3725 = vmatprep.subr.mxu0 0.0
    %3726 = vmatpush2.msra.mxu0 0.0
    %3727 = vmatprep.subr.mxu0 0.0
    %3728 = vmatpush2.msra.mxu0 0.0
    %3729 = vmatprep.subr.mxu0 0.0
    %3730 = vmatpush2.msra.mxu0 0.0
    %3731 = vmatprep.subr.mxu0 0.0
    %3732 = vmatpush2.msra.mxu0 0.0
    %3733 = vmatprep.subr.mxu0 0.0
    %3734 = vmatpush2.msra.mxu0 0.0
    %3735 = vmatprep.subr.mxu0 0.0
    %3736 = vmatpush2.msra.mxu0 0.0
    %3737 = vmatprep.subr.mxu0 0.0
    %3738 = vmatpush2.msra.mxu0 0.0
    %3739 = vmatprep.subr.mxu0 0.0
    %3740 = vmatpush2.msra.mxu0 0.0
    %3741 = vmatprep.subr.mxu0 0.0
    %3742 = vmatpush2.msra.mxu0 0.0
    %3743 = vmatprep.mubr.f32.mxu0 0.0
    %3744 = vmatmul.mubr.f32.gmra.mxu0 %v3520
    %v3745 = vpop.f32.mrf.mxu0
    %v3746 = vadd.f32 %v3671, %v3745
    %v3747 = vpop.f32.mrf.mxu0
    %3748 = vmatprep.mubr.f32.mxu0 0.0
    %3749 = vmatmul.mubr.f32.gmra.mxu0 %v3523
    %v3750 = vpop.f32.mrf.mxu0
    %v3751 = vadd.f32 %v3676, %v3750
    %v3752 = vpop.f32.mrf.mxu0
    %3753 = vdwg.mxu0
    %v3754 = vld [vmem:[%s7] sm:$0xff]
    %v3755 = vld [vmem:[%s7 + $0x8] sm:$0xff]
    %v3756 = vld [vmem:[%s7 + $0x10] sm:$0xff]
    %v3757 = vld [vmem:[%s7 + $0x18] sm:$0xff]
    %s3758 = scalar_lea.vmem %s7, 32
    %v3759 = vld [vmem:[%s3758] sm:$0xff]
    %v3760 = vld [vmem:[%s3758 + $0x8] sm:$0xff]
    %v3761 = vld [vmem:[%s3758 + $0x10] sm:$0xff]
    %v3762 = vld [vmem:[%s3758 + $0x18] sm:$0xff]
    %v3764 = vrot.slane %v3746, 1
    %vm3765 = vcmask 261120
    %v3766 = vsel %vm3765, %v3764, 0
    %3768 = vmatprep.subr.mxu0 0.0
    %3769 = vmatpush1.msra.mxu0 0.0
    %3770 = vmatprep.subr.mxu0 0.0
    %3771 = vmatpush1.msra.mxu0 0.0
    %3772 = vmatprep.subr.mxu0 0.0
    %3773 = vmatpush1.msra.mxu0 0.0
    %3774 = vmatprep.subr.mxu0 0.0
    %3775 = vmatpush1.msra.mxu0 0.0
    %3776 = vmatprep.subr.mxu0 0.0
    %3777 = vmatpush1.msra.mxu0 0.0
    %3778 = vmatprep.subr.mxu0 0.0
    %3779 = vmatpush1.msra.mxu0 0.0
    %3780 = vmatprep.subr.mxu0 0.0
    %3781 = vmatpush1.msra.mxu0 0.0
    %3782 = vmatprep.subr.mxu0 0.0
    %3783 = vmatpush1.msra.mxu0 0.0
    %3784 = vmatprep.subr.mxu0 0.0
    %3785 = vmatpush1.msra.mxu0 0.0
    %3786 = vmatprep.subr.mxu0 0.0
    %3787 = vmatpush1.msra.mxu0 0.0
    %3788 = vmatprep.subr.mxu0 0.0
    %3789 = vmatpush1.msra.mxu0 0.0
    %3790 = vmatprep.subr.mxu0 0.0
    %3791 = vmatpush1.msra.mxu0 0.0
    %3792 = vmatprep.subr.mxu0 0.0
    %3793 = vmatpush1.msra.mxu0 %v3762
    %3794 = vmatprep.subr.mxu0 0.0
    %3795 = vmatpush1.msra.mxu0 %v3761
    %3796 = vmatprep.subr.mxu0 0.0
    %3797 = vmatpush1.msra.mxu0 %v3760
    %3798 = vmatprep.subr.mxu0 0.0
    %3799 = vmatpush1.msra.mxu0 %v3759
    %3800 = vmatprep.subr.mxu0 0.0
    %3801 = vmatpush2.msra.mxu0 0.0
    %3802 = vmatprep.subr.mxu0 0.0
    %3803 = vmatpush2.msra.mxu0 0.0
    %3804 = vmatprep.subr.mxu0 0.0
    %3805 = vmatpush2.msra.mxu0 0.0
    %3806 = vmatprep.subr.mxu0 0.0
    %3807 = vmatpush2.msra.mxu0 0.0
    %3808 = vmatprep.subr.mxu0 0.0
    %3809 = vmatpush2.msra.mxu0 0.0
    %3810 = vmatprep.subr.mxu0 0.0
    %3811 = vmatpush2.msra.mxu0 0.0
    %3812 = vmatprep.subr.mxu0 0.0
    %3813 = vmatpush2.msra.mxu0 0.0
    %3814 = vmatprep.subr.mxu0 0.0
    %3815 = vmatpush2.msra.mxu0 0.0
    %3816 = vmatprep.subr.mxu0 0.0
    %3817 = vmatpush2.msra.mxu0 0.0
    %3818 = vmatprep.subr.mxu0 0.0
    %3819 = vmatpush2.msra.mxu0 0.0
    %3820 = vmatprep.subr.mxu0 0.0
    %3821 = vmatpush2.msra.mxu0 0.0
    %3822 = vmatprep.subr.mxu0 0.0
    %3823 = vmatpush2.msra.mxu0 0.0
    %3824 = vmatprep.subr.mxu0 0.0
    %3825 = vmatpush2.msra.mxu0 0.0
    %3826 = vmatprep.subr.mxu0 0.0
    %3827 = vmatpush2.msra.mxu0 0.0
    %3828 = vmatprep.subr.mxu0 0.0
    %3829 = vmatpush2.msra.mxu0 0.0
    %3830 = vmatprep.subr.mxu0 0.0
    %3831 = vmatpush2.msra.mxu0 0.0
    %3832 = vmatprep.mubr.f32.mxu0 0.0
    %3833 = vmatmul.mubr.f32.gmra.mxu0 %v3766
    %v3834 = vpop.f32.mrf.mxu0
    %v3835 = vadd.f32 0.0, %v3834
    %v3836 = vpop.f32.mrf.mxu0
    %3837 = vdwg.mxu0
    %v3838 = vsel %vm3765, %v3746, 0
    %3840 = vmatprep.subr.mxu0 0.0
    %3841 = vmatpush1.msra.mxu0 0.0
    %3842 = vmatprep.subr.mxu0 0.0
    %3843 = vmatpush1.msra.mxu0 0.0
    %3844 = vmatprep.subr.mxu0 0.0
    %3845 = vmatpush1.msra.mxu0 0.0
    %3846 = vmatprep.subr.mxu0 0.0
    %3847 = vmatpush1.msra.mxu0 0.0
    %3848 = vmatprep.subr.mxu0 0.0
    %3849 = vmatpush1.msra.mxu0 0.0
    %3850 = vmatprep.subr.mxu0 0.0
    %3851 = vmatpush1.msra.mxu0 0.0
    %3852 = vmatprep.subr.mxu0 0.0
    %3853 = vmatpush1.msra.mxu0 0.0
    %3854 = vmatprep.subr.mxu0 0.0
    %3855 = vmatpush1.msra.mxu0 0.0
    %3856 = vmatprep.subr.mxu0 0.0
    %3857 = vmatpush1.msra.mxu0 0.0
    %3858 = vmatprep.subr.mxu0 0.0
    %3859 = vmatpush1.msra.mxu0 0.0
    %3860 = vmatprep.subr.mxu0 0.0
    %3861 = vmatpush1.msra.mxu0 0.0
    %3862 = vmatprep.subr.mxu0 0.0
    %3863 = vmatpush1.msra.mxu0 0.0
    %3864 = vmatprep.subr.mxu0 0.0
    %3865 = vmatpush1.msra.mxu0 %v3757
    %3866 = vmatprep.subr.mxu0 0.0
    %3867 = vmatpush1.msra.mxu0 %v3756
    %3868 = vmatprep.subr.mxu0 0.0
    %3869 = vmatpush1.msra.mxu0 %v3755
    %3870 = vmatprep.subr.mxu0 0.0
    %3871 = vmatpush1.msra.mxu0 %v3754
    %3872 = vmatprep.subr.mxu0 0.0
    %3873 = vmatpush2.msra.mxu0 0.0
    %3874 = vmatprep.subr.mxu0 0.0
    %3875 = vmatpush2.msra.mxu0 0.0
    %3876 = vmatprep.subr.mxu0 0.0
    %3877 = vmatpush2.msra.mxu0 0.0
    %3878 = vmatprep.subr.mxu0 0.0
    %3879 = vmatpush2.msra.mxu0 0.0
    %3880 = vmatprep.subr.mxu0 0.0
    %3881 = vmatpush2.msra.mxu0 0.0
    %3882 = vmatprep.subr.mxu0 0.0
    %3883 = vmatpush2.msra.mxu0 0.0
    %3884 = vmatprep.subr.mxu0 0.0
    %3885 = vmatpush2.msra.mxu0 0.0
    %3886 = vmatprep.subr.mxu0 0.0
    %3887 = vmatpush2.msra.mxu0 0.0
    %3888 = vmatprep.subr.mxu0 0.0
    %3889 = vmatpush2.msra.mxu0 0.0
    %3890 = vmatprep.subr.mxu0 0.0
    %3891 = vmatpush2.msra.mxu0 0.0
    %3892 = vmatprep.subr.mxu0 0.0
    %3893 = vmatpush2.msra.mxu0 0.0
    %3894 = vmatprep.subr.mxu0 0.0
    %3895 = vmatpush2.msra.mxu0 0.0
    %3896 = vmatprep.subr.mxu0 0.0
    %3897 = vmatpush2.msra.mxu0 0.0
    %3898 = vmatprep.subr.mxu0 0.0
    %3899 = vmatpush2.msra.mxu0 0.0
    %3900 = vmatprep.subr.mxu0 0.0
    %3901 = vmatpush2.msra.mxu0 0.0
    %3902 = vmatprep.subr.mxu0 0.0
    %3903 = vmatpush2.msra.mxu0 0.0
    %3904 = vmatprep.mubr.f32.mxu0 0.0
    %3905 = vmatmul.mubr.f32.gmra.mxu0 %v3838
    %v3906 = vpop.f32.mrf.mxu0
    %v3907 = vadd.f32 %v3835, %v3906
    %v3908 = vpop.f32.mrf.mxu0
    %3909 = vdwg.mxu0
    %s3910 = scalar_lea.vmem %s7, 64
    %v3911 = vld [vmem:[%s3910] sm:$0xff]
    %v3912 = vld [vmem:[%s3910 + $0x8] sm:$0xff]
    %v3913 = vld [vmem:[%s3910 + $0x10] sm:$0xff]
    %v3914 = vld [vmem:[%s3910 + $0x18] sm:$0xff]
    %v3915 = vrot.slane %v3746, 2
    %v3916 = vsel %vm3765, %v3915, 0
    %3918 = vmatprep.subr.mxu0 0.0
    %3919 = vmatpush1.msra.mxu0 0.0
    %3920 = vmatprep.subr.mxu0 0.0
    %3921 = vmatpush1.msra.mxu0 0.0
    %3922 = vmatprep.subr.mxu0 0.0
    %3923 = vmatpush1.msra.mxu0 0.0
    %3924 = vmatprep.subr.mxu0 0.0
    %3925 = vmatpush1.msra.mxu0 0.0
    %3926 = vmatprep.subr.mxu0 0.0
    %3927 = vmatpush1.msra.mxu0 0.0
    %3928 = vmatprep.subr.mxu0 0.0
    %3929 = vmatpush1.msra.mxu0 0.0
    %3930 = vmatprep.subr.mxu0 0.0
    %3931 = vmatpush1.msra.mxu0 0.0
    %3932 = vmatprep.subr.mxu0 0.0
    %3933 = vmatpush1.msra.mxu0 0.0
    %3934 = vmatprep.subr.mxu0 0.0
    %3935 = vmatpush1.msra.mxu0 0.0
    %3936 = vmatprep.subr.mxu0 0.0
    %3937 = vmatpush1.msra.mxu0 0.0
    %3938 = vmatprep.subr.mxu0 0.0
    %3939 = vmatpush1.msra.mxu0 0.0
    %3940 = vmatprep.subr.mxu0 0.0
    %3941 = vmatpush1.msra.mxu0 0.0
    %3942 = vmatprep.subr.mxu0 0.0
    %3943 = vmatpush1.msra.mxu0 %v3914
    %3944 = vmatprep.subr.mxu0 0.0
    %3945 = vmatpush1.msra.mxu0 %v3913
    %3946 = vmatprep.subr.mxu0 0.0
    %3947 = vmatpush1.msra.mxu0 %v3912
    %3948 = vmatprep.subr.mxu0 0.0
    %3949 = vmatpush1.msra.mxu0 %v3911
    %3950 = vmatprep.subr.mxu0 0.0
    %3951 = vmatpush2.msra.mxu0 0.0
    %3952 = vmatprep.subr.mxu0 0.0
    %3953 = vmatpush2.msra.mxu0 0.0
    %3954 = vmatprep.subr.mxu0 0.0
    %3955 = vmatpush2.msra.mxu0 0.0
    %3956 = vmatprep.subr.mxu0 0.0
    %3957 = vmatpush2.msra.mxu0 0.0
    %3958 = vmatprep.subr.mxu0 0.0
    %3959 = vmatpush2.msra.mxu0 0.0
    %3960 = vmatprep.subr.mxu0 0.0
    %3961 = vmatpush2.msra.mxu0 0.0
    %3962 = vmatprep.subr.mxu0 0.0
    %3963 = vmatpush2.msra.mxu0 0.0
    %3964 = vmatprep.subr.mxu0 0.0
    %3965 = vmatpush2.msra.mxu0 0.0
    %3966 = vmatprep.subr.mxu0 0.0
    %3967 = vmatpush2.msra.mxu0 0.0
    %3968 = vmatprep.subr.mxu0 0.0
    %3969 = vmatpush2.msra.mxu0 0.0
    %3970 = vmatprep.subr.mxu0 0.0
    %3971 = vmatpush2.msra.mxu0 0.0
    %3972 = vmatprep.subr.mxu0 0.0
    %3973 = vmatpush2.msra.mxu0 0.0
    %3974 = vmatprep.subr.mxu0 0.0
    %3975 = vmatpush2.msra.mxu0 0.0
    %3976 = vmatprep.subr.mxu0 0.0
    %3977 = vmatpush2.msra.mxu0 0.0
    %3978 = vmatprep.subr.mxu0 0.0
    %3979 = vmatpush2.msra.mxu0 0.0
    %3980 = vmatprep.subr.mxu0 0.0
    %3981 = vmatpush2.msra.mxu0 0.0
    %3982 = vmatprep.mubr.f32.mxu0 0.0
    %3983 = vmatmul.mubr.f32.gmra.mxu0 %v3916
    %v3984 = vpop.f32.mrf.mxu0
    %v3985 = vadd.f32 0.0, %v3984
    %v3986 = vpop.f32.mrf.mxu0
    %3987 = vdwg.mxu0
    %v3988 = vadd.f32 %v3907, %v3985
    %s3989 = scalar_lea.vmem %s7, 96
    %v3990 = vld [vmem:[%s3989] sm:$0xff]
    %v3991 = vld [vmem:[%s3989 + $0x8] sm:$0xff]
    %v3992 = vld [vmem:[%s3989 + $0x10] sm:$0xff]
    %v3993 = vld [vmem:[%s3989 + $0x18] sm:$0xff]
    %v3994 = vrot.slane %v3746, 3
    %v3995 = vsel %vm3765, %v3994, 0
    %3997 = vmatprep.subr.mxu0 0.0
    %3998 = vmatpush1.msra.mxu0 0.0
    %3999 = vmatprep.subr.mxu0 0.0
    %4000 = vmatpush1.msra.mxu0 0.0
    %4001 = vmatprep.subr.mxu0 0.0
    %4002 = vmatpush1.msra.mxu0 0.0
    %4003 = vmatprep.subr.mxu0 0.0
    %4004 = vmatpush1.msra.mxu0 0.0
    %4005 = vmatprep.subr.mxu0 0.0
    %4006 = vmatpush1.msra.mxu0 0.0
    %4007 = vmatprep.subr.mxu0 0.0
    %4008 = vmatpush1.msra.mxu0 0.0
    %4009 = vmatprep.subr.mxu0 0.0
    %4010 = vmatpush1.msra.mxu0 0.0
    %4011 = vmatprep.subr.mxu0 0.0
    %4012 = vmatpush1.msra.mxu0 0.0
    %4013 = vmatprep.subr.mxu0 0.0
    %4014 = vmatpush1.msra.mxu0 0.0
    %4015 = vmatprep.subr.mxu0 0.0
    %4016 = vmatpush1.msra.mxu0 0.0
    %4017 = vmatprep.subr.mxu0 0.0
    %4018 = vmatpush1.msra.mxu0 0.0
    %4019 = vmatprep.subr.mxu0 0.0
    %4020 = vmatpush1.msra.mxu0 0.0
    %4021 = vmatprep.subr.mxu0 0.0
    %4022 = vmatpush1.msra.mxu0 %v3993
    %4023 = vmatprep.subr.mxu0 0.0
    %4024 = vmatpush1.msra.mxu0 %v3992
    %4025 = vmatprep.subr.mxu0 0.0
    %4026 = vmatpush1.msra.mxu0 %v3991
    %4027 = vmatprep.subr.mxu0 0.0
    %4028 = vmatpush1.msra.mxu0 %v3990
    %4029 = vmatprep.subr.mxu0 0.0
    %4030 = vmatpush2.msra.mxu0 0.0
    %4031 = vmatprep.subr.mxu0 0.0
    %4032 = vmatpush2.msra.mxu0 0.0
    %4033 = vmatprep.subr.mxu0 0.0
    %4034 = vmatpush2.msra.mxu0 0.0
    %4035 = vmatprep.subr.mxu0 0.0
    %4036 = vmatpush2.msra.mxu0 0.0
    %4037 = vmatprep.subr.mxu0 0.0
    %4038 = vmatpush2.msra.mxu0 0.0
    %4039 = vmatprep.subr.mxu0 0.0
    %4040 = vmatpush2.msra.mxu0 0.0
    %4041 = vmatprep.subr.mxu0 0.0
    %4042 = vmatpush2.msra.mxu0 0.0
    %4043 = vmatprep.subr.mxu0 0.0
    %4044 = vmatpush2.msra.mxu0 0.0
    %4045 = vmatprep.subr.mxu0 0.0
    %4046 = vmatpush2.msra.mxu0 0.0
    %4047 = vmatprep.subr.mxu0 0.0
    %4048 = vmatpush2.msra.mxu0 0.0
    %4049 = vmatprep.subr.mxu0 0.0
    %4050 = vmatpush2.msra.mxu0 0.0
    %4051 = vmatprep.subr.mxu0 0.0
    %4052 = vmatpush2.msra.mxu0 0.0
    %4053 = vmatprep.subr.mxu0 0.0
    %4054 = vmatpush2.msra.mxu0 0.0
    %4055 = vmatprep.subr.mxu0 0.0
    %4056 = vmatpush2.msra.mxu0 0.0
    %4057 = vmatprep.subr.mxu0 0.0
    %4058 = vmatpush2.msra.mxu0 0.0
    %4059 = vmatprep.subr.mxu0 0.0
    %4060 = vmatpush2.msra.mxu0 0.0
    %4061 = vmatprep.mubr.f32.mxu0 0.0
    %4062 = vmatmul.mubr.f32.gmra.mxu0 %v3995
    %v4063 = vpop.f32.mrf.mxu0
    %v4064 = vadd.f32 0.0, %v4063
    %v4065 = vpop.f32.mrf.mxu0
    %4066 = vdwg.mxu0
    %v4067 = vadd.f32 %v3988, %v4064
    %s4068 = scalar_lea.vmem %s7, 128
    %v4069 = vld [vmem:[%s4068] sm:$0xff]
    %v4070 = vld [vmem:[%s4068 + $0x8] sm:$0xff]
    %v4071 = vld [vmem:[%s4068 + $0x10] sm:$0xff]
    %v4072 = vld [vmem:[%s4068 + $0x18] sm:$0xff]
    %v4073 = vrot.slane %v3746, 4
    %v4074 = vsel %vm3765, %v4073, 0
    %4076 = vmatprep.subr.mxu0 0.0
    %4077 = vmatpush1.msra.mxu0 0.0
    %4078 = vmatprep.subr.mxu0 0.0
    %4079 = vmatpush1.msra.mxu0 0.0
    %4080 = vmatprep.subr.mxu0 0.0
    %4081 = vmatpush1.msra.mxu0 0.0
    %4082 = vmatprep.subr.mxu0 0.0
    %4083 = vmatpush1.msra.mxu0 0.0
    %4084 = vmatprep.subr.mxu0 0.0
    %4085 = vmatpush1.msra.mxu0 0.0
    %4086 = vmatprep.subr.mxu0 0.0
    %4087 = vmatpush1.msra.mxu0 0.0
    %4088 = vmatprep.subr.mxu0 0.0
    %4089 = vmatpush1.msra.mxu0 0.0
    %4090 = vmatprep.subr.mxu0 0.0
    %4091 = vmatpush1.msra.mxu0 0.0
    %4092 = vmatprep.subr.mxu0 0.0
    %4093 = vmatpush1.msra.mxu0 0.0
    %4094 = vmatprep.subr.mxu0 0.0
    %4095 = vmatpush1.msra.mxu0 0.0
    %4096 = vmatprep.subr.mxu0 0.0
    %4097 = vmatpush1.msra.mxu0 0.0
    %4098 = vmatprep.subr.mxu0 0.0
    %4099 = vmatpush1.msra.mxu0 0.0
    %4100 = vmatprep.subr.mxu0 0.0
    %4101 = vmatpush1.msra.mxu0 %v4072
    %4102 = vmatprep.subr.mxu0 0.0
    %4103 = vmatpush1.msra.mxu0 %v4071
    %4104 = vmatprep.subr.mxu0 0.0
    %4105 = vmatpush1.msra.mxu0 %v4070
    %4106 = vmatprep.subr.mxu0 0.0
    %4107 = vmatpush1.msra.mxu0 %v4069
    %4108 = vmatprep.subr.mxu0 0.0
    %4109 = vmatpush2.msra.mxu0 0.0
    %4110 = vmatprep.subr.mxu0 0.0
    %4111 = vmatpush2.msra.mxu0 0.0
    %4112 = vmatprep.subr.mxu0 0.0
    %4113 = vmatpush2.msra.mxu0 0.0
    %4114 = vmatprep.subr.mxu0 0.0
    %4115 = vmatpush2.msra.mxu0 0.0
    %4116 = vmatprep.subr.mxu0 0.0
    %4117 = vmatpush2.msra.mxu0 0.0
    %4118 = vmatprep.subr.mxu0 0.0
    %4119 = vmatpush2.msra.mxu0 0.0
    %4120 = vmatprep.subr.mxu0 0.0
    %4121 = vmatpush2.msra.mxu0 0.0
    %4122 = vmatprep.subr.mxu0 0.0
    %4123 = vmatpush2.msra.mxu0 0.0
    %4124 = vmatprep.subr.mxu0 0.0
    %4125 = vmatpush2.msra.mxu0 0.0
    %4126 = vmatprep.subr.mxu0 0.0
    %4127 = vmatpush2.msra.mxu0 0.0
    %4128 = vmatprep.subr.mxu0 0.0
    %4129 = vmatpush2.msra.mxu0 0.0
    %4130 = vmatprep.subr.mxu0 0.0
    %4131 = vmatpush2.msra.mxu0 0.0
    %4132 = vmatprep.subr.mxu0 0.0
    %4133 = vmatpush2.msra.mxu0 0.0
    %4134 = vmatprep.subr.mxu0 0.0
    %4135 = vmatpush2.msra.mxu0 0.0
    %4136 = vmatprep.subr.mxu0 0.0
    %4137 = vmatpush2.msra.mxu0 0.0
    %4138 = vmatprep.subr.mxu0 0.0
    %4139 = vmatpush2.msra.mxu0 0.0
    %4140 = vmatprep.mubr.f32.mxu0 0.0
    %4141 = vmatmul.mubr.f32.gmra.mxu0 %v4074
    %v4142 = vpop.f32.mrf.mxu0
    %v4143 = vadd.f32 0.0, %v4142
    %v4144 = vpop.f32.mrf.mxu0
    %4145 = vdwg.mxu0
    %v4146 = vadd.f32 %v4067, %v4143
    %s4147 = scalar_lea.vmem %s7, 160
    %v4148 = vld [vmem:[%s4147] sm:$0xff]
    %v4149 = vld [vmem:[%s4147 + $0x8] sm:$0xff]
    %v4150 = vld [vmem:[%s4147 + $0x10] sm:$0xff]
    %v4151 = vld [vmem:[%s4147 + $0x18] sm:$0xff]
    %v4152 = vrot.slane %v3746, 5
    %v4153 = vsel %vm3765, %v4152, 0
    %4155 = vmatprep.subr.mxu0 0.0
    %4156 = vmatpush1.msra.mxu0 0.0
    %4157 = vmatprep.subr.mxu0 0.0
    %4158 = vmatpush1.msra.mxu0 0.0
    %4159 = vmatprep.subr.mxu0 0.0
    %4160 = vmatpush1.msra.mxu0 0.0
    %4161 = vmatprep.subr.mxu0 0.0
    %4162 = vmatpush1.msra.mxu0 0.0
    %4163 = vmatprep.subr.mxu0 0.0
    %4164 = vmatpush1.msra.mxu0 0.0
    %4165 = vmatprep.subr.mxu0 0.0
    %4166 = vmatpush1.msra.mxu0 0.0
    %4167 = vmatprep.subr.mxu0 0.0
    %4168 = vmatpush1.msra.mxu0 0.0
    %4169 = vmatprep.subr.mxu0 0.0
    %4170 = vmatpush1.msra.mxu0 0.0
    %4171 = vmatprep.subr.mxu0 0.0
    %4172 = vmatpush1.msra.mxu0 0.0
    %4173 = vmatprep.subr.mxu0 0.0
    %4174 = vmatpush1.msra.mxu0 0.0
    %4175 = vmatprep.subr.mxu0 0.0
    %4176 = vmatpush1.msra.mxu0 0.0
    %4177 = vmatprep.subr.mxu0 0.0
    %4178 = vmatpush1.msra.mxu0 0.0
    %4179 = vmatprep.subr.mxu0 0.0
    %4180 = vmatpush1.msra.mxu0 %v4151
    %4181 = vmatprep.subr.mxu0 0.0
    %4182 = vmatpush1.msra.mxu0 %v4150
    %4183 = vmatprep.subr.mxu0 0.0
    %4184 = vmatpush1.msra.mxu0 %v4149
    %4185 = vmatprep.subr.mxu0 0.0
    %4186 = vmatpush1.msra.mxu0 %v4148
    %4187 = vmatprep.subr.mxu0 0.0
    %4188 = vmatpush2.msra.mxu0 0.0
    %4189 = vmatprep.subr.mxu0 0.0
    %4190 = vmatpush2.msra.mxu0 0.0
    %4191 = vmatprep.subr.mxu0 0.0
    %4192 = vmatpush2.msra.mxu0 0.0
    %4193 = vmatprep.subr.mxu0 0.0
    %4194 = vmatpush2.msra.mxu0 0.0
    %4195 = vmatprep.subr.mxu0 0.0
    %4196 = vmatpush2.msra.mxu0 0.0
    %4197 = vmatprep.subr.mxu0 0.0
    %4198 = vmatpush2.msra.mxu0 0.0
    %4199 = vmatprep.subr.mxu0 0.0
    %4200 = vmatpush2.msra.mxu0 0.0
    %4201 = vmatprep.subr.mxu0 0.0
    %4202 = vmatpush2.msra.mxu0 0.0
    %4203 = vmatprep.subr.mxu0 0.0
    %4204 = vmatpush2.msra.mxu0 0.0
    %4205 = vmatprep.subr.mxu0 0.0
    %4206 = vmatpush2.msra.mxu0 0.0
    %4207 = vmatprep.subr.mxu0 0.0
    %4208 = vmatpush2.msra.mxu0 0.0
    %4209 = vmatprep.subr.mxu0 0.0
    %4210 = vmatpush2.msra.mxu0 0.0
    %4211 = vmatprep.subr.mxu0 0.0
    %4212 = vmatpush2.msra.mxu0 0.0
    %4213 = vmatprep.subr.mxu0 0.0
    %4214 = vmatpush2.msra.mxu0 0.0
    %4215 = vmatprep.subr.mxu0 0.0
    %4216 = vmatpush2.msra.mxu0 0.0
    %4217 = vmatprep.subr.mxu0 0.0
    %4218 = vmatpush2.msra.mxu0 0.0
    %4219 = vmatprep.mubr.f32.mxu0 0.0
    %4220 = vmatmul.mubr.f32.gmra.mxu0 %v4153
    %v4221 = vpop.f32.mrf.mxu0
    %v4222 = vadd.f32 0.0, %v4221
    %v4223 = vpop.f32.mrf.mxu0
    %4224 = vdwg.mxu0
    %v4225 = vadd.f32 %v4146, %v4222
    %s4226 = scalar_lea.vmem %s7, 192
    %v4227 = vld [vmem:[%s4226] sm:$0xff]
    %v4228 = vld [vmem:[%s4226 + $0x8] sm:$0xff]
    %v4229 = vld [vmem:[%s4226 + $0x10] sm:$0xff]
    %v4230 = vld [vmem:[%s4226 + $0x18] sm:$0xff]
    %v4231 = vrot.slane %v3746, 6
    %v4232 = vsel %vm3765, %v4231, 0
    %4234 = vmatprep.subr.mxu0 0.0
    %4235 = vmatpush1.msra.mxu0 0.0
    %4236 = vmatprep.subr.mxu0 0.0
    %4237 = vmatpush1.msra.mxu0 0.0
    %4238 = vmatprep.subr.mxu0 0.0
    %4239 = vmatpush1.msra.mxu0 0.0
    %4240 = vmatprep.subr.mxu0 0.0
    %4241 = vmatpush1.msra.mxu0 0.0
    %4242 = vmatprep.subr.mxu0 0.0
    %4243 = vmatpush1.msra.mxu0 0.0
    %4244 = vmatprep.subr.mxu0 0.0
    %4245 = vmatpush1.msra.mxu0 0.0
    %4246 = vmatprep.subr.mxu0 0.0
    %4247 = vmatpush1.msra.mxu0 0.0
    %4248 = vmatprep.subr.mxu0 0.0
    %4249 = vmatpush1.msra.mxu0 0.0
    %4250 = vmatprep.subr.mxu0 0.0
    %4251 = vmatpush1.msra.mxu0 0.0
    %4252 = vmatprep.subr.mxu0 0.0
    %4253 = vmatpush1.msra.mxu0 0.0
    %4254 = vmatprep.subr.mxu0 0.0
    %4255 = vmatpush1.msra.mxu0 0.0
    %4256 = vmatprep.subr.mxu0 0.0
    %4257 = vmatpush1.msra.mxu0 0.0
    %4258 = vmatprep.subr.mxu0 0.0
    %4259 = vmatpush1.msra.mxu0 %v4230
    %4260 = vmatprep.subr.mxu0 0.0
    %4261 = vmatpush1.msra.mxu0 %v4229
    %4262 = vmatprep.subr.mxu0 0.0
    %4263 = vmatpush1.msra.mxu0 %v4228
    %4264 = vmatprep.subr.mxu0 0.0
    %4265 = vmatpush1.msra.mxu0 %v4227
    %4266 = vmatprep.subr.mxu0 0.0
    %4267 = vmatpush2.msra.mxu0 0.0
    %4268 = vmatprep.subr.mxu0 0.0
    %4269 = vmatpush2.msra.mxu0 0.0
    %4270 = vmatprep.subr.mxu0 0.0
    %4271 = vmatpush2.msra.mxu0 0.0
    %4272 = vmatprep.subr.mxu0 0.0
    %4273 = vmatpush2.msra.mxu0 0.0
    %4274 = vmatprep.subr.mxu0 0.0
    %4275 = vmatpush2.msra.mxu0 0.0
    %4276 = vmatprep.subr.mxu0 0.0
    %4277 = vmatpush2.msra.mxu0 0.0
    %4278 = vmatprep.subr.mxu0 0.0
    %4279 = vmatpush2.msra.mxu0 0.0
    %4280 = vmatprep.subr.mxu0 0.0
    %4281 = vmatpush2.msra.mxu0 0.0
    %4282 = vmatprep.subr.mxu0 0.0
    %4283 = vmatpush2.msra.mxu0 0.0
    %4284 = vmatprep.subr.mxu0 0.0
    %4285 = vmatpush2.msra.mxu0 0.0
    %4286 = vmatprep.subr.mxu0 0.0
    %4287 = vmatpush2.msra.mxu0 0.0
    %4288 = vmatprep.subr.mxu0 0.0
    %4289 = vmatpush2.msra.mxu0 0.0
    %4290 = vmatprep.subr.mxu0 0.0
    %4291 = vmatpush2.msra.mxu0 0.0
    %4292 = vmatprep.subr.mxu0 0.0
    %4293 = vmatpush2.msra.mxu0 0.0
    %4294 = vmatprep.subr.mxu0 0.0
    %4295 = vmatpush2.msra.mxu0 0.0
    %4296 = vmatprep.subr.mxu0 0.0
    %4297 = vmatpush2.msra.mxu0 0.0
    %4298 = vmatprep.mubr.f32.mxu0 0.0
    %4299 = vmatmul.mubr.f32.gmra.mxu0 %v4232
    %v4300 = vpop.f32.mrf.mxu0
    %v4301 = vadd.f32 0.0, %v4300
    %v4302 = vpop.f32.mrf.mxu0
    %4303 = vdwg.mxu0
    %v4304 = vadd.f32 %v4225, %v4301
    %s4305 = scalar_lea.vmem %s7, 224
    %v4306 = vld [vmem:[%s4305] sm:$0xff]
    %v4307 = vld [vmem:[%s4305 + $0x8] sm:$0xff]
    %v4308 = vld [vmem:[%s4305 + $0x10] sm:$0xff]
    %v4309 = vld [vmem:[%s4305 + $0x18] sm:$0xff]
    %v4310 = vrot.slane %v3746, 7
    %v4311 = vsel %vm3765, %v4310, 0
    %4313 = vmatprep.subr.mxu0 0.0
    %4314 = vmatpush1.msra.mxu0 0.0
    %4315 = vmatprep.subr.mxu0 0.0
    %4316 = vmatpush1.msra.mxu0 0.0
    %4317 = vmatprep.subr.mxu0 0.0
    %4318 = vmatpush1.msra.mxu0 0.0
    %4319 = vmatprep.subr.mxu0 0.0
    %4320 = vmatpush1.msra.mxu0 0.0
    %4321 = vmatprep.subr.mxu0 0.0
    %4322 = vmatpush1.msra.mxu0 0.0
    %4323 = vmatprep.subr.mxu0 0.0
    %4324 = vmatpush1.msra.mxu0 0.0
    %4325 = vmatprep.subr.mxu0 0.0
    %4326 = vmatpush1.msra.mxu0 0.0
    %4327 = vmatprep.subr.mxu0 0.0
    %4328 = vmatpush1.msra.mxu0 0.0
    %4329 = vmatprep.subr.mxu0 0.0
    %4330 = vmatpush1.msra.mxu0 0.0
    %4331 = vmatprep.subr.mxu0 0.0
    %4332 = vmatpush1.msra.mxu0 0.0
    %4333 = vmatprep.subr.mxu0 0.0
    %4334 = vmatpush1.msra.mxu0 0.0
    %4335 = vmatprep.subr.mxu0 0.0
    %4336 = vmatpush1.msra.mxu0 0.0
    %4337 = vmatprep.subr.mxu0 0.0
    %4338 = vmatpush1.msra.mxu0 %v4309
    %4339 = vmatprep.subr.mxu0 0.0
    %4340 = vmatpush1.msra.mxu0 %v4308
    %4341 = vmatprep.subr.mxu0 0.0
    %4342 = vmatpush1.msra.mxu0 %v4307
    %4343 = vmatprep.subr.mxu0 0.0
    %4344 = vmatpush1.msra.mxu0 %v4306
    %4345 = vmatprep.subr.mxu0 0.0
    %4346 = vmatpush2.msra.mxu0 0.0
    %4347 = vmatprep.subr.mxu0 0.0
    %4348 = vmatpush2.msra.mxu0 0.0
    %4349 = vmatprep.subr.mxu0 0.0
    %4350 = vmatpush2.msra.mxu0 0.0
    %4351 = vmatprep.subr.mxu0 0.0
    %4352 = vmatpush2.msra.mxu0 0.0
    %4353 = vmatprep.subr.mxu0 0.0
    %4354 = vmatpush2.msra.mxu0 0.0
    %4355 = vmatprep.subr.mxu0 0.0
    %4356 = vmatpush2.msra.mxu0 0.0
    %4357 = vmatprep.subr.mxu0 0.0
    %4358 = vmatpush2.msra.mxu0 0.0
    %4359 = vmatprep.subr.mxu0 0.0
    %4360 = vmatpush2.msra.mxu0 0.0
    %4361 = vmatprep.subr.mxu0 0.0
    %4362 = vmatpush2.msra.mxu0 0.0
    %4363 = vmatprep.subr.mxu0 0.0
    %4364 = vmatpush2.msra.mxu0 0.0
    %4365 = vmatprep.subr.mxu0 0.0
    %4366 = vmatpush2.msra.mxu0 0.0
    %4367 = vmatprep.subr.mxu0 0.0
    %4368 = vmatpush2.msra.mxu0 0.0
    %4369 = vmatprep.subr.mxu0 0.0
    %4370 = vmatpush2.msra.mxu0 0.0
    %4371 = vmatprep.subr.mxu0 0.0
    %4372 = vmatpush2.msra.mxu0 0.0
    %4373 = vmatprep.subr.mxu0 0.0
    %4374 = vmatpush2.msra.mxu0 0.0
    %4375 = vmatprep.subr.mxu0 0.0
    %4376 = vmatpush2.msra.mxu0 0.0
    %4377 = vmatprep.mubr.f32.mxu0 0.0
    %4378 = vmatmul.mubr.f32.gmra.mxu0 %v4311
    %v4379 = vpop.f32.mrf.mxu0
    %v4380 = vadd.f32 0.0, %v4379
    %v4381 = vpop.f32.mrf.mxu0
    %4382 = vdwg.mxu0
    %v4383 = vadd.f32 %v4304, %v4380
    %s4384 = scalar_lea.vmem %s7, 256
    %v4385 = vld [vmem:[%s4384] sm:$0xff]
    %v4386 = vld [vmem:[%s4384 + $0x8] sm:$0xff]
    %v4387 = vld [vmem:[%s4384 + $0x10] sm:$0xff]
    %v4388 = vld [vmem:[%s4384 + $0x18] sm:$0xff]
    %v4390 = vsel %vm3765, %v3751, 0
    %4392 = vmatprep.subr.mxu0 0.0
    %4393 = vmatpush1.msra.mxu0 0.0
    %4394 = vmatprep.subr.mxu0 0.0
    %4395 = vmatpush1.msra.mxu0 0.0
    %4396 = vmatprep.subr.mxu0 0.0
    %4397 = vmatpush1.msra.mxu0 0.0
    %4398 = vmatprep.subr.mxu0 0.0
    %4399 = vmatpush1.msra.mxu0 0.0
    %4400 = vmatprep.subr.mxu0 0.0
    %4401 = vmatpush1.msra.mxu0 0.0
    %4402 = vmatprep.subr.mxu0 0.0
    %4403 = vmatpush1.msra.mxu0 0.0
    %4404 = vmatprep.subr.mxu0 0.0
    %4405 = vmatpush1.msra.mxu0 0.0
    %4406 = vmatprep.subr.mxu0 0.0
    %4407 = vmatpush1.msra.mxu0 0.0
    %4408 = vmatprep.subr.mxu0 0.0
    %4409 = vmatpush1.msra.mxu0 0.0
    %4410 = vmatprep.subr.mxu0 0.0
    %4411 = vmatpush1.msra.mxu0 0.0
    %4412 = vmatprep.subr.mxu0 0.0
    %4413 = vmatpush1.msra.mxu0 0.0
    %4414 = vmatprep.subr.mxu0 0.0
    %4415 = vmatpush1.msra.mxu0 0.0
    %4416 = vmatprep.subr.mxu0 0.0
    %4417 = vmatpush1.msra.mxu0 %v4388
    %4418 = vmatprep.subr.mxu0 0.0
    %4419 = vmatpush1.msra.mxu0 %v4387
    %4420 = vmatprep.subr.mxu0 0.0
    %4421 = vmatpush1.msra.mxu0 %v4386
    %4422 = vmatprep.subr.mxu0 0.0
    %4423 = vmatpush1.msra.mxu0 %v4385
    %4424 = vmatprep.subr.mxu0 0.0
    %4425 = vmatpush2.msra.mxu0 0.0
    %4426 = vmatprep.subr.mxu0 0.0
    %4427 = vmatpush2.msra.mxu0 0.0
    %4428 = vmatprep.subr.mxu0 0.0
    %4429 = vmatpush2.msra.mxu0 0.0
    %4430 = vmatprep.subr.mxu0 0.0
    %4431 = vmatpush2.msra.mxu0 0.0
    %4432 = vmatprep.subr.mxu0 0.0
    %4433 = vmatpush2.msra.mxu0 0.0
    %4434 = vmatprep.subr.mxu0 0.0
    %4435 = vmatpush2.msra.mxu0 0.0
    %4436 = vmatprep.subr.mxu0 0.0
    %4437 = vmatpush2.msra.mxu0 0.0
    %4438 = vmatprep.subr.mxu0 0.0
    %4439 = vmatpush2.msra.mxu0 0.0
    %4440 = vmatprep.subr.mxu0 0.0
    %4441 = vmatpush2.msra.mxu0 0.0
    %4442 = vmatprep.subr.mxu0 0.0
    %4443 = vmatpush2.msra.mxu0 0.0
    %4444 = vmatprep.subr.mxu0 0.0
    %4445 = vmatpush2.msra.mxu0 0.0
    %4446 = vmatprep.subr.mxu0 0.0
    %4447 = vmatpush2.msra.mxu0 0.0
    %4448 = vmatprep.subr.mxu0 0.0
    %4449 = vmatpush2.msra.mxu0 0.0
    %4450 = vmatprep.subr.mxu0 0.0
    %4451 = vmatpush2.msra.mxu0 0.0
    %4452 = vmatprep.subr.mxu0 0.0
    %4453 = vmatpush2.msra.mxu0 0.0
    %4454 = vmatprep.subr.mxu0 0.0
    %4455 = vmatpush2.msra.mxu0 0.0
    %4456 = vmatprep.mubr.f32.mxu0 0.0
    %4457 = vmatmul.mubr.f32.gmra.mxu0 %v4390
    %v4458 = vpop.f32.mrf.mxu0
    %v4459 = vadd.f32 0.0, %v4458
    %v4460 = vpop.f32.mrf.mxu0
    %4461 = vdwg.mxu0
    %v4462 = vadd.f32 %v4383, %v4459
    %s4463 = scalar_lea.vmem %s7, 288
    %v4464 = vld [vmem:[%s4463] sm:$0xff]
    %v4465 = vld [vmem:[%s4463 + $0x8] sm:$0xff]
    %v4466 = vld [vmem:[%s4463 + $0x10] sm:$0xff]
    %v4467 = vld [vmem:[%s4463 + $0x18] sm:$0xff]
    %v4468 = vrot.slane %v3751, 1
    %v4469 = vsel %vm3765, %v4468, 0
    %4471 = vmatprep.subr.mxu0 0.0
    %4472 = vmatpush1.msra.mxu0 0.0
    %4473 = vmatprep.subr.mxu0 0.0
    %4474 = vmatpush1.msra.mxu0 0.0
    %4475 = vmatprep.subr.mxu0 0.0
    %4476 = vmatpush1.msra.mxu0 0.0
    %4477 = vmatprep.subr.mxu0 0.0
    %4478 = vmatpush1.msra.mxu0 0.0
    %4479 = vmatprep.subr.mxu0 0.0
    %4480 = vmatpush1.msra.mxu0 0.0
    %4481 = vmatprep.subr.mxu0 0.0
    %4482 = vmatpush1.msra.mxu0 0.0
    %4483 = vmatprep.subr.mxu0 0.0
    %4484 = vmatpush1.msra.mxu0 0.0
    %4485 = vmatprep.subr.mxu0 0.0
    %4486 = vmatpush1.msra.mxu0 0.0
    %4487 = vmatprep.subr.mxu0 0.0
    %4488 = vmatpush1.msra.mxu0 0.0
    %4489 = vmatprep.subr.mxu0 0.0
    %4490 = vmatpush1.msra.mxu0 0.0
    %4491 = vmatprep.subr.mxu0 0.0
    %4492 = vmatpush1.msra.mxu0 0.0
    %4493 = vmatprep.subr.mxu0 0.0
    %4494 = vmatpush1.msra.mxu0 0.0
    %4495 = vmatprep.subr.mxu0 0.0
    %4496 = vmatpush1.msra.mxu0 %v4467
    %4497 = vmatprep.subr.mxu0 0.0
    %4498 = vmatpush1.msra.mxu0 %v4466
    %4499 = vmatprep.subr.mxu0 0.0
    %4500 = vmatpush1.msra.mxu0 %v4465
    %4501 = vmatprep.subr.mxu0 0.0
    %4502 = vmatpush1.msra.mxu0 %v4464
    %4503 = vmatprep.subr.mxu0 0.0
    %4504 = vmatpush2.msra.mxu0 0.0
    %4505 = vmatprep.subr.mxu0 0.0
    %4506 = vmatpush2.msra.mxu0 0.0
    %4507 = vmatprep.subr.mxu0 0.0
    %4508 = vmatpush2.msra.mxu0 0.0
    %4509 = vmatprep.subr.mxu0 0.0
    %4510 = vmatpush2.msra.mxu0 0.0
    %4511 = vmatprep.subr.mxu0 0.0
    %4512 = vmatpush2.msra.mxu0 0.0
    %4513 = vmatprep.subr.mxu0 0.0
    %4514 = vmatpush2.msra.mxu0 0.0
    %4515 = vmatprep.subr.mxu0 0.0
    %4516 = vmatpush2.msra.mxu0 0.0
    %4517 = vmatprep.subr.mxu0 0.0
    %4518 = vmatpush2.msra.mxu0 0.0
    %4519 = vmatprep.subr.mxu0 0.0
    %4520 = vmatpush2.msra.mxu0 0.0
    %4521 = vmatprep.subr.mxu0 0.0
    %4522 = vmatpush2.msra.mxu0 0.0
    %4523 = vmatprep.subr.mxu0 0.0
    %4524 = vmatpush2.msra.mxu0 0.0
    %4525 = vmatprep.subr.mxu0 0.0
    %4526 = vmatpush2.msra.mxu0 0.0
    %4527 = vmatprep.subr.mxu0 0.0
    %4528 = vmatpush2.msra.mxu0 0.0
    %4529 = vmatprep.subr.mxu0 0.0
    %4530 = vmatpush2.msra.mxu0 0.0
    %4531 = vmatprep.subr.mxu0 0.0
    %4532 = vmatpush2.msra.mxu0 0.0
    %4533 = vmatprep.subr.mxu0 0.0
    %4534 = vmatpush2.msra.mxu0 0.0
    %4535 = vmatprep.mubr.f32.mxu0 0.0
    %4536 = vmatmul.mubr.f32.gmra.mxu0 %v4469
    %v4537 = vpop.f32.mrf.mxu0
    %v4538 = vadd.f32 0.0, %v4537
    %v4539 = vpop.f32.mrf.mxu0
    %4540 = vdwg.mxu0
    %v4541 = vadd.f32 %v4462, %v4538
    %s4542 = scalar_lea.vmem %s7, 320
    %v4543 = vld [vmem:[%s4542] sm:$0xff]
    %v4544 = vld [vmem:[%s4542 + $0x8] sm:$0xff]
    %v4545 = vld [vmem:[%s4542 + $0x10] sm:$0xff]
    %v4546 = vld [vmem:[%s4542 + $0x18] sm:$0xff]
    %v4547 = vrot.slane %v3751, 2
    %v4548 = vsel %vm3765, %v4547, 0
    %4550 = vmatprep.subr.mxu0 0.0
    %4551 = vmatpush1.msra.mxu0 0.0
    %4552 = vmatprep.subr.mxu0 0.0
    %4553 = vmatpush1.msra.mxu0 0.0
    %4554 = vmatprep.subr.mxu0 0.0
    %4555 = vmatpush1.msra.mxu0 0.0
    %4556 = vmatprep.subr.mxu0 0.0
    %4557 = vmatpush1.msra.mxu0 0.0
    %4558 = vmatprep.subr.mxu0 0.0
    %4559 = vmatpush1.msra.mxu0 0.0
    %4560 = vmatprep.subr.mxu0 0.0
    %4561 = vmatpush1.msra.mxu0 0.0
    %4562 = vmatprep.subr.mxu0 0.0
    %4563 = vmatpush1.msra.mxu0 0.0
    %4564 = vmatprep.subr.mxu0 0.0
    %4565 = vmatpush1.msra.mxu0 0.0
    %4566 = vmatprep.subr.mxu0 0.0
    %4567 = vmatpush1.msra.mxu0 0.0
    %4568 = vmatprep.subr.mxu0 0.0
    %4569 = vmatpush1.msra.mxu0 0.0
    %4570 = vmatprep.subr.mxu0 0.0
    %4571 = vmatpush1.msra.mxu0 0.0
    %4572 = vmatprep.subr.mxu0 0.0
    %4573 = vmatpush1.msra.mxu0 0.0
    %4574 = vmatprep.subr.mxu0 0.0
    %4575 = vmatpush1.msra.mxu0 %v4546
    %4576 = vmatprep.subr.mxu0 0.0
    %4577 = vmatpush1.msra.mxu0 %v4545
    %4578 = vmatprep.subr.mxu0 0.0
    %4579 = vmatpush1.msra.mxu0 %v4544
    %4580 = vmatprep.subr.mxu0 0.0
    %4581 = vmatpush1.msra.mxu0 %v4543
    %4582 = vmatprep.subr.mxu0 0.0
    %4583 = vmatpush2.msra.mxu0 0.0
    %4584 = vmatprep.subr.mxu0 0.0
    %4585 = vmatpush2.msra.mxu0 0.0
    %4586 = vmatprep.subr.mxu0 0.0
    %4587 = vmatpush2.msra.mxu0 0.0
    %4588 = vmatprep.subr.mxu0 0.0
    %4589 = vmatpush2.msra.mxu0 0.0
    %4590 = vmatprep.subr.mxu0 0.0
    %4591 = vmatpush2.msra.mxu0 0.0
    %4592 = vmatprep.subr.mxu0 0.0
    %4593 = vmatpush2.msra.mxu0 0.0
    %4594 = vmatprep.subr.mxu0 0.0
    %4595 = vmatpush2.msra.mxu0 0.0
    %4596 = vmatprep.subr.mxu0 0.0
    %4597 = vmatpush2.msra.mxu0 0.0
    %4598 = vmatprep.subr.mxu0 0.0
    %4599 = vmatpush2.msra.mxu0 0.0
    %4600 = vmatprep.subr.mxu0 0.0
    %4601 = vmatpush2.msra.mxu0 0.0
    %4602 = vmatprep.subr.mxu0 0.0
    %4603 = vmatpush2.msra.mxu0 0.0
    %4604 = vmatprep.subr.mxu0 0.0
    %4605 = vmatpush2.msra.mxu0 0.0
    %4606 = vmatprep.subr.mxu0 0.0
    %4607 = vmatpush2.msra.mxu0 0.0
    %4608 = vmatprep.subr.mxu0 0.0
    %4609 = vmatpush2.msra.mxu0 0.0
    %4610 = vmatprep.subr.mxu0 0.0
    %4611 = vmatpush2.msra.mxu0 0.0
    %4612 = vmatprep.subr.mxu0 0.0
    %4613 = vmatpush2.msra.mxu0 0.0
    %4614 = vmatprep.mubr.f32.mxu0 0.0
    %4615 = vmatmul.mubr.f32.gmra.mxu0 %v4548
    %v4616 = vpop.f32.mrf.mxu0
    %v4617 = vadd.f32 0.0, %v4616
    %v4618 = vpop.f32.mrf.mxu0
    %4619 = vdwg.mxu0
    %v4620 = vadd.f32 %v4541, %v4617
    %s4621 = scalar_lea.vmem %s7, 352
    %v4622 = vld [vmem:[%s4621] sm:$0xff]
    %v4623 = vld [vmem:[%s4621 + $0x8] sm:$0xff]
    %v4624 = vld [vmem:[%s4621 + $0x10] sm:$0xff]
    %v4625 = vld [vmem:[%s4621 + $0x18] sm:$0xff]
    %v4626 = vrot.slane %v3751, 3
    %v4627 = vsel %vm3765, %v4626, 0
    %4629 = vmatprep.subr.mxu0 0.0
    %4630 = vmatpush1.msra.mxu0 0.0
    %4631 = vmatprep.subr.mxu0 0.0
    %4632 = vmatpush1.msra.mxu0 0.0
    %4633 = vmatprep.subr.mxu0 0.0
    %4634 = vmatpush1.msra.mxu0 0.0
    %4635 = vmatprep.subr.mxu0 0.0
    %4636 = vmatpush1.msra.mxu0 0.0
    %4637 = vmatprep.subr.mxu0 0.0
    %4638 = vmatpush1.msra.mxu0 0.0
    %4639 = vmatprep.subr.mxu0 0.0
    %4640 = vmatpush1.msra.mxu0 0.0
    %4641 = vmatprep.subr.mxu0 0.0
    %4642 = vmatpush1.msra.mxu0 0.0
    %4643 = vmatprep.subr.mxu0 0.0
    %4644 = vmatpush1.msra.mxu0 0.0
    %4645 = vmatprep.subr.mxu0 0.0
    %4646 = vmatpush1.msra.mxu0 0.0
    %4647 = vmatprep.subr.mxu0 0.0
    %4648 = vmatpush1.msra.mxu0 0.0
    %4649 = vmatprep.subr.mxu0 0.0
    %4650 = vmatpush1.msra.mxu0 0.0
    %4651 = vmatprep.subr.mxu0 0.0
    %4652 = vmatpush1.msra.mxu0 0.0
    %4653 = vmatprep.subr.mxu0 0.0
    %4654 = vmatpush1.msra.mxu0 %v4625
    %4655 = vmatprep.subr.mxu0 0.0
    %4656 = vmatpush1.msra.mxu0 %v4624
    %4657 = vmatprep.subr.mxu0 0.0
    %4658 = vmatpush1.msra.mxu0 %v4623
    %4659 = vmatprep.subr.mxu0 0.0
    %4660 = vmatpush1.msra.mxu0 %v4622
    %4661 = vmatprep.subr.mxu0 0.0
    %4662 = vmatpush2.msra.mxu0 0.0
    %4663 = vmatprep.subr.mxu0 0.0
    %4664 = vmatpush2.msra.mxu0 0.0
    %4665 = vmatprep.subr.mxu0 0.0
    %4666 = vmatpush2.msra.mxu0 0.0
    %4667 = vmatprep.subr.mxu0 0.0
    %4668 = vmatpush2.msra.mxu0 0.0
    %4669 = vmatprep.subr.mxu0 0.0
    %4670 = vmatpush2.msra.mxu0 0.0
    %4671 = vmatprep.subr.mxu0 0.0
    %4672 = vmatpush2.msra.mxu0 0.0
    %4673 = vmatprep.subr.mxu0 0.0
    %4674 = vmatpush2.msra.mxu0 0.0
    %4675 = vmatprep.subr.mxu0 0.0
    %4676 = vmatpush2.msra.mxu0 0.0
    %4677 = vmatprep.subr.mxu0 0.0
    %4678 = vmatpush2.msra.mxu0 0.0
    %4679 = vmatprep.subr.mxu0 0.0
    %4680 = vmatpush2.msra.mxu0 0.0
    %4681 = vmatprep.subr.mxu0 0.0
    %4682 = vmatpush2.msra.mxu0 0.0
    %4683 = vmatprep.subr.mxu0 0.0
    %4684 = vmatpush2.msra.mxu0 0.0
    %4685 = vmatprep.subr.mxu0 0.0
    %4686 = vmatpush2.msra.mxu0 0.0
    %4687 = vmatprep.subr.mxu0 0.0
    %4688 = vmatpush2.msra.mxu0 0.0
    %4689 = vmatprep.subr.mxu0 0.0
    %4690 = vmatpush2.msra.mxu0 0.0
    %4691 = vmatprep.subr.mxu0 0.0
    %4692 = vmatpush2.msra.mxu0 0.0
    %4693 = vmatprep.mubr.f32.mxu0 0.0
    %4694 = vmatmul.mubr.f32.gmra.mxu0 %v4627
    %v4695 = vpop.f32.mrf.mxu0
    %v4696 = vadd.f32 0.0, %v4695
    %v4697 = vpop.f32.mrf.mxu0
    %4698 = vdwg.mxu0
    %v4699 = vadd.f32 %v4620, %v4696
    %s4700 = scalar_lea.vmem %s7, 384
    %v4701 = vld [vmem:[%s4700] sm:$0xff]
    %v4702 = vld [vmem:[%s4700 + $0x8] sm:$0xff]
    %v4703 = vld [vmem:[%s4700 + $0x10] sm:$0xff]
    %v4704 = vld [vmem:[%s4700 + $0x18] sm:$0xff]
    %v4705 = vrot.slane %v3751, 4
    %v4706 = vsel %vm3765, %v4705, 0
    %4708 = vmatprep.subr.mxu0 0.0
    %4709 = vmatpush1.msra.mxu0 0.0
    %4710 = vmatprep.subr.mxu0 0.0
    %4711 = vmatpush1.msra.mxu0 0.0
    %4712 = vmatprep.subr.mxu0 0.0
    %4713 = vmatpush1.msra.mxu0 0.0
    %4714 = vmatprep.subr.mxu0 0.0
    %4715 = vmatpush1.msra.mxu0 0.0
    %4716 = vmatprep.subr.mxu0 0.0
    %4717 = vmatpush1.msra.mxu0 0.0
    %4718 = vmatprep.subr.mxu0 0.0
    %4719 = vmatpush1.msra.mxu0 0.0
    %4720 = vmatprep.subr.mxu0 0.0
    %4721 = vmatpush1.msra.mxu0 0.0
    %4722 = vmatprep.subr.mxu0 0.0
    %4723 = vmatpush1.msra.mxu0 0.0
    %4724 = vmatprep.subr.mxu0 0.0
    %4725 = vmatpush1.msra.mxu0 0.0
    %4726 = vmatprep.subr.mxu0 0.0
    %4727 = vmatpush1.msra.mxu0 0.0
    %4728 = vmatprep.subr.mxu0 0.0
    %4729 = vmatpush1.msra.mxu0 0.0
    %4730 = vmatprep.subr.mxu0 0.0
    %4731 = vmatpush1.msra.mxu0 0.0
    %4732 = vmatprep.subr.mxu0 0.0
    %4733 = vmatpush1.msra.mxu0 %v4704
    %4734 = vmatprep.subr.mxu0 0.0
    %4735 = vmatpush1.msra.mxu0 %v4703
    %4736 = vmatprep.subr.mxu0 0.0
    %4737 = vmatpush1.msra.mxu0 %v4702
    %4738 = vmatprep.subr.mxu0 0.0
    %4739 = vmatpush1.msra.mxu0 %v4701
    %4740 = vmatprep.subr.mxu0 0.0
    %4741 = vmatpush2.msra.mxu0 0.0
    %4742 = vmatprep.subr.mxu0 0.0
    %4743 = vmatpush2.msra.mxu0 0.0
    %4744 = vmatprep.subr.mxu0 0.0
    %4745 = vmatpush2.msra.mxu0 0.0
    %4746 = vmatprep.subr.mxu0 0.0
    %4747 = vmatpush2.msra.mxu0 0.0
    %4748 = vmatprep.subr.mxu0 0.0
    %4749 = vmatpush2.msra.mxu0 0.0
    %4750 = vmatprep.subr.mxu0 0.0
    %4751 = vmatpush2.msra.mxu0 0.0
    %4752 = vmatprep.subr.mxu0 0.0
    %4753 = vmatpush2.msra.mxu0 0.0
    %4754 = vmatprep.subr.mxu0 0.0
    %4755 = vmatpush2.msra.mxu0 0.0
    %4756 = vmatprep.subr.mxu0 0.0
    %4757 = vmatpush2.msra.mxu0 0.0
    %4758 = vmatprep.subr.mxu0 0.0
    %4759 = vmatpush2.msra.mxu0 0.0
    %4760 = vmatprep.subr.mxu0 0.0
    %4761 = vmatpush2.msra.mxu0 0.0
    %4762 = vmatprep.subr.mxu0 0.0
    %4763 = vmatpush2.msra.mxu0 0.0
    %4764 = vmatprep.subr.mxu0 0.0
    %4765 = vmatpush2.msra.mxu0 0.0
    %4766 = vmatprep.subr.mxu0 0.0
    %4767 = vmatpush2.msra.mxu0 0.0
    %4768 = vmatprep.subr.mxu0 0.0
    %4769 = vmatpush2.msra.mxu0 0.0
    %4770 = vmatprep.subr.mxu0 0.0
    %4771 = vmatpush2.msra.mxu0 0.0
    %4772 = vmatprep.mubr.f32.mxu0 0.0
    %4773 = vmatmul.mubr.f32.gmra.mxu0 %v4706
    %v4774 = vpop.f32.mrf.mxu0
    %v4775 = vadd.f32 0.0, %v4774
    %v4776 = vpop.f32.mrf.mxu0
    %4777 = vdwg.mxu0
    %v4778 = vadd.f32 %v4699, %v4775
    %s4779 = scalar_lea.vmem %s7, 416
    %v4780 = vld [vmem:[%s4779] sm:$0xff]
    %v4781 = vld [vmem:[%s4779 + $0x8] sm:$0xff]
    %v4782 = vld [vmem:[%s4779 + $0x10] sm:$0xff]
    %v4783 = vld [vmem:[%s4779 + $0x18] sm:$0xff]
    %v4784 = vrot.slane %v3751, 5
    %v4785 = vsel %vm3765, %v4784, 0
    %4787 = vmatprep.subr.mxu0 0.0
    %4788 = vmatpush1.msra.mxu0 0.0
    %4789 = vmatprep.subr.mxu0 0.0
    %4790 = vmatpush1.msra.mxu0 0.0
    %4791 = vmatprep.subr.mxu0 0.0
    %4792 = vmatpush1.msra.mxu0 0.0
    %4793 = vmatprep.subr.mxu0 0.0
    %4794 = vmatpush1.msra.mxu0 0.0
    %4795 = vmatprep.subr.mxu0 0.0
    %4796 = vmatpush1.msra.mxu0 0.0
    %4797 = vmatprep.subr.mxu0 0.0
    %4798 = vmatpush1.msra.mxu0 0.0
    %4799 = vmatprep.subr.mxu0 0.0
    %4800 = vmatpush1.msra.mxu0 0.0
    %4801 = vmatprep.subr.mxu0 0.0
    %4802 = vmatpush1.msra.mxu0 0.0
    %4803 = vmatprep.subr.mxu0 0.0
    %4804 = vmatpush1.msra.mxu0 0.0
    %4805 = vmatprep.subr.mxu0 0.0
    %4806 = vmatpush1.msra.mxu0 0.0
    %4807 = vmatprep.subr.mxu0 0.0
    %4808 = vmatpush1.msra.mxu0 0.0
    %4809 = vmatprep.subr.mxu0 0.0
    %4810 = vmatpush1.msra.mxu0 0.0
    %4811 = vmatprep.subr.mxu0 0.0
    %4812 = vmatpush1.msra.mxu0 %v4783
    %4813 = vmatprep.subr.mxu0 0.0
    %4814 = vmatpush1.msra.mxu0 %v4782
    %4815 = vmatprep.subr.mxu0 0.0
    %4816 = vmatpush1.msra.mxu0 %v4781
    %4817 = vmatprep.subr.mxu0 0.0
    %4818 = vmatpush1.msra.mxu0 %v4780
    %4819 = vmatprep.subr.mxu0 0.0
    %4820 = vmatpush2.msra.mxu0 0.0
    %4821 = vmatprep.subr.mxu0 0.0
    %4822 = vmatpush2.msra.mxu0 0.0
    %4823 = vmatprep.subr.mxu0 0.0
    %4824 = vmatpush2.msra.mxu0 0.0
    %4825 = vmatprep.subr.mxu0 0.0
    %4826 = vmatpush2.msra.mxu0 0.0
    %4827 = vmatprep.subr.mxu0 0.0
    %4828 = vmatpush2.msra.mxu0 0.0
    %4829 = vmatprep.subr.mxu0 0.0
    %4830 = vmatpush2.msra.mxu0 0.0
    %4831 = vmatprep.subr.mxu0 0.0
    %4832 = vmatpush2.msra.mxu0 0.0
    %4833 = vmatprep.subr.mxu0 0.0
    %4834 = vmatpush2.msra.mxu0 0.0
    %4835 = vmatprep.subr.mxu0 0.0
    %4836 = vmatpush2.msra.mxu0 0.0
    %4837 = vmatprep.subr.mxu0 0.0
    %4838 = vmatpush2.msra.mxu0 0.0
    %4839 = vmatprep.subr.mxu0 0.0
    %4840 = vmatpush2.msra.mxu0 0.0
    %4841 = vmatprep.subr.mxu0 0.0
    %4842 = vmatpush2.msra.mxu0 0.0
    %4843 = vmatprep.subr.mxu0 0.0
    %4844 = vmatpush2.msra.mxu0 0.0
    %4845 = vmatprep.subr.mxu0 0.0
    %4846 = vmatpush2.msra.mxu0 0.0
    %4847 = vmatprep.subr.mxu0 0.0
    %4848 = vmatpush2.msra.mxu0 0.0
    %4849 = vmatprep.subr.mxu0 0.0
    %4850 = vmatpush2.msra.mxu0 0.0
    %4851 = vmatprep.mubr.f32.mxu0 0.0
    %4852 = vmatmul.mubr.f32.gmra.mxu0 %v4785
    %v4853 = vpop.f32.mrf.mxu0
    %v4854 = vadd.f32 0.0, %v4853
    %v4855 = vpop.f32.mrf.mxu0
    %4856 = vdwg.mxu0
    %v4857 = vadd.f32 %v4778, %v4854
    %s4858 = scalar_lea.vmem %s7, 448
    %v4859 = vld [vmem:[%s4858] sm:$0xff]
    %v4860 = vld [vmem:[%s4858 + $0x8] sm:$0xff]
    %v4861 = vld [vmem:[%s4858 + $0x10] sm:$0xff]
    %v4862 = vld [vmem:[%s4858 + $0x18] sm:$0xff]
    %v4863 = vrot.slane %v3751, 6
    %v4864 = vsel %vm3765, %v4863, 0
    %4866 = vmatprep.subr.mxu0 0.0
    %4867 = vmatpush1.msra.mxu0 0.0
    %4868 = vmatprep.subr.mxu0 0.0
    %4869 = vmatpush1.msra.mxu0 0.0
    %4870 = vmatprep.subr.mxu0 0.0
    %4871 = vmatpush1.msra.mxu0 0.0
    %4872 = vmatprep.subr.mxu0 0.0
    %4873 = vmatpush1.msra.mxu0 0.0
    %4874 = vmatprep.subr.mxu0 0.0
    %4875 = vmatpush1.msra.mxu0 0.0
    %4876 = vmatprep.subr.mxu0 0.0
    %4877 = vmatpush1.msra.mxu0 0.0
    %4878 = vmatprep.subr.mxu0 0.0
    %4879 = vmatpush1.msra.mxu0 0.0
    %4880 = vmatprep.subr.mxu0 0.0
    %4881 = vmatpush1.msra.mxu0 0.0
    %4882 = vmatprep.subr.mxu0 0.0
    %4883 = vmatpush1.msra.mxu0 0.0
    %4884 = vmatprep.subr.mxu0 0.0
    %4885 = vmatpush1.msra.mxu0 0.0
    %4886 = vmatprep.subr.mxu0 0.0
    %4887 = vmatpush1.msra.mxu0 0.0
    %4888 = vmatprep.subr.mxu0 0.0
    %4889 = vmatpush1.msra.mxu0 0.0
    %4890 = vmatprep.subr.mxu0 0.0
    %4891 = vmatpush1.msra.mxu0 %v4862
    %4892 = vmatprep.subr.mxu0 0.0
    %4893 = vmatpush1.msra.mxu0 %v4861
    %4894 = vmatprep.subr.mxu0 0.0
    %4895 = vmatpush1.msra.mxu0 %v4860
    %4896 = vmatprep.subr.mxu0 0.0
    %4897 = vmatpush1.msra.mxu0 %v4859
    %4898 = vmatprep.subr.mxu0 0.0
    %4899 = vmatpush2.msra.mxu0 0.0
    %4900 = vmatprep.subr.mxu0 0.0
    %4901 = vmatpush2.msra.mxu0 0.0
    %4902 = vmatprep.subr.mxu0 0.0
    %4903 = vmatpush2.msra.mxu0 0.0
    %4904 = vmatprep.subr.mxu0 0.0
    %4905 = vmatpush2.msra.mxu0 0.0
    %4906 = vmatprep.subr.mxu0 0.0
    %4907 = vmatpush2.msra.mxu0 0.0
    %4908 = vmatprep.subr.mxu0 0.0
    %4909 = vmatpush2.msra.mxu0 0.0
    %4910 = vmatprep.subr.mxu0 0.0
    %4911 = vmatpush2.msra.mxu0 0.0
    %4912 = vmatprep.subr.mxu0 0.0
    %4913 = vmatpush2.msra.mxu0 0.0
    %4914 = vmatprep.subr.mxu0 0.0
    %4915 = vmatpush2.msra.mxu0 0.0
    %4916 = vmatprep.subr.mxu0 0.0
    %4917 = vmatpush2.msra.mxu0 0.0
    %4918 = vmatprep.subr.mxu0 0.0
    %4919 = vmatpush2.msra.mxu0 0.0
    %4920 = vmatprep.subr.mxu0 0.0
    %4921 = vmatpush2.msra.mxu0 0.0
    %4922 = vmatprep.subr.mxu0 0.0
    %4923 = vmatpush2.msra.mxu0 0.0
    %4924 = vmatprep.subr.mxu0 0.0
    %4925 = vmatpush2.msra.mxu0 0.0
    %4926 = vmatprep.subr.mxu0 0.0
    %4927 = vmatpush2.msra.mxu0 0.0
    %4928 = vmatprep.subr.mxu0 0.0
    %4929 = vmatpush2.msra.mxu0 0.0
    %4930 = vmatprep.mubr.f32.mxu0 0.0
    %4931 = vmatmul.mubr.f32.gmra.mxu0 %v4864
    %v4932 = vpop.f32.mrf.mxu0
    %v4933 = vadd.f32 0.0, %v4932
    %v4934 = vpop.f32.mrf.mxu0
    %4935 = vdwg.mxu0
    %v4936 = vadd.f32 %v4857, %v4933
    %s4937 = scalar_lea.vmem %s7, 480
    %v4938 = vld [vmem:[%s4937] sm:$0xff]
    %v4939 = vld [vmem:[%s4937 + $0x8] sm:$0xff]
    %v4940 = vld [vmem:[%s4937 + $0x10] sm:$0xff]
    %v4941 = vld [vmem:[%s4937 + $0x18] sm:$0xff]
    %v4942 = vrot.slane %v3751, 7
    %v4943 = vsel %vm3765, %v4942, 0
    %4945 = vmatprep.subr.mxu0 0.0
    %4946 = vmatpush1.msra.mxu0 0.0
    %4947 = vmatprep.subr.mxu0 0.0
    %4948 = vmatpush1.msra.mxu0 0.0
    %4949 = vmatprep.subr.mxu0 0.0
    %4950 = vmatpush1.msra.mxu0 0.0
    %4951 = vmatprep.subr.mxu0 0.0
    %4952 = vmatpush1.msra.mxu0 0.0
    %4953 = vmatprep.subr.mxu0 0.0
    %4954 = vmatpush1.msra.mxu0 0.0
    %4955 = vmatprep.subr.mxu0 0.0
    %4956 = vmatpush1.msra.mxu0 0.0
    %4957 = vmatprep.subr.mxu0 0.0
    %4958 = vmatpush1.msra.mxu0 0.0
    %4959 = vmatprep.subr.mxu0 0.0
    %4960 = vmatpush1.msra.mxu0 0.0
    %4961 = vmatprep.subr.mxu0 0.0
    %4962 = vmatpush1.msra.mxu0 0.0
    %4963 = vmatprep.subr.mxu0 0.0
    %4964 = vmatpush1.msra.mxu0 0.0
    %4965 = vmatprep.subr.mxu0 0.0
    %4966 = vmatpush1.msra.mxu0 0.0
    %4967 = vmatprep.subr.mxu0 0.0
    %4968 = vmatpush1.msra.mxu0 0.0
    %4969 = vmatprep.subr.mxu0 0.0
    %4970 = vmatpush1.msra.mxu0 %v4941
    %4971 = vmatprep.subr.mxu0 0.0
    %4972 = vmatpush1.msra.mxu0 %v4940
    %4973 = vmatprep.subr.mxu0 0.0
    %4974 = vmatpush1.msra.mxu0 %v4939
    %4975 = vmatprep.subr.mxu0 0.0
    %4976 = vmatpush1.msra.mxu0 %v4938
    %4977 = vmatprep.subr.mxu0 0.0
    %4978 = vmatpush2.msra.mxu0 0.0
    %4979 = vmatprep.subr.mxu0 0.0
    %4980 = vmatpush2.msra.mxu0 0.0
    %4981 = vmatprep.subr.mxu0 0.0
    %4982 = vmatpush2.msra.mxu0 0.0
    %4983 = vmatprep.subr.mxu0 0.0
    %4984 = vmatpush2.msra.mxu0 0.0
    %4985 = vmatprep.subr.mxu0 0.0
    %4986 = vmatpush2.msra.mxu0 0.0
    %4987 = vmatprep.subr.mxu0 0.0
    %4988 = vmatpush2.msra.mxu0 0.0
    %4989 = vmatprep.subr.mxu0 0.0
    %4990 = vmatpush2.msra.mxu0 0.0
    %4991 = vmatprep.subr.mxu0 0.0
    %4992 = vmatpush2.msra.mxu0 0.0
    %4993 = vmatprep.subr.mxu0 0.0
    %4994 = vmatpush2.msra.mxu0 0.0
    %4995 = vmatprep.subr.mxu0 0.0
    %4996 = vmatpush2.msra.mxu0 0.0
    %4997 = vmatprep.subr.mxu0 0.0
    %4998 = vmatpush2.msra.mxu0 0.0
    %4999 = vmatprep.subr.mxu0 0.0
    %5000 = vmatpush2.msra.mxu0 0.0
    %5001 = vmatprep.subr.mxu0 0.0
    %5002 = vmatpush2.msra.mxu0 0.0
    %5003 = vmatprep.subr.mxu0 0.0
    %5004 = vmatpush2.msra.mxu0 0.0
    %5005 = vmatprep.subr.mxu0 0.0
    %5006 = vmatpush2.msra.mxu0 0.0
    %5007 = vmatprep.subr.mxu0 0.0
    %5008 = vmatpush2.msra.mxu0 0.0
    %5009 = vmatprep.mubr.f32.mxu0 0.0
    %5010 = vmatmul.mubr.f32.gmra.mxu0 %v4943
    %v5011 = vpop.f32.mrf.mxu0
    %v5012 = vadd.f32 0.0, %v5011
    %v5013 = vpop.f32.mrf.mxu0
    %5014 = vdwg.mxu0
    %v5015 = vadd.f32 %v4936, %v5012
    %v5016 = vld [vmem:[%s8] sm:$0x1]
    %v5017 = vadd.f32 %v5015, %v5016
    %v5018 = vmax.f32 %v5017, 0.0
    %v5019 = vld [vmem:[%s9] sm:$0xff]
    %v5020 = vld [vmem:[%s9 + $0x8] sm:$0xff]
    %v5021 = vld [vmem:[%s9 + $0x10] sm:$0xff]
    %v5022 = vld [vmem:[%s9 + $0x18] sm:$0xff]
    %v5023 = vld [vmem:[%s10] sm:$0x1]
    %v5025 = vsel %vm3765, %v5018, 0
    %5027 = vmatprep.subr.mxu0 0.0
    %5028 = vmatpush1.msra.mxu0 0.0
    %5029 = vmatprep.subr.mxu0 0.0
    %5030 = vmatpush1.msra.mxu0 0.0
    %5031 = vmatprep.subr.mxu0 0.0
    %5032 = vmatpush1.msra.mxu0 0.0
    %5033 = vmatprep.subr.mxu0 0.0
    %5034 = vmatpush1.msra.mxu0 0.0
    %5035 = vmatprep.subr.mxu0 0.0
    %5036 = vmatpush1.msra.mxu0 0.0
    %5037 = vmatprep.subr.mxu0 0.0
    %5038 = vmatpush1.msra.mxu0 0.0
    %5039 = vmatprep.subr.mxu0 0.0
    %5040 = vmatpush1.msra.mxu0 0.0
    %5041 = vmatprep.subr.mxu0 0.0
    %5042 = vmatpush1.msra.mxu0 0.0
    %5043 = vmatprep.subr.mxu0 0.0
    %5044 = vmatpush1.msra.mxu0 0.0
    %5045 = vmatprep.subr.mxu0 0.0
    %5046 = vmatpush1.msra.mxu0 0.0
    %5047 = vmatprep.subr.mxu0 0.0
    %5048 = vmatpush1.msra.mxu0 0.0
    %5049 = vmatprep.subr.mxu0 0.0
    %5050 = vmatpush1.msra.mxu0 0.0
    %5051 = vmatprep.subr.mxu0 0.0
    %5052 = vmatpush1.msra.mxu0 %v5022
    %5053 = vmatprep.subr.mxu0 0.0
    %5054 = vmatpush1.msra.mxu0 %v5021
    %5055 = vmatprep.subr.mxu0 0.0
    %5056 = vmatpush1.msra.mxu0 %v5020
    %5057 = vmatprep.subr.mxu0 0.0
    %5058 = vmatpush1.msra.mxu0 %v5019
    %5059 = vmatprep.subr.mxu0 0.0
    %5060 = vmatpush2.msra.mxu0 0.0
    %5061 = vmatprep.subr.mxu0 0.0
    %5062 = vmatpush2.msra.mxu0 0.0
    %5063 = vmatprep.subr.mxu0 0.0
    %5064 = vmatpush2.msra.mxu0 0.0
    %5065 = vmatprep.subr.mxu0 0.0
    %5066 = vmatpush2.msra.mxu0 0.0
    %5067 = vmatprep.subr.mxu0 0.0
    %5068 = vmatpush2.msra.mxu0 0.0
    %5069 = vmatprep.subr.mxu0 0.0
    %5070 = vmatpush2.msra.mxu0 0.0
    %5071 = vmatprep.subr.mxu0 0.0
    %5072 = vmatpush2.msra.mxu0 0.0
    %5073 = vmatprep.subr.mxu0 0.0
    %5074 = vmatpush2.msra.mxu0 0.0
    %5075 = vmatprep.subr.mxu0 0.0
    %5076 = vmatpush2.msra.mxu0 0.0
    %5077 = vmatprep.subr.mxu0 0.0
    %5078 = vmatpush2.msra.mxu0 0.0
    %5079 = vmatprep.subr.mxu0 0.0
    %5080 = vmatpush2.msra.mxu0 0.0
    %5081 = vmatprep.subr.mxu0 0.0
    %5082 = vmatpush2.msra.mxu0 0.0
    %5083 = vmatprep.subr.mxu0 0.0
    %5084 = vmatpush2.msra.mxu0 0.0
    %5085 = vmatprep.subr.mxu0 0.0
    %5086 = vmatpush2.msra.mxu0 0.0
    %5087 = vmatprep.subr.mxu0 0.0
    %5088 = vmatpush2.msra.mxu0 0.0
    %5089 = vmatprep.subr.mxu0 0.0
    %5090 = vmatpush2.msra.mxu0 0.0
    %5091 = vmatprep.mubr.f32.mxu0 0.0
    %5092 = vmatmul.mubr.f32.gmra.mxu0 %v5025
    %v5093 = vpop.f32.mrf.mxu0
    %v5094 = vadd.f32 %v5023, %v5093
    %v5095 = vpop.f32.mrf.mxu0
    %5096 = vdwg.mxu0
    %5097 = vrot.lane.b32.xlu0 %v5018, 96
    %v5098 = vpop.permute.xlu0 %5097
    %v5099 = vsel %vm3765, %v5098, 0
    %5101 = vmatprep.subr.mxu0 0.0
    %5102 = vmatpush1.msra.mxu0 0.0
    %5103 = vmatprep.subr.mxu0 0.0
    %5104 = vmatpush1.msra.mxu0 0.0
    %5105 = vmatprep.subr.mxu0 0.0
    %5106 = vmatpush1.msra.mxu0 0.0
    %5107 = vmatprep.subr.mxu0 0.0
    %5108 = vmatpush1.msra.mxu0 0.0
    %5109 = vmatprep.subr.mxu0 0.0
    %5110 = vmatpush1.msra.mxu0 0.0
    %5111 = vmatprep.subr.mxu0 0.0
    %5112 = vmatpush1.msra.mxu0 0.0
    %5113 = vmatprep.subr.mxu0 0.0
    %5114 = vmatpush1.msra.mxu0 0.0
    %5115 = vmatprep.subr.mxu0 0.0
    %5116 = vmatpush1.msra.mxu0 0.0
    %5117 = vmatprep.subr.mxu0 0.0
    %5118 = vmatpush1.msra.mxu0 0.0
    %5119 = vmatprep.subr.mxu0 0.0
    %5120 = vmatpush1.msra.mxu0 0.0
    %5121 = vmatprep.subr.mxu0 0.0
    %5122 = vmatpush1.msra.mxu0 0.0
    %5123 = vmatprep.subr.mxu0 0.0
    %5124 = vmatpush1.msra.mxu0 0.0
    %5125 = vmatprep.subr.mxu0 0.0
    %5126 = vmatpush1.msra.mxu0 %v5022
    %5127 = vmatprep.subr.mxu0 0.0
    %5128 = vmatpush1.msra.mxu0 %v5021
    %5129 = vmatprep.subr.mxu0 0.0
    %5130 = vmatpush1.msra.mxu0 %v5020
    %5131 = vmatprep.subr.mxu0 0.0
    %5132 = vmatpush1.msra.mxu0 %v5019
    %5133 = vmatprep.subr.mxu0 0.0
    %5134 = vmatpush2.msra.mxu0 0.0
    %5135 = vmatprep.subr.mxu0 0.0
    %5136 = vmatpush2.msra.mxu0 0.0
    %5137 = vmatprep.subr.mxu0 0.0
    %5138 = vmatpush2.msra.mxu0 0.0
    %5139 = vmatprep.subr.mxu0 0.0
    %5140 = vmatpush2.msra.mxu0 0.0
    %5141 = vmatprep.subr.mxu0 0.0
    %5142 = vmatpush2.msra.mxu0 0.0
    %5143 = vmatprep.subr.mxu0 0.0
    %5144 = vmatpush2.msra.mxu0 0.0
    %5145 = vmatprep.subr.mxu0 0.0
    %5146 = vmatpush2.msra.mxu0 0.0
    %5147 = vmatprep.subr.mxu0 0.0
    %5148 = vmatpush2.msra.mxu0 0.0
    %5149 = vmatprep.subr.mxu0 0.0
    %5150 = vmatpush2.msra.mxu0 0.0
    %5151 = vmatprep.subr.mxu0 0.0
    %5152 = vmatpush2.msra.mxu0 0.0
    %5153 = vmatprep.subr.mxu0 0.0
    %5154 = vmatpush2.msra.mxu0 0.0
    %5155 = vmatprep.subr.mxu0 0.0
    %5156 = vmatpush2.msra.mxu0 0.0
    %5157 = vmatprep.subr.mxu0 0.0
    %5158 = vmatpush2.msra.mxu0 0.0
    %5159 = vmatprep.subr.mxu0 0.0
    %5160 = vmatpush2.msra.mxu0 0.0
    %5161 = vmatprep.subr.mxu0 0.0
    %5162 = vmatpush2.msra.mxu0 0.0
    %5163 = vmatprep.subr.mxu0 0.0
    %5164 = vmatpush2.msra.mxu0 0.0
    %5165 = vmatprep.mubr.f32.mxu0 0.0
    %5166 = vmatmul.mubr.f32.gmra.mxu0 %v5099
    %v5167 = vpop.f32.mrf.mxu0
    %v5168 = vadd.f32 %v5023, %v5167
    %v5169 = vpop.f32.mrf.mxu0
    %5170 = vdwg.mxu0
    %v5172 = vrot.slane %v5168, 7
    %vm5174 = vcmask 1040384
    %v5175 = vsel %vm5174, %v5094, %v5172
    %vm5176 = vcmask 74752
    %5177 = vst.msk [vmem:[#allocation2] sm:$0x3] %vm5176, %v5175
    // Predicated region
    $region46: #{cnn_forward.1} parent=1 // pred_check
      _
    $region47: #{cnn_forward.1} parent=1 // pred_check_branch
      %5179 = sbr.rel (0) target = $region49
    $region48: #{cnn_forward.1} parent=1 // pred_region
      %s5181 = ssub.s32 32, 32
      %5182 = vsyncadd [#allocation3], %s5181
      %s5184 = sshll.u32 [#allocation2], 4
      %s5185 = int_to_ptr.vmem [resolvable:$true] %s5184
      %5187 = dma.vmem_to_hbm [thread:$0]  %s5185, 32, %s11, [#allocation3]
    $region49: #{cnn_forward.1} parent=1 // pred_fallthru
      _
    // Predicated region
    $region50: #{cnn_forward.1} parent=1 // pred_check
      _
    $region51: #{cnn_forward.1} parent=1 // pred_check_branch
      %5189 = sbr.rel (0) target = $region53
    $region52: #{cnn_forward.1} parent=1 // pred_region
      %5190 = dma.done [#allocation3], 32
    $region53: #{cnn_forward.1} parent=1 // pred_fallthru
      _
    %5191 = vsyncpa [#allocation3], 1

</llo_original>
